<compile_context>
chip_gen: v6e
topology: v6e:2x2x1
jax: 0.10.0
libtpu: 0.0.40
codegen_flags: <defaults>
</compile_context>

<pallas_src>
import functools
import math

import jax
import jax.numpy as jnp
from jax.experimental import pallas as pl
from jax.experimental.pallas import tpu as pltpu

LEAKY_SLOPE = 0.01
LN_EPS = 1e-5
MASK_FILL = -1.0e9


def _layernorm(x, gamma, beta):
    mean = jnp.mean(x, axis=-1, keepdims=True)
    var = jnp.mean((x - mean) ** 2, axis=-1, keepdims=True)
    return (x - mean) * jax.lax.rsqrt(var + LN_EPS) * gamma + beta


def feedforward_kernel(head, inv_scale, compute_dtype, approx_recip,
                       s_ref, keep_ref,
                       wqkv_ref, bqkv_ref, wo_ref, bo_ref,
                       g1_ref, be1_ref,
                       wf1_ref, bf1_ref, wf2_ref, bf2_ref,
                       g2_ref, be2_ref,
                       o_ref):
    Bt, S, D = s_ref.shape
    M = Bt * S
    dk = D // head

    # --- fused q/k/v projection: one (M, D) x (D, 3D) MXU matmul ---
    xc = s_ref[...].reshape(M, D).astype(compute_dtype)
    qkv = (jnp.dot(xc, wqkv_ref[...], preferred_element_type=jnp.float32)
           + bqkv_ref[...]).astype(compute_dtype)            # (M, 3D)

    # Flattened block-diagonal keep mask (same for every head), hoisted out of the loop.
    keep = keep_ref[0] != 0                                   # (M, M) bool

    # --- flattened attention, static unroll over heads; output proj folded per head ---
    attn = jnp.broadcast_to(bo_ref[...], (M, D)).astype(jnp.float32)
    for h in range(head):
        qh = qkv[:, h * dk:(h + 1) * dk]                      # (M, dk)
        kh = qkv[:, D + h * dk:D + (h + 1) * dk]
        vh = qkv[:, 2 * D + h * dk:2 * D + (h + 1) * dk]

        scores = jax.lax.dot_general(                          # (M, M) — lane-dense
            qh, kh, (((1,), (1,)), ((), ())),
            preferred_element_type=jnp.float32)
        scores = jnp.where(keep, scores * inv_scale, MASK_FILL)

        smax = jnp.max(scores, axis=-1, keepdims=True)
        p = jnp.exp(scores - smax)
        denom = jnp.sum(p, axis=-1, keepdims=True)
        if approx_recip:
            p = p * pl.reciprocal(denom, approx=True)          # EUP slot, ~free
        else:
            p = p / denom                                      # exact on the f32 path

        ctx = jnp.dot(p.astype(compute_dtype), vh,
                      preferred_element_type=jnp.float32)      # (M, dk)
        attn = attn + jnp.dot(ctx.astype(compute_dtype),
                              wo_ref[pl.ds(h * dk, dk), :],    # (dk, D) sublane slice
                              preferred_element_type=jnp.float32)

    # --- residual + LayerNorm 1 (re-read s from VMEM; keeps regalloc pressure low) ---
    xf = s_ref[...].reshape(M, D)
    y = _layernorm(xf + attn, g1_ref[...], be1_ref[...])

    # --- fc1 -> LeakyReLU -> fc2 ---
    h1 = jnp.dot(y.astype(compute_dtype), wf1_ref[...],
                 preferred_element_type=jnp.float32) + bf1_ref[...]
    h1 = jnp.where(h1 >= 0, h1, LEAKY_SLOPE * h1)
    h2 = jnp.dot(h1.astype(compute_dtype), wf2_ref[...],
                 preferred_element_type=jnp.float32) + bf2_ref[...]

    # --- residual + LayerNorm 2 ---
    out = _layernorm(y + h2, g2_ref[...], be2_ref[...])
    o_ref[...] = out.reshape(Bt, S, D).astype(o_ref.dtype)


def feedforward_pallas(s, mask, params, head, *,
                       compute_dtype=jnp.bfloat16, block_b=None):
    """s: (B,S,D) f32, mask: (B,S,S) bool/int {0,1}, params: tuple from make_params."""
    B, S, D = s.shape
    assert D % head == 0
    inv_scale = 1.0 / math.sqrt(D // head)

    # Batch block: ~128 flattened rows per step (fills MXU M dim, amortises per-step
    # overhead), and >=2 grid steps whenever B allows so both v7x TensorCores get work.
    if block_b is None:
        block_b = max(1, min(B, max(1, 128 // S)))
        if B >= 2 and B // block_b < 2:
            block_b = max(1, -(-B // 2))
    nb = -(-B // block_b)                      # ceil
    B_pad = nb * block_b
    M = block_b * S

    mask_bool = jnp.asarray(mask).astype(bool)
    if B_pad != B:                             # pad instead of collapsing block_b
        s_in = jnp.pad(s, ((0, B_pad - B), (0, 0), (0, 0)))
        mask_bool = jnp.pad(mask_bool, ((0, B_pad - B), (0, 0), (0, 0)),
                            constant_values=True)
    else:
        s_in = s

    # Flattened block-diagonal keep mask per grid step: (nb, Bt*S, Bt*S) int8.
    mask_blocks = mask_bool.reshape(nb, block_b, S, S)
    same_elem = jnp.eye(block_b, dtype=bool)
    keep5 = same_elem[None, :, None, :, None] & mask_blocks[:, :, :, None, :]
    keep_flat = keep5.reshape(nb, M, M).astype(jnp.int8)

    # Fuse q/k/v weights; cast matmul weights to the MXU compute dtype (halves HBM/VMEM
    # traffic); biases / LayerNorm params stay f32.
    (wq, bq, wk, bk, wv, bv, wo, bo, g1, be1,
     wf1, bf1, wf2, bf2, g2, be2) = params
    wqkv = jnp.concatenate([wq, wk, wv], axis=1).astype(compute_dtype)   # (D, 3D)
    bqkv = jnp.concatenate([bq, bk, bv], axis=1).astype(jnp.float32)     # (1, 3D)
    cast_params = (
        wqkv, bqkv,
        wo.astype(compute_dtype), bo.astype(jnp.float32),
        g1.astype(jnp.float32), be1.astype(jnp.float32),
        wf1.astype(compute_dtype), bf1.astype(jnp.float32),
        wf2.astype(compute_dtype), bf2.astype(jnp.float32),
        g2.astype(jnp.float32), be2.astype(jnp.float32),
    )

    def full_spec(shape):
        nd = len(shape)
        return pl.BlockSpec(shape, lambda b, _nd=nd: (0,) * _nd)

    in_specs = [
        pl.BlockSpec((block_b, S, D), lambda b: (b, 0, 0)),   # s tile
        pl.BlockSpec((1, M, M), lambda b: (b, 0, 0)),         # flattened keep mask
    ] + [full_spec(p.shape) for p in cast_params]

    kernel = functools.partial(
        feedforward_kernel, head, inv_scale, compute_dtype,
        compute_dtype != jnp.float32)          # approx reciprocal only on bf16 path

    out = pl.pallas_call(
        kernel,
        out_shape=jax.ShapeDtypeStruct((B_pad, S, D), jnp.float32),
        grid=(nb,),
        in_specs=in_specs,
        out_specs=pl.BlockSpec((block_b, S, D), lambda b: (b, 0, 0)),
        compiler_params=pltpu.CompilerParams(
            dimension_semantics=("parallel",),
            vmem_limit_bytes=32 * 1024 * 1024),
    )(s_in, keep_flat, *cast_params)
    return out[:B] if B_pad != B else out


def make_params(key, D):
    """Deterministic params mimicking PyTorch default inits (weights stored transposed:
    (in, out) so y = x @ W + b)."""
    keys = jax.random.split(key, 12)
    bound = 1.0 / math.sqrt(D)

    def linear(kw, kb):
        w_t = jax.random.uniform(kw, (D, D), jnp.float32, -bound, bound)  # (in, out)
        b = jax.random.uniform(kb, (1, D), jnp.float32, -bound, bound)
        return w_t, b

    wq, bq = linear(keys[0], keys[1])
    wk, bk = linear(keys[2], keys[3])
    wv, bv = linear(keys[4], keys[5])
    wo, bo = linear(keys[6], keys[7])
    g1, be1 = jnp.ones((1, D), jnp.float32), jnp.zeros((1, D), jnp.float32)
    wf1, bf1 = linear(keys[8], keys[9])
    wf2, bf2 = linear(keys[10], keys[11])
    g2, be2 = jnp.ones((1, D), jnp.float32), jnp.zeros((1, D), jnp.float32)
    return (wq, bq, wk, bk, wv, bv, wo, bo, g1, be1,
            wf1, bf1, wf2, bf2, g2, be2)


def feedforward_reference(s, mask_bool, params, head):
    """Pure-JAX reference matching the PyTorch forward (dropout = identity)."""
    (wq, bq, wk, bk, wv, bv, wo, bo, g1, be1,
     wf1, bf1, wf2, bf2, g2, be2) = params
    B, S, D = s.shape
    dk = D // head
    scale = math.sqrt(dk)

    def lin(x, w, b):
        return x @ w + b

    def split_heads(x):
        return x.reshape(B, S, head, dk).transpose(0, 2, 1, 3)  # (B, H, S, dk)

    q = split_heads(lin(s, wq, bq))
    k = split_heads(lin(s, wk, bk))
    v = split_heads(lin(s, wv, bv))
    scores = jnp.matmul(q, k.transpose(0, 1, 3, 2)) / scale          # (B, H, S, S)
    scores = jnp.where(mask_bool[:, None], scores, MASK_FILL)
    p = jax.nn.softmax(scores, axis=-1)
    ctx = jnp.matmul(p, v).transpose(0, 2, 1, 3).reshape(B, S, D)
    attn = lin(ctx, wo, bo)

    def ln(x, g, b):
        mu = x.mean(-1, keepdims=True)
        var = ((x - mu) ** 2).mean(-1, keepdims=True)
        return (x - mu) / jnp.sqrt(var + LN_EPS) * g + b

    y = ln(s + attn, g1, be1)
    h = lin(y, wf1, bf1)
    h = jnp.where(h >= 0, h, LEAKY_SLOPE * h)
    h2 = lin(h, wf2, bf2)
    return ln(y + h2, g2, be2)


if __name__ == "__main__":
    # Lane-dense feature dim (multiple of 128); shapes stay small.
    B, S, D, HEAD = 32, 8, 128, 4

    key = jax.random.PRNGKey(0)
    k_s, k_p = jax.random.split(key)
    s = jax.random.normal(k_s, (B, S, D), jnp.float32)

    # Causal-style boolean mask (B, S, S); the PyTorch code broadcasts it over heads.
    row = jnp.arange(S)
    mask_bool = jnp.broadcast_to(row[None, :] <= row[:, None], (B, S, S))

    params = make_params(k_p, D)
    ref = feedforward_reference(s, mask_bool, params, HEAD)

    # Exact-math path (f32 matmuls, exact softmax denominator) — tight tolerance.
    out_f32 = jax.block_until_ready(
        feedforward_pallas(s, mask_bool, params, HEAD, compute_dtype=jnp.float32))
    assert out_f32.shape == (B, S, D)
    assert jnp.allclose(out_f32, ref, rtol=1e-3, atol=1e-3), (
        f"f32 max abs err = {jnp.max(jnp.abs(out_f32 - ref))}")

    # bf16 MXU fast path (f32 accumulation) — looser tolerance due to bf16 rounding.
    out_bf16 = jax.block_until_ready(
        feedforward_pallas(s, mask_bool, params, HEAD, compute_dtype=jnp.bfloat16))
    assert out_bf16.shape == (B, S, D)
    assert jnp.allclose(out_bf16, ref, rtol=5e-2, atol=5e-2), (
        f"bf16 max abs err = {jnp.max(jnp.abs(out_bf16 - ref))}")

    print("KERNEL_OK")
</pallas_src>

<mosaic_0001>
module attributes {stable_mosaic.version = 11 : i64} {
  func.func @feedforward_kernel(%arg0: i32, %arg1: memref<16x8x128xf32, #tpu.memory_space<vmem>>, %arg2: memref<1x128x128xi8, #tpu.memory_space<vmem>>, %arg3: memref<128x384xf32, #tpu.memory_space<vmem>>, %arg4: memref<1x384xf32, #tpu.memory_space<vmem>>, %arg5: memref<128x128xf32, #tpu.memory_space<vmem>>, %arg6: memref<1x128xf32, #tpu.memory_space<vmem>>, %arg7: memref<1x128xf32, #tpu.memory_space<vmem>>, %arg8: memref<1x128xf32, #tpu.memory_space<vmem>>, %arg9: memref<128x128xf32, #tpu.memory_space<vmem>>, %arg10: memref<1x128xf32, #tpu.memory_space<vmem>>, %arg11: memref<128x128xf32, #tpu.memory_space<vmem>>, %arg12: memref<1x128xf32, #tpu.memory_space<vmem>>, %arg13: memref<1x128xf32, #tpu.memory_space<vmem>>, %arg14: memref<1x128xf32, #tpu.memory_space<vmem>>, %arg15: memref<16x8x128xf32, #tpu.memory_space<vmem>>) attributes {dimension_semantics = [#tpu.dimension_semantics<parallel>], iteration_bounds = array<i64: 2>, scalar_prefetch = 0 : i64, scratch_operands = 0 : i64, tpu.core_type = #tpu.core_type<tc>, window_params = [{transform_indices = @transform_0, window_bounds = array<i64: 16, 8, 128>}, {transform_indices = @transform_1, window_bounds = array<i64: 1, 128, 128>}, {pipeline_mode = #tpu.pipeline_mode<synchronous>, transform_indices = @transform_2, window_bounds = array<i64: 128, 384>}, {pipeline_mode = #tpu.pipeline_mode<synchronous>, transform_indices = @transform_3, window_bounds = array<i64: 1, 384>}, {pipeline_mode = #tpu.pipeline_mode<synchronous>, transform_indices = @transform_4, window_bounds = array<i64: 128, 128>}, {pipeline_mode = #tpu.pipeline_mode<synchronous>, transform_indices = @transform_5, window_bounds = array<i64: 1, 128>}, {pipeline_mode = #tpu.pipeline_mode<synchronous>, transform_indices = @transform_6, window_bounds = array<i64: 1, 128>}, {pipeline_mode = #tpu.pipeline_mode<synchronous>, transform_indices = @transform_7, window_bounds = array<i64: 1, 128>}, {pipeline_mode = #tpu.pipeline_mode<synchronous>, transform_indices = @transform_8, window_bounds = array<i64: 128, 128>}, {pipeline_mode = #tpu.pipeline_mode<synchronous>, transform_indices = @transform_9, window_bounds = array<i64: 1, 128>}, {pipeline_mode = #tpu.pipeline_mode<synchronous>, transform_indices = @transform_10, window_bounds = array<i64: 128, 128>}, {pipeline_mode = #tpu.pipeline_mode<synchronous>, transform_indices = @transform_11, window_bounds = array<i64: 1, 128>}, {pipeline_mode = #tpu.pipeline_mode<synchronous>, transform_indices = @transform_12, window_bounds = array<i64: 1, 128>}, {pipeline_mode = #tpu.pipeline_mode<synchronous>, transform_indices = @transform_13, window_bounds = array<i64: 1, 128>}, {transform_indices = @transform_14, window_bounds = array<i64: 16, 8, 128>}]} {
    %c0 = arith.constant 0 : index
    %c0_0 = arith.constant 0 : index
    %c0_1 = arith.constant 0 : index
    %0 = vector.load %arg1[%c0, %c0_0, %c0_1] : memref<16x8x128xf32, #tpu.memory_space<vmem>>, vector<16x8x128xf32>
    %1 = vector.shape_cast %0 : vector<16x8x128xf32> to vector<128x128xf32>
    %c0_2 = arith.constant 0 : index
    %c0_3 = arith.constant 0 : index
    %2 = vector.load %arg3[%c0_2, %c0_3] : memref<128x384xf32, #tpu.memory_space<vmem>>, vector<128x384xf32>
    %cst = arith.constant dense<0.000000e+00> : vector<128x384xf32>
    %3 = tpu.matmul %1, %2, %cst {dimension_numbers = #tpu.dot_dimension_numbers<[1], [0], [0], [1], [0, 0, 1, 1], [], []>} : vector<128x128xf32>, vector<128x384xf32>, vector<128x384xf32> -> vector<128x384xf32>
    %c0_4 = arith.constant 0 : index
    %c0_5 = arith.constant 0 : index
    %4 = vector.load %arg4[%c0_4, %c0_5] : memref<1x384xf32, #tpu.memory_space<vmem>>, vector<1x384xf32>
    %5 = vector.broadcast %4 : vector<1x384xf32> to vector<128x384xf32>
    %6 = arith.addf %3, %5 : vector<128x384xf32>
    %c0_6 = arith.constant 0 : index
    %c0_7 = arith.constant 0 : index
    %c0_8 = arith.constant 0 : index
    %7 = vector.load %arg2[%c0_6, %c0_7, %c0_8] : memref<1x128x128xi8, #tpu.memory_space<vmem>>, vector<1x128x128xi8>
    %8 = vector.shape_cast %7 : vector<1x128x128xi8> to vector<128x128xi8>
    %c0_i8 = arith.constant 0 : i8
    %9 = vector.broadcast %c0_i8 : i8 to vector<128x128xi8>
    %10 = arith.cmpi ne, %8, %9 : vector<128x128xi8>
    %c0_9 = arith.constant 0 : index
    %c0_10 = arith.constant 0 : index
    %11 = vector.load %arg6[%c0_9, %c0_10] : memref<1x128xf32, #tpu.memory_space<vmem>>, vector<1x128xf32>
    %12 = vector.shape_cast %11 : vector<1x128xf32> to vector<1x128xf32>
    %13 = vector.broadcast %12 : vector<1x128xf32> to vector<128x128xf32>
    %14 = vector.extract_strided_slice %6 {offsets = [0, 0], sizes = [128, 32], strides = [1, 1]} : vector<128x384xf32> to vector<128x32xf32>
    %15 = vector.extract_strided_slice %6 {offsets = [0, 128], sizes = [128, 32], strides = [1, 1]} : vector<128x384xf32> to vector<128x32xf32>
    %16 = vector.extract_strided_slice %6 {offsets = [0, 256], sizes = [128, 32], strides = [1, 1]} : vector<128x384xf32> to vector<128x32xf32>
    %cst_11 = arith.constant dense<0.000000e+00> : vector<128x128xf32>
    %17 = tpu.matmul %14, %15, %cst_11 {dimension_numbers = #tpu.dot_dimension_numbers<[1], [1], [0], [0], [0, 0, 1, 0], [], []>} : vector<128x32xf32>, vector<128x32xf32>, vector<128x128xf32> -> vector<128x128xf32>
    %cst_12 = arith.constant 0.176776692 : f32
    %18 = vector.broadcast %cst_12 : f32 to vector<128x128xf32>
    %19 = arith.mulf %17, %18 : vector<128x128xf32>
    %cst_13 = arith.constant -1.000000e+09 : f32
    %20 = vector.broadcast %cst_13 : f32 to vector<128x128xf32>
    %21 = arith.select %10, %19, %20 : vector<128x128xi1>, vector<128x128xf32>
    %cst_14 = arith.constant dense<0xFF800000> : vector<128xf32>
    %22 = vector.multi_reduction <maximumf>, %21, %cst_14 [1] : vector<128x128xf32> to vector<128xf32>
    %23 = vector.shape_cast %22 : vector<128xf32> to vector<128x1xf32>
    %24 = vector.broadcast %23 : vector<128x1xf32> to vector<128x128xf32>
    %25 = arith.subf %21, %24 : vector<128x128xf32>
    %26 = math.exp %25 : vector<128x128xf32>
    %cst_15 = arith.constant dense<0.000000e+00> : vector<128xf32>
    %27 = vector.multi_reduction <add>, %26, %cst_15 [1] : vector<128x128xf32> to vector<128xf32>
    %28 = vector.shape_cast %27 : vector<128xf32> to vector<128x1xf32>
    %29 = vector.broadcast %28 : vector<128x1xf32> to vector<128x128xf32>
    %30 = arith.divf %26, %29 : vector<128x128xf32>
    %cst_16 = arith.constant dense<0.000000e+00> : vector<128x32xf32>
    %31 = tpu.matmul %30, %16, %cst_16 {dimension_numbers = #tpu.dot_dimension_numbers<[1], [0], [0], [1], [0, 0, 1, 1], [], []>} : vector<128x128xf32>, vector<128x32xf32>, vector<128x32xf32> -> vector<128x32xf32>
    %c0_17 = arith.constant 0 : index
    %c0_18 = arith.constant 0 : index
    %32 = vector.load %arg5[%c0_17, %c0_18] : memref<128x128xf32, #tpu.memory_space<vmem>>, vector<32x128xf32>
    %cst_19 = arith.constant dense<0.000000e+00> : vector<128x128xf32>
    %33 = tpu.matmul %31, %32, %cst_19 {dimension_numbers = #tpu.dot_dimension_numbers<[1], [0], [0], [1], [0, 0, 1, 1], [], []>} : vector<128x32xf32>, vector<32x128xf32>, vector<128x128xf32> -> vector<128x128xf32>
    %34 = arith.addf %13, %33 : vector<128x128xf32>
    %35 = vector.extract_strided_slice %6 {offsets = [0, 32], sizes = [128, 32], strides = [1, 1]} : vector<128x384xf32> to vector<128x32xf32>
    %36 = vector.extract_strided_slice %6 {offsets = [0, 160], sizes = [128, 32], strides = [1, 1]} : vector<128x384xf32> to vector<128x32xf32>
    %37 = vector.extract_strided_slice %6 {offsets = [0, 288], sizes = [128, 32], strides = [1, 1]} : vector<128x384xf32> to vector<128x32xf32>
    %cst_20 = arith.constant dense<0.000000e+00> : vector<128x128xf32>
    %38 = tpu.matmul %35, %36, %cst_20 {dimension_numbers = #tpu.dot_dimension_numbers<[1], [1], [0], [0], [0, 0, 1, 0], [], []>} : vector<128x32xf32>, vector<128x32xf32>, vector<128x128xf32> -> vector<128x128xf32>
    %cst_21 = arith.constant 0.176776692 : f32
    %39 = vector.broadcast %cst_21 : f32 to vector<128x128xf32>
    %40 = arith.mulf %38, %39 : vector<128x128xf32>
    %cst_22 = arith.constant -1.000000e+09 : f32
    %41 = vector.broadcast %cst_22 : f32 to vector<128x128xf32>
    %42 = arith.select %10, %40, %41 : vector<128x128xi1>, vector<128x128xf32>
    %cst_23 = arith.constant dense<0xFF800000> : vector<128xf32>
    %43 = vector.multi_reduction <maximumf>, %42, %cst_23 [1] : vector<128x128xf32> to vector<128xf32>
    %44 = vector.shape_cast %43 : vector<128xf32> to vector<128x1xf32>
    %45 = vector.broadcast %44 : vector<128x1xf32> to vector<128x128xf32>
    %46 = arith.subf %42, %45 : vector<128x128xf32>
    %47 = math.exp %46 : vector<128x128xf32>
    %cst_24 = arith.constant dense<0.000000e+00> : vector<128xf32>
    %48 = vector.multi_reduction <add>, %47, %cst_24 [1] : vector<128x128xf32> to vector<128xf32>
    %49 = vector.shape_cast %48 : vector<128xf32> to vector<128x1xf32>
    %50 = vector.broadcast %49 : vector<128x1xf32> to vector<128x128xf32>
    %51 = arith.divf %47, %50 : vector<128x128xf32>
    %cst_25 = arith.constant dense<0.000000e+00> : vector<128x32xf32>
    %52 = tpu.matmul %51, %37, %cst_25 {dimension_numbers = #tpu.dot_dimension_numbers<[1], [0], [0], [1], [0, 0, 1, 1], [], []>} : vector<128x128xf32>, vector<128x32xf32>, vector<128x32xf32> -> vector<128x32xf32>
    %c32 = arith.constant 32 : index
    %c0_26 = arith.constant 0 : index
    %53 = vector.load %arg5[%c32, %c0_26] : memref<128x128xf32, #tpu.memory_space<vmem>>, vector<32x128xf32>
    %cst_27 = arith.constant dense<0.000000e+00> : vector<128x128xf32>
    %54 = tpu.matmul %52, %53, %cst_27 {dimension_numbers = #tpu.dot_dimension_numbers<[1], [0], [0], [1], [0, 0, 1, 1], [], []>} : vector<128x32xf32>, vector<32x128xf32>, vector<128x128xf32> -> vector<128x128xf32>
    %55 = arith.addf %34, %54 : vector<128x128xf32>
    %56 = vector.extract_strided_slice %6 {offsets = [0, 64], sizes = [128, 32], strides = [1, 1]} : vector<128x384xf32> to vector<128x32xf32>
    %57 = vector.extract_strided_slice %6 {offsets = [0, 192], sizes = [128, 32], strides = [1, 1]} : vector<128x384xf32> to vector<128x32xf32>
    %58 = vector.extract_strided_slice %6 {offsets = [0, 320], sizes = [128, 32], strides = [1, 1]} : vector<128x384xf32> to vector<128x32xf32>
    %cst_28 = arith.constant dense<0.000000e+00> : vector<128x128xf32>
    %59 = tpu.matmul %56, %57, %cst_28 {dimension_numbers = #tpu.dot_dimension_numbers<[1], [1], [0], [0], [0, 0, 1, 0], [], []>} : vector<128x32xf32>, vector<128x32xf32>, vector<128x128xf32> -> vector<128x128xf32>
    %cst_29 = arith.constant 0.176776692 : f32
    %60 = vector.broadcast %cst_29 : f32 to vector<128x128xf32>
    %61 = arith.mulf %59, %60 : vector<128x128xf32>
    %cst_30 = arith.constant -1.000000e+09 : f32
    %62 = vector.broadcast %cst_30 : f32 to vector<128x128xf32>
    %63 = arith.select %10, %61, %62 : vector<128x128xi1>, vector<128x128xf32>
    %cst_31 = arith.constant dense<0xFF800000> : vector<128xf32>
    %64 = vector.multi_reduction <maximumf>, %63, %cst_31 [1] : vector<128x128xf32> to vector<128xf32>
    %65 = vector.shape_cast %64 : vector<128xf32> to vector<128x1xf32>
    %66 = vector.broadcast %65 : vector<128x1xf32> to vector<128x128xf32>
    %67 = arith.subf %63, %66 : vector<128x128xf32>
    %68 = math.exp %67 : vector<128x128xf32>
    %cst_32 = arith.constant dense<0.000000e+00> : vector<128xf32>
    %69 = vector.multi_reduction <add>, %68, %cst_32 [1] : vector<128x128xf32> to vector<128xf32>
    %70 = vector.shape_cast %69 : vector<128xf32> to vector<128x1xf32>
    %71 = vector.broadcast %70 : vector<128x1xf32> to vector<128x128xf32>
    %72 = arith.divf %68, %71 : vector<128x128xf32>
    %cst_33 = arith.constant dense<0.000000e+00> : vector<128x32xf32>
    %73 = tpu.matmul %72, %58, %cst_33 {dimension_numbers = #tpu.dot_dimension_numbers<[1], [0], [0], [1], [0, 0, 1, 1], [], []>} : vector<128x128xf32>, vector<128x32xf32>, vector<128x32xf32> -> vector<128x32xf32>
    %c64 = arith.constant 64 : index
    %c0_34 = arith.constant 0 : index
    %74 = vector.load %arg5[%c64, %c0_34] : memref<128x128xf32, #tpu.memory_space<vmem>>, vector<32x128xf32>
    %cst_35 = arith.constant dense<0.000000e+00> : vector<128x128xf32>
    %75 = tpu.matmul %73, %74, %cst_35 {dimension_numbers = #tpu.dot_dimension_numbers<[1], [0], [0], [1], [0, 0, 1, 1], [], []>} : vector<128x32xf32>, vector<32x128xf32>, vector<128x128xf32> -> vector<128x128xf32>
    %76 = arith.addf %55, %75 : vector<128x128xf32>
    %77 = vector.extract_strided_slice %6 {offsets = [0, 96], sizes = [128, 32], strides = [1, 1]} : vector<128x384xf32> to vector<128x32xf32>
    %78 = vector.extract_strided_slice %6 {offsets = [0, 224], sizes = [128, 32], strides = [1, 1]} : vector<128x384xf32> to vector<128x32xf32>
    %79 = vector.extract_strided_slice %6 {offsets = [0, 352], sizes = [128, 32], strides = [1, 1]} : vector<128x384xf32> to vector<128x32xf32>
    %cst_36 = arith.constant dense<0.000000e+00> : vector<128x128xf32>
    %80 = tpu.matmul %77, %78, %cst_36 {dimension_numbers = #tpu.dot_dimension_numbers<[1], [1], [0], [0], [0, 0, 1, 0], [], []>} : vector<128x32xf32>, vector<128x32xf32>, vector<128x128xf32> -> vector<128x128xf32>
    %cst_37 = arith.constant 0.176776692 : f32
    %81 = vector.broadcast %cst_37 : f32 to vector<128x128xf32>
    %82 = arith.mulf %80, %81 : vector<128x128xf32>
    %cst_38 = arith.constant -1.000000e+09 : f32
    %83 = vector.broadcast %cst_38 : f32 to vector<128x128xf32>
    %84 = arith.select %10, %82, %83 : vector<128x128xi1>, vector<128x128xf32>
    %cst_39 = arith.constant dense<0xFF800000> : vector<128xf32>
    %85 = vector.multi_reduction <maximumf>, %84, %cst_39 [1] : vector<128x128xf32> to vector<128xf32>
    %86 = vector.shape_cast %85 : vector<128xf32> to vector<128x1xf32>
    %87 = vector.broadcast %86 : vector<128x1xf32> to vector<128x128xf32>
    %88 = arith.subf %84, %87 : vector<128x128xf32>
    %89 = math.exp %88 : vector<128x128xf32>
    %cst_40 = arith.constant dense<0.000000e+00> : vector<128xf32>
    %90 = vector.multi_reduction <add>, %89, %cst_40 [1] : vector<128x128xf32> to vector<128xf32>
    %91 = vector.shape_cast %90 : vector<128xf32> to vector<128x1xf32>
    %92 = vector.broadcast %91 : vector<128x1xf32> to vector<128x128xf32>
    %93 = arith.divf %89, %92 : vector<128x128xf32>
    %cst_41 = arith.constant dense<0.000000e+00> : vector<128x32xf32>
    %94 = tpu.matmul %93, %79, %cst_41 {dimension_numbers = #tpu.dot_dimension_numbers<[1], [0], [0], [1], [0, 0, 1, 1], [], []>} : vector<128x128xf32>, vector<128x32xf32>, vector<128x32xf32> -> vector<128x32xf32>
    %c96 = arith.constant 96 : index
    %c0_42 = arith.constant 0 : index
    %95 = vector.load %arg5[%c96, %c0_42] : memref<128x128xf32, #tpu.memory_space<vmem>>, vector<32x128xf32>
    %cst_43 = arith.constant dense<0.000000e+00> : vector<128x128xf32>
    %96 = tpu.matmul %94, %95, %cst_43 {dimension_numbers = #tpu.dot_dimension_numbers<[1], [0], [0], [1], [0, 0, 1, 1], [], []>} : vector<128x32xf32>, vector<32x128xf32>, vector<128x128xf32> -> vector<128x128xf32>
    %97 = arith.addf %76, %96 : vector<128x128xf32>
    %c0_44 = arith.constant 0 : index
    %c0_45 = arith.constant 0 : index
    %c0_46 = arith.constant 0 : index
    %98 = vector.load %arg1[%c0_44, %c0_45, %c0_46] : memref<16x8x128xf32, #tpu.memory_space<vmem>>, vector<16x8x128xf32>
    %99 = vector.shape_cast %98 : vector<16x8x128xf32> to vector<128x128xf32>
    %100 = arith.addf %99, %97 : vector<128x128xf32>
    %c0_47 = arith.constant 0 : index
    %c0_48 = arith.constant 0 : index
    %101 = vector.load %arg7[%c0_47, %c0_48] : memref<1x128xf32, #tpu.memory_space<vmem>>, vector<1x128xf32>
    %c0_49 = arith.constant 0 : index
    %c0_50 = arith.constant 0 : index
    %102 = vector.load %arg8[%c0_49, %c0_50] : memref<1x128xf32, #tpu.memory_space<vmem>>, vector<1x128xf32>
    %cst_51 = arith.constant dense<0.000000e+00> : vector<128xf32>
    %103 = vector.multi_reduction <add>, %100, %cst_51 [1] : vector<128x128xf32> to vector<128xf32>
    %104 = vector.shape_cast %103 : vector<128xf32> to vector<128x1xf32>
    %cst_52 = arith.constant 1.280000e+02 : f32
    %105 = vector.broadcast %cst_52 : f32 to vector<128x1xf32>
    %106 = arith.divf %104, %105 : vector<128x1xf32>
    %107 = vector.broadcast %106 : vector<128x1xf32> to vector<128x128xf32>
    %108 = arith.subf %100, %107 : vector<128x128xf32>
    %109 = arith.mulf %108, %108 : vector<128x128xf32>
    %cst_53 = arith.constant dense<0.000000e+00> : vector<128xf32>
    %110 = vector.multi_reduction <add>, %109, %cst_53 [1] : vector<128x128xf32> to vector<128xf32>
    %111 = vector.shape_cast %110 : vector<128xf32> to vector<128x1xf32>
    %cst_54 = arith.constant 1.280000e+02 : f32
    %112 = vector.broadcast %cst_54 : f32 to vector<128x1xf32>
    %113 = arith.divf %111, %112 : vector<128x1xf32>
    %114 = vector.broadcast %106 : vector<128x1xf32> to vector<128x128xf32>
    %115 = arith.subf %100, %114 : vector<128x128xf32>
    %cst_55 = arith.constant 9.99999974E-6 : f32
    %116 = vector.broadcast %cst_55 : f32 to vector<128x1xf32>
    %117 = arith.addf %113, %116 : vector<128x1xf32>
    %118 = math.rsqrt %117 : vector<128x1xf32>
    %119 = vector.broadcast %118 : vector<128x1xf32> to vector<128x128xf32>
    %120 = arith.mulf %115, %119 : vector<128x128xf32>
    %121 = vector.broadcast %101 : vector<1x128xf32> to vector<128x128xf32>
    %122 = arith.mulf %120, %121 : vector<128x128xf32>
    %123 = vector.broadcast %102 : vector<1x128xf32> to vector<128x128xf32>
    %124 = arith.addf %122, %123 : vector<128x128xf32>
    %c0_56 = arith.constant 0 : index
    %c0_57 = arith.constant 0 : index
    %125 = vector.load %arg9[%c0_56, %c0_57] : memref<128x128xf32, #tpu.memory_space<vmem>>, vector<128x128xf32>
    %cst_58 = arith.constant dense<0.000000e+00> : vector<128x128xf32>
    %126 = tpu.matmul %124, %125, %cst_58 {dimension_numbers = #tpu.dot_dimension_numbers<[1], [0], [0], [1], [0, 0, 1, 1], [], []>} : vector<128x128xf32>, vector<128x128xf32>, vector<128x128xf32> -> vector<128x128xf32>
    %c0_59 = arith.constant 0 : index
    %c0_60 = arith.constant 0 : index
    %127 = vector.load %arg10[%c0_59, %c0_60] : memref<1x128xf32, #tpu.memory_space<vmem>>, vector<1x128xf32>
    %128 = vector.broadcast %127 : vector<1x128xf32> to vector<128x128xf32>
    %129 = arith.addf %126, %128 : vector<128x128xf32>
    %cst_61 = arith.constant 0.000000e+00 : f32
    %130 = vector.broadcast %cst_61 : f32 to vector<128x128xf32>
    %131 = arith.cmpf oge, %129, %130 : vector<128x128xf32>
    %cst_62 = arith.constant 0.00999999977 : f32
    %132 = vector.broadcast %cst_62 : f32 to vector<128x128xf32>
    %133 = arith.mulf %132, %129 : vector<128x128xf32>
    %134 = arith.select %131, %129, %133 : vector<128x128xi1>, vector<128x128xf32>
    %c0_63 = arith.constant 0 : index
    %c0_64 = arith.constant 0 : index
    %135 = vector.load %arg11[%c0_63, %c0_64] : memref<128x128xf32, #tpu.memory_space<vmem>>, vector<128x128xf32>
    %cst_65 = arith.constant dense<0.000000e+00> : vector<128x128xf32>
    %136 = tpu.matmul %134, %135, %cst_65 {dimension_numbers = #tpu.dot_dimension_numbers<[1], [0], [0], [1], [0, 0, 1, 1], [], []>} : vector<128x128xf32>, vector<128x128xf32>, vector<128x128xf32> -> vector<128x128xf32>
    %c0_66 = arith.constant 0 : index
    %c0_67 = arith.constant 0 : index
    %137 = vector.load %arg12[%c0_66, %c0_67] : memref<1x128xf32, #tpu.memory_space<vmem>>, vector<1x128xf32>
    %138 = vector.broadcast %137 : vector<1x128xf32> to vector<128x128xf32>
    %139 = arith.addf %136, %138 : vector<128x128xf32>
    %140 = arith.addf %124, %139 : vector<128x128xf32>
    %c0_68 = arith.constant 0 : index
    %c0_69 = arith.constant 0 : index
    %141 = vector.load %arg13[%c0_68, %c0_69] : memref<1x128xf32, #tpu.memory_space<vmem>>, vector<1x128xf32>
    %c0_70 = arith.constant 0 : index
    %c0_71 = arith.constant 0 : index
    %142 = vector.load %arg14[%c0_70, %c0_71] : memref<1x128xf32, #tpu.memory_space<vmem>>, vector<1x128xf32>
    %cst_72 = arith.constant dense<0.000000e+00> : vector<128xf32>
    %143 = vector.multi_reduction <add>, %140, %cst_72 [1] : vector<128x128xf32> to vector<128xf32>
    %144 = vector.shape_cast %143 : vector<128xf32> to vector<128x1xf32>
    %cst_73 = arith.constant 1.280000e+02 : f32
    %145 = vector.broadcast %cst_73 : f32 to vector<128x1xf32>
    %146 = arith.divf %144, %145 : vector<128x1xf32>
    %147 = vector.broadcast %146 : vector<128x1xf32> to vector<128x128xf32>
    %148 = arith.subf %140, %147 : vector<128x128xf32>
    %149 = arith.mulf %148, %148 : vector<128x128xf32>
    %cst_74 = arith.constant dense<0.000000e+00> : vector<128xf32>
    %150 = vector.multi_reduction <add>, %149, %cst_74 [1] : vector<128x128xf32> to vector<128xf32>
    %151 = vector.shape_cast %150 : vector<128xf32> to vector<128x1xf32>
    %cst_75 = arith.constant 1.280000e+02 : f32
    %152 = vector.broadcast %cst_75 : f32 to vector<128x1xf32>
    %153 = arith.divf %151, %152 : vector<128x1xf32>
    %154 = vector.broadcast %146 : vector<128x1xf32> to vector<128x128xf32>
    %155 = arith.subf %140, %154 : vector<128x128xf32>
    %cst_76 = arith.constant 9.99999974E-6 : f32
    %156 = vector.broadcast %cst_76 : f32 to vector<128x1xf32>
    %157 = arith.addf %153, %156 : vector<128x1xf32>
    %158 = math.rsqrt %157 : vector<128x1xf32>
    %159 = vector.broadcast %158 : vector<128x1xf32> to vector<128x128xf32>
    %160 = arith.mulf %155, %159 : vector<128x128xf32>
    %161 = vector.broadcast %141 : vector<1x128xf32> to vector<128x128xf32>
    %162 = arith.mulf %160, %161 : vector<128x128xf32>
    %163 = vector.broadcast %142 : vector<1x128xf32> to vector<128x128xf32>
    %164 = arith.addf %162, %163 : vector<128x128xf32>
    %165 = vector.shape_cast %164 : vector<128x128xf32> to vector<16x8x128xf32>
    %c0_77 = arith.constant 0 : index
    %c0_78 = arith.constant 0 : index
    %c0_79 = arith.constant 0 : index
    %166 = vector.load %arg15[%c0_77, %c0_78, %c0_79] : memref<16x8x128xf32, #tpu.memory_space<vmem>>, vector<16x8x128xf32>
    tpu.vector_store %arg15[%c0_77, %c0_78, %c0_79], %165 {strides = array<i32>} : memref<16x8x128xf32, #tpu.memory_space<vmem>>, vector<16x8x128xf32>,
    return
  }
  func.func @transform_0(%arg0: i32) -> (i32, i32, i32) {
    %c0_i32 = arith.constant 0 : i32
    %c0_i32_0 = arith.constant 0 : i32
    %c0_i32_1 = arith.constant 0 : i32
    return %arg0, %c0_i32, %c0_i32_0 : i32, i32, i32
  }
  func.func @transform_1(%arg0: i32) -> (i32, i32, i32) {
    %c0_i32 = arith.constant 0 : i32
    %c0_i32_0 = arith.constant 0 : i32
    %c0_i32_1 = arith.constant 0 : i32
    return %arg0, %c0_i32, %c0_i32_0 : i32, i32, i32
  }
  func.func @transform_2(%arg0: i32) -> (i32, i32) {
    %c0_i32 = arith.constant 0 : i32
    %c0_i32_0 = arith.constant 0 : i32
    %c0_i32_1 = arith.constant 0 : i32
    return %c0_i32, %c0_i32_0 : i32, i32
  }
  func.func @transform_3(%arg0: i32) -> (i32, i32) {
    %c0_i32 = arith.constant 0 : i32
    %c0_i32_0 = arith.constant 0 : i32
    %c0_i32_1 = arith.constant 0 : i32
    return %c0_i32, %c0_i32_0 : i32, i32
  }
  func.func @transform_4(%arg0: i32) -> (i32, i32) {
    %c0_i32 = arith.constant 0 : i32
    %c0_i32_0 = arith.constant 0 : i32
    %c0_i32_1 = arith.constant 0 : i32
    return %c0_i32, %c0_i32_0 : i32, i32
  }
  func.func @transform_5(%arg0: i32) -> (i32, i32) {
    %c0_i32 = arith.constant 0 : i32
    %c0_i32_0 = arith.constant 0 : i32
    %c0_i32_1 = arith.constant 0 : i32
    return %c0_i32, %c0_i32_0 : i32, i32
  }
  func.func @transform_6(%arg0: i32) -> (i32, i32) {
    %c0_i32 = arith.constant 0 : i32
    %c0_i32_0 = arith.constant 0 : i32
    %c0_i32_1 = arith.constant 0 : i32
    return %c0_i32, %c0_i32_0 : i32, i32
  }
  func.func @transform_7(%arg0: i32) -> (i32, i32) {
    %c0_i32 = arith.constant 0 : i32
    %c0_i32_0 = arith.constant 0 : i32
    %c0_i32_1 = arith.constant 0 : i32
    return %c0_i32, %c0_i32_0 : i32, i32
  }
  func.func @transform_8(%arg0: i32) -> (i32, i32) {
    %c0_i32 = arith.constant 0 : i32
    %c0_i32_0 = arith.constant 0 : i32
    %c0_i32_1 = arith.constant 0 : i32
    return %c0_i32, %c0_i32_0 : i32, i32
  }
  func.func @transform_9(%arg0: i32) -> (i32, i32) {
    %c0_i32 = arith.constant 0 : i32
    %c0_i32_0 = arith.constant 0 : i32
    %c0_i32_1 = arith.constant 0 : i32
    return %c0_i32, %c0_i32_0 : i32, i32
  }
  func.func @transform_10(%arg0: i32) -> (i32, i32) {
    %c0_i32 = arith.constant 0 : i32
    %c0_i32_0 = arith.constant 0 : i32
    %c0_i32_1 = arith.constant 0 : i32
    return %c0_i32, %c0_i32_0 : i32, i32
  }
  func.func @transform_11(%arg0: i32) -> (i32, i32) {
    %c0_i32 = arith.constant 0 : i32
    %c0_i32_0 = arith.constant 0 : i32
    %c0_i32_1 = arith.constant 0 : i32
    return %c0_i32, %c0_i32_0 : i32, i32
  }
  func.func @transform_12(%arg0: i32) -> (i32, i32) {
    %c0_i32 = arith.constant 0 : i32
    %c0_i32_0 = arith.constant 0 : i32
    %c0_i32_1 = arith.constant 0 : i32
    return %c0_i32, %c0_i32_0 : i32, i32
  }
  func.func @transform_13(%arg0: i32) -> (i32, i32) {
    %c0_i32 = arith.constant 0 : i32
    %c0_i32_0 = arith.constant 0 : i32
    %c0_i32_1 = arith.constant 0 : i32
    return %c0_i32, %c0_i32_0 : i32, i32
  }
  func.func @transform_14(%arg0: i32) -> (i32, i32, i32) {
    %c0_i32 = arith.constant 0 : i32
    %c0_i32_0 = arith.constant 0 : i32
    %c0_i32_1 = arith.constant 0 : i32
    return %arg0, %c0_i32, %c0_i32_0 : i32, i32, i32
  }
}

</mosaic_0001>

<llo_original>
// kernel: tpu_custom_call.1
$region0: #{tpu_custom_call.1}
  #allocation0 [shape = 'u32[]', space=smem, size = 0x4, offset = 0x4, fixed_abs, tag = 'smem constant byte address 0x4 - core index']
  #allocation1 [shape = 'u32[144,128]{1,0:T(1,128)}', space=vmem, size = 0x12000, scoped, tag = 'internal scratch']
  %s0 = inlined_call_operand.hbm [shape: f32[32,8,128], index: 0, kind: input, shape index: {}]
  %s1 = inlined_call_operand.hbm [shape: s8[2,128,128], index: 1, kind: input, shape index: {}]
  %s2 = inlined_call_operand.hbm [shape: f32[128,384], index: 2, kind: input, shape index: {}]
  %s3 = inlined_call_operand.vmem [shape: f32[1,384], index: 3, kind: input, shape index: {}]
  %s4 = inlined_call_operand.hbm [shape: f32[128,128], index: 4, kind: input, shape index: {}]
  %s5 = inlined_call_operand.vmem [shape: f32[1,128], index: 5, kind: input, shape index: {}]
  %s6 = inlined_call_operand.vmem [shape: f32[1,128], index: 6, kind: input, shape index: {}]
  %s7 = inlined_call_operand.vmem [shape: f32[1,128], index: 7, kind: input, shape index: {}]
  %s8 = inlined_call_operand.hbm [shape: f32[128,128], index: 8, kind: input, shape index: {}]
  %s9 = inlined_call_operand.vmem [shape: f32[1,128], index: 9, kind: input, shape index: {}]
  %s10 = inlined_call_operand.hbm [shape: f32[128,128], index: 10, kind: input, shape index: {}]
  %s11 = inlined_call_operand.vmem [shape: f32[1,128], index: 11, kind: input, shape index: {}]
  %s12 = inlined_call_operand.vmem [shape: f32[1,128], index: 12, kind: input, shape index: {}]
  %s13 = inlined_call_operand.vmem [shape: f32[1,128], index: 13, kind: input, shape index: {}]
  %s14 = inlined_call_operand.hbm [shape: f32[32,8,128], index: 14, kind: output, shape index: {}]
  %s15 = sld [smem:[#allocation0]]
  $region113: #{tpu_custom_call.1} parent=0
    _
  %s17 = ssub.s32 1, %s15
  %s18 = scalar_select 0, %s17, %s15
  $region1: #{tpu_custom_call.1} parent=0
    #allocation2 [shape = 'u8[131072]{0}', space=vmem, size = 0x20000, scoped, tag = 'input window, operand 0']
    #allocation3 [shape = 's32[2]{0}', space=sflag, size = 0x8, scoped, tag = 'scoped memory for tpu_custom_call.1']
    #allocation4 [shape = 's32[2]{0}', space=sflag, size = 0x8, scoped, tag = 'scoped memory for tpu_custom_call.1']
    #allocation5 [shape = 'u8[32768]{0}', space=vmem, size = 0x8000, scoped, tag = 'input window, operand 1']
    #allocation6 [shape = 's32[2]{0}', space=sflag, size = 0x8, scoped, tag = 'scoped memory for tpu_custom_call.1']
    #allocation7 [shape = 'u8[196608]{0}', space=vmem, size = 0x30000, scoped, tag = 'input window, operand 2, single buffered']
    #allocation8 [shape = 'u8[65536]{0}', space=vmem, size = 0x10000, scoped, tag = 'input window, operand 4, single buffered']
    #allocation9 [shape = 's32[1]{0}', space=sflag, size = 0x4, scoped, tag = 'scoped memory for tpu_custom_call.1']
    #allocation10 [shape = 'u8[65536]{0}', space=vmem, size = 0x10000, scoped, tag = 'input window, operand 8, single buffered']
    #allocation11 [shape = 'u8[65536]{0}', space=vmem, size = 0x10000, scoped, tag = 'input window, operand 10, single buffered']
    #allocation12 [shape = 's32[1]{0}', space=sflag, size = 0x4, scoped, tag = 'scoped memory for tpu_custom_call.1']
    #allocation13 [shape = 'u8[131072]{0}', space=vmem, size = 0x20000, scoped, tag = 'output window, operand 0']
    %19 = vsyncpa [#allocation3], 0
    %s20 = scalar_lea.sflag [#allocation3], 1
    %21 = vsyncpa %s20, 0
    %22 = vsyncpa [#allocation6], 0
    %s23 = scalar_lea.sflag [#allocation6], 1
    %24 = vsyncpa %s23, 0
    %25 = vsyncpa [#allocation9], 0
    %26 = vsyncpa [#allocation12], 0
    %27 = vsyncpa [#allocation4], 0
    %s28 = scalar_lea.sflag [#allocation4], 1
    %29 = vsyncpa %s28, 0
    loop: start=0, step=1, limit=4
    $region2: #{tpu_custom_call.1} parent=1 // loop_pre_header
      _
    $region3: #{tpu_custom_call.1} parent=1 // loop_header
      %s31 = sphi 0, %s35
      %p32 = scmp.ge.s32.totalorder %s31, 4
      %s41 = sphi 0, %s43
      %s44 = sphi 0, %s41
      %s45 = sphi 0, %s44
      %s61 = sphi 0, %s45
      %s67 = sphi 0, %s69
      %s70 = sphi 0, %s67
      %s71 = sphi 0, %s70
      %s87 = sphi 0, %s71
      %s91 = sphi 0, %s91
      %s93 = sphi 0, %s91
      %s94 = sphi 0, %s93
      %s108 = sphi 0, %s94
      %s112 = sphi 0, %s112
      %s114 = sphi 0, %s112
      %s115 = sphi 0, %s114
      %s129 = sphi 0, %s115
      %s133 = sphi 0, %s133
      %s135 = sphi 0, %s133
      %s136 = sphi 0, %s135
      %s150 = sphi 0, %s136
      %s154 = sphi 0, %s154
      %s156 = sphi 0, %s154
      %s157 = sphi 0, %s156
      %s171 = sphi 0, %s157
      %s175 = sphi 0, %s175
      %s177 = sphi 0, %s175
      %s178 = sphi 0, %s177
      %s192 = sphi 0, %s178
      %s196 = sphi 0, %s196
      %s198 = sphi 0, %s196
      %s199 = sphi 0, %s198
      %s213 = sphi 0, %s199
      %s217 = sphi 0, %s217
      %s219 = sphi 0, %s217
      %s220 = sphi 0, %s219
      %s234 = sphi 0, %s220
      %s238 = sphi 0, %s238
      %s240 = sphi 0, %s238
      %s241 = sphi 0, %s240
      %s255 = sphi 0, %s241
      %s259 = sphi 0, %s259
      %s261 = sphi 0, %s259
      %s262 = sphi 0, %s261
      %s276 = sphi 0, %s262
      %s280 = sphi 0, %s280
      %s282 = sphi 0, %s280
      %s283 = sphi 0, %s282
      %s297 = sphi 0, %s283
      %s301 = sphi 0, %s301
      %s303 = sphi 0, %s301
      %s304 = sphi 0, %s303
      %s318 = sphi 0, %s304
      %s322 = sphi 0, %s322
      %s324 = sphi 0, %s322
      %s325 = sphi 0, %s324
      %s339 = sphi 0, %s325
      %s345 = sphi 0, %s347
      %s348 = sphi 0, %s345
      %s349 = sphi 0, %s348
      %s365 = sphi 0, %s349
    $region4: #{tpu_custom_call.1} parent=1 // loop_header_branch
      %34 = sbr.rel (%p32) target = $region8
    $region5: #{tpu_custom_call.1} parent=1 // loop_body
      %s36 = ssub.s32 %s31, 1
      %s37 = ssub.s32 %s31, 2
      %s38 = sadd.s32 %s31, 1
      %s39 = ssub.s32 %s31, %s38
      %p40 = scmp.eq.s32.totalorder %s39, 0
      %s42 = sadd.s32 %s41, 1
      %s43 = scalar_select %p40, %s41, %s42
      %p46 = pneg %p40
      %p47 = scmp.eq.s32.totalorder %s31, 1
      %p48 = por %p46, %p47
      %p49 = scmp.ne.s32.totalorder %s41, %s44
      %p50 = scmp.eq.s32.totalorder %s31, 0
      %p51 = por %p49, %p50
      %p52 = scmp.ne.s32.totalorder %s41, %s44
      %p53 = scmp.eq.s32.totalorder %s36, 1
      %p54 = por %p52, %p53
      %p55 = scmp.ne.s32.totalorder %s44, %s45
      %p56 = scmp.eq.s32.totalorder %s36, 0
      %p57 = por %p55, %p56
      %p58 = scmp.ne.s32.totalorder %s44, %s45
      %p59 = scmp.eq.s32.totalorder %s37, 1
      %p60 = por %p58, %p59
      %p62 = scmp.ne.s32.totalorder %s45, %s61
      %p63 = scmp.eq.s32.totalorder %s37, 0
      %p64 = por %p62, %p63
      %s65 = ssub.s32 %s31, %s38
      %p66 = scmp.eq.s32.totalorder %s65, 0
      %s68 = sadd.s32 %s67, 1
      %s69 = scalar_select %p66, %s67, %s68
      %p72 = pneg %p66
      %p73 = scmp.eq.s32.totalorder %s31, 1
      %p74 = por %p72, %p73
      %p75 = scmp.ne.s32.totalorder %s67, %s70
      %p76 = scmp.eq.s32.totalorder %s31, 0
      %p77 = por %p75, %p76
      %p78 = scmp.ne.s32.totalorder %s67, %s70
      %p79 = scmp.eq.s32.totalorder %s36, 1
      %p80 = por %p78, %p79
      %p81 = scmp.ne.s32.totalorder %s70, %s71
      %p82 = scmp.eq.s32.totalorder %s36, 0
      %p83 = por %p81, %p82
      %p84 = scmp.ne.s32.totalorder %s70, %s71
      %p85 = scmp.eq.s32.totalorder %s37, 1
      %p86 = por %p84, %p85
      %p88 = scmp.ne.s32.totalorder %s71, %s87
      %p89 = scmp.eq.s32.totalorder %s37, 0
      %p90 = por %p88, %p89
      %s92 = sadd.s32 %s91, 1
      %p95 = scmp.eq.s32.totalorder %s31, 1
      %p96 = scmp.ne.s32.totalorder %s91, %s93
      %p97 = scmp.eq.s32.totalorder %s31, 0
      %p98 = por %p96, %p97
      %p99 = scmp.ne.s32.totalorder %s91, %s93
      %p100 = scmp.eq.s32.totalorder %s36, 1
      %p101 = por %p99, %p100
      %p102 = scmp.ne.s32.totalorder %s93, %s94
      %p103 = scmp.eq.s32.totalorder %s36, 0
      %p104 = por %p102, %p103
      %p105 = scmp.ne.s32.totalorder %s93, %s94
      %p106 = scmp.eq.s32.totalorder %s37, 1
      %p107 = por %p105, %p106
      %p109 = scmp.ne.s32.totalorder %s94, %s108
      %p110 = scmp.eq.s32.totalorder %s37, 0
      %p111 = por %p109, %p110
      %s113 = sadd.s32 %s112, 1
      %p116 = scmp.eq.s32.totalorder %s31, 1
      %p117 = scmp.ne.s32.totalorder %s112, %s114
      %p118 = scmp.eq.s32.totalorder %s31, 0
      %p119 = por %p117, %p118
      %p120 = scmp.ne.s32.totalorder %s112, %s114
      %p121 = scmp.eq.s32.totalorder %s36, 1
      %p122 = por %p120, %p121
      %p123 = scmp.ne.s32.totalorder %s114, %s115
      %p124 = scmp.eq.s32.totalorder %s36, 0
      %p125 = por %p123, %p124
      %p126 = scmp.ne.s32.totalorder %s114, %s115
      %p127 = scmp.eq.s32.totalorder %s37, 1
      %p128 = por %p126, %p127
      %p130 = scmp.ne.s32.totalorder %s115, %s129
      %p131 = scmp.eq.s32.totalorder %s37, 0
      %p132 = por %p130, %p131
      %s134 = sadd.s32 %s133, 1
      %p137 = scmp.eq.s32.totalorder %s31, 1
      %p138 = scmp.ne.s32.totalorder %s133, %s135
      %p139 = scmp.eq.s32.totalorder %s31, 0
      %p140 = por %p138, %p139
      %p141 = scmp.ne.s32.totalorder %s133, %s135
      %p142 = scmp.eq.s32.totalorder %s36, 1
      %p143 = por %p141, %p142
      %p144 = scmp.ne.s32.totalorder %s135, %s136
      %p145 = scmp.eq.s32.totalorder %s36, 0
      %p146 = por %p144, %p145
      %p147 = scmp.ne.s32.totalorder %s135, %s136
      %p148 = scmp.eq.s32.totalorder %s37, 1
      %p149 = por %p147, %p148
      %p151 = scmp.ne.s32.totalorder %s136, %s150
      %p152 = scmp.eq.s32.totalorder %s37, 0
      %p153 = por %p151, %p152
      %s155 = sadd.s32 %s154, 1
      %p158 = scmp.eq.s32.totalorder %s31, 1
      %p159 = scmp.ne.s32.totalorder %s154, %s156
      %p160 = scmp.eq.s32.totalorder %s31, 0
      %p161 = por %p159, %p160
      %p162 = scmp.ne.s32.totalorder %s154, %s156
      %p163 = scmp.eq.s32.totalorder %s36, 1
      %p164 = por %p162, %p163
      %p165 = scmp.ne.s32.totalorder %s156, %s157
      %p166 = scmp.eq.s32.totalorder %s36, 0
      %p167 = por %p165, %p166
      %p168 = scmp.ne.s32.totalorder %s156, %s157
      %p169 = scmp.eq.s32.totalorder %s37, 1
      %p170 = por %p168, %p169
      %p172 = scmp.ne.s32.totalorder %s157, %s171
      %p173 = scmp.eq.s32.totalorder %s37, 0
      %p174 = por %p172, %p173
      %s176 = sadd.s32 %s175, 1
      %p179 = scmp.eq.s32.totalorder %s31, 1
      %p180 = scmp.ne.s32.totalorder %s175, %s177
      %p181 = scmp.eq.s32.totalorder %s31, 0
      %p182 = por %p180, %p181
      %p183 = scmp.ne.s32.totalorder %s175, %s177
      %p184 = scmp.eq.s32.totalorder %s36, 1
      %p185 = por %p183, %p184
      %p186 = scmp.ne.s32.totalorder %s177, %s178
      %p187 = scmp.eq.s32.totalorder %s36, 0
      %p188 = por %p186, %p187
      %p189 = scmp.ne.s32.totalorder %s177, %s178
      %p190 = scmp.eq.s32.totalorder %s37, 1
      %p191 = por %p189, %p190
      %p193 = scmp.ne.s32.totalorder %s178, %s192
      %p194 = scmp.eq.s32.totalorder %s37, 0
      %p195 = por %p193, %p194
      %s197 = sadd.s32 %s196, 1
      %p200 = scmp.eq.s32.totalorder %s31, 1
      %p201 = scmp.ne.s32.totalorder %s196, %s198
      %p202 = scmp.eq.s32.totalorder %s31, 0
      %p203 = por %p201, %p202
      %p204 = scmp.ne.s32.totalorder %s196, %s198
      %p205 = scmp.eq.s32.totalorder %s36, 1
      %p206 = por %p204, %p205
      %p207 = scmp.ne.s32.totalorder %s198, %s199
      %p208 = scmp.eq.s32.totalorder %s36, 0
      %p209 = por %p207, %p208
      %p210 = scmp.ne.s32.totalorder %s198, %s199
      %p211 = scmp.eq.s32.totalorder %s37, 1
      %p212 = por %p210, %p211
      %p214 = scmp.ne.s32.totalorder %s199, %s213
      %p215 = scmp.eq.s32.totalorder %s37, 0
      %p216 = por %p214, %p215
      %s218 = sadd.s32 %s217, 1
      %p221 = scmp.eq.s32.totalorder %s31, 1
      %p222 = scmp.ne.s32.totalorder %s217, %s219
      %p223 = scmp.eq.s32.totalorder %s31, 0
      %p224 = por %p222, %p223
      %p225 = scmp.ne.s32.totalorder %s217, %s219
      %p226 = scmp.eq.s32.totalorder %s36, 1
      %p227 = por %p225, %p226
      %p228 = scmp.ne.s32.totalorder %s219, %s220
      %p229 = scmp.eq.s32.totalorder %s36, 0
      %p230 = por %p228, %p229
      %p231 = scmp.ne.s32.totalorder %s219, %s220
      %p232 = scmp.eq.s32.totalorder %s37, 1
      %p233 = por %p231, %p232
      %p235 = scmp.ne.s32.totalorder %s220, %s234
      %p236 = scmp.eq.s32.totalorder %s37, 0
      %p237 = por %p235, %p236
      %s239 = sadd.s32 %s238, 1
      %p242 = scmp.eq.s32.totalorder %s31, 1
      %p243 = scmp.ne.s32.totalorder %s238, %s240
      %p244 = scmp.eq.s32.totalorder %s31, 0
      %p245 = por %p243, %p244
      %p246 = scmp.ne.s32.totalorder %s238, %s240
      %p247 = scmp.eq.s32.totalorder %s36, 1
      %p248 = por %p246, %p247
      %p249 = scmp.ne.s32.totalorder %s240, %s241
      %p250 = scmp.eq.s32.totalorder %s36, 0
      %p251 = por %p249, %p250
      %p252 = scmp.ne.s32.totalorder %s240, %s241
      %p253 = scmp.eq.s32.totalorder %s37, 1
      %p254 = por %p252, %p253
      %p256 = scmp.ne.s32.totalorder %s241, %s255
      %p257 = scmp.eq.s32.totalorder %s37, 0
      %p258 = por %p256, %p257
      %s260 = sadd.s32 %s259, 1
      %p263 = scmp.eq.s32.totalorder %s31, 1
      %p264 = scmp.ne.s32.totalorder %s259, %s261
      %p265 = scmp.eq.s32.totalorder %s31, 0
      %p266 = por %p264, %p265
      %p267 = scmp.ne.s32.totalorder %s259, %s261
      %p268 = scmp.eq.s32.totalorder %s36, 1
      %p269 = por %p267, %p268
      %p270 = scmp.ne.s32.totalorder %s261, %s262
      %p271 = scmp.eq.s32.totalorder %s36, 0
      %p272 = por %p270, %p271
      %p273 = scmp.ne.s32.totalorder %s261, %s262
      %p274 = scmp.eq.s32.totalorder %s37, 1
      %p275 = por %p273, %p274
      %p277 = scmp.ne.s32.totalorder %s262, %s276
      %p278 = scmp.eq.s32.totalorder %s37, 0
      %p279 = por %p277, %p278
      %s281 = sadd.s32 %s280, 1
      %p284 = scmp.eq.s32.totalorder %s31, 1
      %p285 = scmp.ne.s32.totalorder %s280, %s282
      %p286 = scmp.eq.s32.totalorder %s31, 0
      %p287 = por %p285, %p286
      %p288 = scmp.ne.s32.totalorder %s280, %s282
      %p289 = scmp.eq.s32.totalorder %s36, 1
      %p290 = por %p288, %p289
      %p291 = scmp.ne.s32.totalorder %s282, %s283
      %p292 = scmp.eq.s32.totalorder %s36, 0
      %p293 = por %p291, %p292
      %p294 = scmp.ne.s32.totalorder %s282, %s283
      %p295 = scmp.eq.s32.totalorder %s37, 1
      %p296 = por %p294, %p295
      %p298 = scmp.ne.s32.totalorder %s283, %s297
      %p299 = scmp.eq.s32.totalorder %s37, 0
      %p300 = por %p298, %p299
      %s302 = sadd.s32 %s301, 1
      %p305 = scmp.eq.s32.totalorder %s31, 1
      %p306 = scmp.ne.s32.totalorder %s301, %s303
      %p307 = scmp.eq.s32.totalorder %s31, 0
      %p308 = por %p306, %p307
      %p309 = scmp.ne.s32.totalorder %s301, %s303
      %p310 = scmp.eq.s32.totalorder %s36, 1
      %p311 = por %p309, %p310
      %p312 = scmp.ne.s32.totalorder %s303, %s304
      %p313 = scmp.eq.s32.totalorder %s36, 0
      %p314 = por %p312, %p313
      %p315 = scmp.ne.s32.totalorder %s303, %s304
      %p316 = scmp.eq.s32.totalorder %s37, 1
      %p317 = por %p315, %p316
      %p319 = scmp.ne.s32.totalorder %s304, %s318
      %p320 = scmp.eq.s32.totalorder %s37, 0
      %p321 = por %p319, %p320
      %s323 = sadd.s32 %s322, 1
      %p326 = scmp.eq.s32.totalorder %s31, 1
      %p327 = scmp.ne.s32.totalorder %s322, %s324
      %p328 = scmp.eq.s32.totalorder %s31, 0
      %p329 = por %p327, %p328
      %p330 = scmp.ne.s32.totalorder %s322, %s324
      %p331 = scmp.eq.s32.totalorder %s36, 1
      %p332 = por %p330, %p331
      %p333 = scmp.ne.s32.totalorder %s324, %s325
      %p334 = scmp.eq.s32.totalorder %s36, 0
      %p335 = por %p333, %p334
      %p336 = scmp.ne.s32.totalorder %s324, %s325
      %p337 = scmp.eq.s32.totalorder %s37, 1
      %p338 = por %p336, %p337
      %p340 = scmp.ne.s32.totalorder %s325, %s339
      %p341 = scmp.eq.s32.totalorder %s37, 0
      %p342 = por %p340, %p341
      %s343 = ssub.s32 %s31, %s38
      %p344 = scmp.eq.s32.totalorder %s343, 0
      %s346 = sadd.s32 %s345, 1
      %s347 = scalar_select %p344, %s345, %s346
      %p350 = pneg %p344
      %p351 = scmp.eq.s32.totalorder %s31, 1
      %p352 = por %p350, %p351
      %p353 = scmp.ne.s32.totalorder %s345, %s348
      %p354 = scmp.eq.s32.totalorder %s31, 0
      %p355 = por %p353, %p354
      %p356 = scmp.ne.s32.totalorder %s345, %s348
      %p357 = scmp.eq.s32.totalorder %s36, 1
      %p358 = por %p356, %p357
      %p359 = scmp.ne.s32.totalorder %s348, %s349
      %p360 = scmp.eq.s32.totalorder %s36, 0
      %p361 = por %p359, %p360
      %p362 = scmp.ne.s32.totalorder %s348, %s349
      %p363 = scmp.eq.s32.totalorder %s37, 1
      %p364 = por %p362, %p363
      %p366 = scmp.ne.s32.totalorder %s349, %s365
      %p367 = scmp.eq.s32.totalorder %s37, 0
      %p368 = por %p366, %p367
      %p369 = scmp.le.s32.totalorder 1, %s31
      %p370 = scmp.lt.s32.totalorder %s31, 3
      %p371 = pnand %p369, %p370
      %p372 = pneg %p371
      // Predicated region
      $region9: #{tpu_custom_call.1} parent=5 // pred_check
        _
      $region10: #{tpu_custom_call.1} parent=5 // pred_check_branch
        %374 = sbr.rel (%p371) target = $region12
      $region11: #{tpu_custom_call.1} parent=5 // pred_region
        %s375 = ssub.s32 %s31, 1
        // Predicated region
        $region13: #{tpu_custom_call.1} parent=11 // pred_check
          %p376 = pneg %p104
        $region14: #{tpu_custom_call.1} parent=11 // pred_check_branch
          %378 = sbr.rel (%p376) target = $region16
        $region15: #{tpu_custom_call.1} parent=11 // pred_region
          %s380 = ssub.s32 6144, 6144
          %381 = vsyncadd [#allocation6], %s380
          %s382 = sshll.u32 [#allocation7], 4
          %s383 = int_to_ptr.vmem [resolvable:$true] %s382
          %388 = dma.hbm_to_vmem [thread:$0]  %s2, 6144, %s383, [#allocation6], 384, 384, 24
        $region16: #{tpu_custom_call.1} parent=11 // pred_fallthru
          _
        // Predicated region
        $region17: #{tpu_custom_call.1} parent=11 // pred_check
          %p389 = pneg %p125
        $region18: #{tpu_custom_call.1} parent=11 // pred_check_branch
          %391 = sbr.rel (%p389) target = $region20
        $region19: #{tpu_custom_call.1} parent=11 // pred_region
          _
        $region20: #{tpu_custom_call.1} parent=11 // pred_fallthru
          _
        // Predicated region
        $region21: #{tpu_custom_call.1} parent=11 // pred_check
          %p392 = pneg %p146
        $region22: #{tpu_custom_call.1} parent=11 // pred_check_branch
          %394 = sbr.rel (%p392) target = $region24
        $region23: #{tpu_custom_call.1} parent=11 // pred_region
          %s396 = ssub.s32 2048, 2048
          %397 = vsyncadd [#allocation9], %s396
          %s398 = sshll.u32 [#allocation8], 4
          %s399 = int_to_ptr.vmem [resolvable:$true] %s398
          %404 = dma.hbm_to_vmem [thread:$0]  %s4, 2048, %s399, [#allocation9], 128, 128, 8
        $region24: #{tpu_custom_call.1} parent=11 // pred_fallthru
          _
        // Predicated region
        $region25: #{tpu_custom_call.1} parent=11 // pred_check
          %p405 = pneg %p167
        $region26: #{tpu_custom_call.1} parent=11 // pred_check_branch
          %407 = sbr.rel (%p405) target = $region28
        $region27: #{tpu_custom_call.1} parent=11 // pred_region
          _
        $region28: #{tpu_custom_call.1} parent=11 // pred_fallthru
          _
        // Predicated region
        $region29: #{tpu_custom_call.1} parent=11 // pred_check
          %p408 = pneg %p188
        $region30: #{tpu_custom_call.1} parent=11 // pred_check_branch
          %410 = sbr.rel (%p408) target = $region32
        $region31: #{tpu_custom_call.1} parent=11 // pred_region
          _
        $region32: #{tpu_custom_call.1} parent=11 // pred_fallthru
          _
        // Predicated region
        $region33: #{tpu_custom_call.1} parent=11 // pred_check
          %p411 = pneg %p209
        $region34: #{tpu_custom_call.1} parent=11 // pred_check_branch
          %413 = sbr.rel (%p411) target = $region36
        $region35: #{tpu_custom_call.1} parent=11 // pred_region
          _
        $region36: #{tpu_custom_call.1} parent=11 // pred_fallthru
          _
        // Predicated region
        $region37: #{tpu_custom_call.1} parent=11 // pred_check
          %p414 = pneg %p230
        $region38: #{tpu_custom_call.1} parent=11 // pred_check_branch
          %416 = sbr.rel (%p414) target = $region40
        $region39: #{tpu_custom_call.1} parent=11 // pred_region
          %s418 = ssub.s32 2048, 2048
          %419 = vsyncadd [#allocation9], %s418
          %s420 = sshll.u32 [#allocation10], 4
          %s421 = int_to_ptr.vmem [resolvable:$true] %s420
          %426 = dma.hbm_to_vmem [thread:$0]  %s8, 2048, %s421, [#allocation9], 128, 128, 8
        $region40: #{tpu_custom_call.1} parent=11 // pred_fallthru
          _
        // Predicated region
        $region41: #{tpu_custom_call.1} parent=11 // pred_check
          %p427 = pneg %p251
        $region42: #{tpu_custom_call.1} parent=11 // pred_check_branch
          %429 = sbr.rel (%p427) target = $region44
        $region43: #{tpu_custom_call.1} parent=11 // pred_region
          _
        $region44: #{tpu_custom_call.1} parent=11 // pred_fallthru
          _
        // Predicated region
        $region45: #{tpu_custom_call.1} parent=11 // pred_check
          %p430 = pneg %p272
        $region46: #{tpu_custom_call.1} parent=11 // pred_check_branch
          %432 = sbr.rel (%p430) target = $region48
        $region47: #{tpu_custom_call.1} parent=11 // pred_region
          %s434 = ssub.s32 2048, 2048
          %435 = vsyncadd [#allocation12], %s434
          %s436 = sshll.u32 [#allocation11], 4
          %s437 = int_to_ptr.vmem [resolvable:$true] %s436
          %442 = dma.hbm_to_vmem [thread:$0]  %s10, 2048, %s437, [#allocation12], 128, 128, 8
        $region48: #{tpu_custom_call.1} parent=11 // pred_fallthru
          _
        // Predicated region
        $region49: #{tpu_custom_call.1} parent=11 // pred_check
          %p443 = pneg %p293
        $region50: #{tpu_custom_call.1} parent=11 // pred_check_branch
          %445 = sbr.rel (%p443) target = $region52
        $region51: #{tpu_custom_call.1} parent=11 // pred_region
          _
        $region52: #{tpu_custom_call.1} parent=11 // pred_fallthru
          _
        // Predicated region
        $region53: #{tpu_custom_call.1} parent=11 // pred_check
          %p446 = pneg %p314
        $region54: #{tpu_custom_call.1} parent=11 // pred_check_branch
          %448 = sbr.rel (%p446) target = $region56
        $region55: #{tpu_custom_call.1} parent=11 // pred_region
          _
        $region56: #{tpu_custom_call.1} parent=11 // pred_fallthru
          _
        // Predicated region
        $region57: #{tpu_custom_call.1} parent=11 // pred_check
          %p449 = pneg %p335
        $region58: #{tpu_custom_call.1} parent=11 // pred_check_branch
          %451 = sbr.rel (%p449) target = $region60
        $region59: #{tpu_custom_call.1} parent=11 // pred_region
          _
        $region60: #{tpu_custom_call.1} parent=11 // pred_fallthru
          _
      $region12: #{tpu_custom_call.1} parent=5 // pred_fallthru
        _
      %p452 = scmp.lt.s32.totalorder %s31, 2
      // Predicated region
      $region61: #{tpu_custom_call.1} parent=5 // pred_check
        %p453 = pneg %p452
      $region62: #{tpu_custom_call.1} parent=5 // pred_check_branch
        %455 = sbr.rel (%p453) target = $region64
      $region63: #{tpu_custom_call.1} parent=5 // pred_region
        // Predicated region
        $region65: #{tpu_custom_call.1} parent=63 // pred_check
          %p456 = pneg %p51
        $region66: #{tpu_custom_call.1} parent=63 // pred_check_branch
          %458 = sbr.rel (%p456) target = $region68
        $region67: #{tpu_custom_call.1} parent=63 // pred_region
          %s459 = sand.u32 %s41, 1
          %s460 = scalar_lea.sflag [#allocation3], %s459
          %s461 = sand.u32 %s41, 1
          %s462 = smul.addr %s461, 128
          %s463 = scalar_lea.vmem [#allocation2], %s462
          %s464 = smul.u32 16, %s31
          %s466 = ssub.s32 2048, 2048
          %467 = vsyncadd %s460, %s466
          %s468 = smul.addr %s464, 128
          %s469 = scalar_lea.hbm %s0, %s468
          %s470 = sshll.u32 %s463, 4
          %s471 = int_to_ptr.vmem [resolvable:$true] %s470
          %476 = dma.hbm_to_vmem [thread:$0]  %s469, 2048, %s471, %s460, 128, 128, 8
        $region68: #{tpu_custom_call.1} parent=63 // pred_fallthru
          _
        // Predicated region
        $region69: #{tpu_custom_call.1} parent=63 // pred_check
          %p477 = pneg %p77
        $region70: #{tpu_custom_call.1} parent=63 // pred_check_branch
          %479 = sbr.rel (%p477) target = $region72
        $region71: #{tpu_custom_call.1} parent=63 // pred_region
          %s480 = sand.u32 %s31, 1
          %s481 = scalar_lea.sflag [#allocation6], %s480
          %s482 = sand.u32 %s67, 1
          %s483 = smul.addr %s482, 32
          %s484 = scalar_lea.vmem [#allocation5], %s483
          %s486 = ssub.s32 512, 512
          %487 = vsyncadd %s481, %s486
          %s488 = smul.addr %s31, 4
          %s489 = smul.addr %s488, 128
          %s490 = scalar_lea.hbm %s1, %s489
          %s491 = sshll.u32 %s484, 4
          %s492 = int_to_ptr.vmem [resolvable:$true] %s491
          %497 = dma.hbm_to_vmem [thread:$0]  %s490, 512, %s492, %s481, 128, 128, 8
        $region72: #{tpu_custom_call.1} parent=63 // pred_fallthru
          _
      $region64: #{tpu_custom_call.1} parent=5 // pred_fallthru
        _
      %p498 = scmp.le.s32.totalorder 1, %s31
      %p499 = scmp.lt.s32.totalorder %s31, 3
      %p500 = pnand %p498, %p499
      %p501 = pneg %p500
      // Predicated region
      $region73: #{tpu_custom_call.1} parent=5 // pred_check
        _
      $region74: #{tpu_custom_call.1} parent=5 // pred_check_branch
        %503 = sbr.rel (%p500) target = $region76
      $region75: #{tpu_custom_call.1} parent=5 // pred_region
        %s504 = ssub.s32 %s31, 1
        %s505 = sand.u32 %s44, 1
        %s506 = scalar_lea.sflag [#allocation3], %s505
        %s507 = sand.u32 %s44, 1
        %s508 = smul.addr %s507, 128
        %s509 = scalar_lea.vmem [#allocation2], %s508
        // Predicated region
        $region77: #{tpu_custom_call.1} parent=75 // pred_check
          %p510 = pneg %p57
        $region78: #{tpu_custom_call.1} parent=75 // pred_check_branch
          %512 = sbr.rel (%p510) target = $region80
        $region79: #{tpu_custom_call.1} parent=75 // pred_region
          %513 = dma.done %s506, 2048
        $region80: #{tpu_custom_call.1} parent=75 // pred_fallthru
          _
        %s514 = sand.u32 %s36, 1
        %s515 = scalar_lea.sflag [#allocation6], %s514
        %s516 = sand.u32 %s70, 1
        %s517 = smul.addr %s516, 32
        %s518 = scalar_lea.vmem [#allocation5], %s517
        // Predicated region
        $region81: #{tpu_custom_call.1} parent=75 // pred_check
          %p519 = pneg %p83
        $region82: #{tpu_custom_call.1} parent=75 // pred_check_branch
          %521 = sbr.rel (%p519) target = $region84
        $region83: #{tpu_custom_call.1} parent=75 // pred_region
          %522 = dma.done %s515, 512
        $region84: #{tpu_custom_call.1} parent=75 // pred_fallthru
          _
        // Predicated region
        $region85: #{tpu_custom_call.1} parent=75 // pred_check
          %p523 = pneg %p104
        $region86: #{tpu_custom_call.1} parent=75 // pred_check_branch
          %525 = sbr.rel (%p523) target = $region88
        $region87: #{tpu_custom_call.1} parent=75 // pred_region
          %526 = dma.done [#allocation6], 6144
        $region88: #{tpu_custom_call.1} parent=75 // pred_fallthru
          _
        // Predicated region
        $region89: #{tpu_custom_call.1} parent=75 // pred_check
          %p527 = pneg %p146
        $region90: #{tpu_custom_call.1} parent=75 // pred_check_branch
          %529 = sbr.rel (%p527) target = $region92
        $region91: #{tpu_custom_call.1} parent=75 // pred_region
          %530 = dma.done [#allocation9], 2048
        $region92: #{tpu_custom_call.1} parent=75 // pred_fallthru
          _
        // Predicated region
        $region93: #{tpu_custom_call.1} parent=75 // pred_check
          %p531 = pneg %p230
        $region94: #{tpu_custom_call.1} parent=75 // pred_check_branch
          %533 = sbr.rel (%p531) target = $region96
        $region95: #{tpu_custom_call.1} parent=75 // pred_region
          %534 = dma.done [#allocation9], 2048
        $region96: #{tpu_custom_call.1} parent=75 // pred_fallthru
          _
        // Predicated region
        $region97: #{tpu_custom_call.1} parent=75 // pred_check
          %p535 = pneg %p272
        $region98: #{tpu_custom_call.1} parent=75 // pred_check_branch
          %537 = sbr.rel (%p535) target = $region100
        $region99: #{tpu_custom_call.1} parent=75 // pred_region
          %538 = dma.done [#allocation12], 2048
        $region100: #{tpu_custom_call.1} parent=75 // pred_fallthru
          _
        %s539 = sand.u32 %s44, 1
        %s540 = scalar_lea.sflag [#allocation3], %s539
        %s541 = sand.u32 %s44, 1
        %s542 = smul.addr %s541, 128
        %s543 = scalar_lea.vmem [#allocation2], %s542
        %p544 = pneg %p57
        %p545 = pneg %p54
        %s546 = sand.u32 %s36, 1
        %s547 = scalar_lea.sflag [#allocation6], %s546
        %s548 = sand.u32 %s70, 1
        %s549 = smul.addr %s548, 32
        %s550 = scalar_lea.vmem [#allocation5], %s549
        %p551 = pneg %p83
        %p552 = pneg %p80
        %p553 = pneg %p104
        %p554 = pneg %p101
        %p555 = pneg %p125
        %p556 = pneg %p122
        %p557 = pneg %p146
        %p558 = pneg %p143
        %p559 = pneg %p167
        %p560 = pneg %p164
        %p561 = pneg %p188
        %p562 = pneg %p185
        %p563 = pneg %p209
        %p564 = pneg %p206
        %p565 = pneg %p230
        %p566 = pneg %p227
        %p567 = pneg %p251
        %p568 = pneg %p248
        %p569 = pneg %p272
        %p570 = pneg %p269
        %p571 = pneg %p293
        %p572 = pneg %p290
        %p573 = pneg %p314
        %p574 = pneg %p311
        %p575 = pneg %p335
        %p576 = pneg %p332
        %p577 = pneg %p361
        %p578 = pneg %p358
        %s579 = sand.u32 %s348, 1
        %s580 = scalar_lea.sflag [#allocation4], %s579
        %s581 = sand.u32 %s348, 1
        %s582 = smul.addr %s581, 128
        %s583 = scalar_lea.vmem [#allocation13], %s582
        %s584 = smul.u32 16, %s36
        %s585 = smul.u32 16, %s36
        %v588 = vld [vmem:[%s509] sm:$0xff]
        %v589 = vld [vmem:[%s509 + $0x8] sm:$0xff]
        %v590 = vld [vmem:[%s509 + $0x10] sm:$0xff]
        %v591 = vld [vmem:[%s509 + $0x18] sm:$0xff]
        %v592 = vld [vmem:[%s509 + $0x20] sm:$0xff]
        %v593 = vld [vmem:[%s509 + $0x28] sm:$0xff]
        %v594 = vld [vmem:[%s509 + $0x30] sm:$0xff]
        %v595 = vld [vmem:[%s509 + $0x38] sm:$0xff]
        %v596 = vld [vmem:[%s509 + $0x40] sm:$0xff]
        %v597 = vld [vmem:[%s509 + $0x48] sm:$0xff]
        %v598 = vld [vmem:[%s509 + $0x50] sm:$0xff]
        %v599 = vld [vmem:[%s509 + $0x58] sm:$0xff]
        %v600 = vld [vmem:[%s509 + $0x60] sm:$0xff]
        %v601 = vld [vmem:[%s509 + $0x68] sm:$0xff]
        %v602 = vld [vmem:[%s509 + $0x70] sm:$0xff]
        %v603 = vld [vmem:[%s509 + $0x78] sm:$0xff]
        %v604 = vld [vmem:[#allocation7] sm:$0xff]
        %v605 = vld [vmem:[#allocation7 + $0x8] sm:$0xff]
        %v606 = vld [vmem:[#allocation7 + $0x10] sm:$0xff]
        %v607 = vld [vmem:[#allocation7 + $0x18] sm:$0xff]
        %v608 = vld [vmem:[#allocation7 + $0x20] sm:$0xff]
        %v609 = vld [vmem:[#allocation7 + $0x28] sm:$0xff]
        %v610 = vld [vmem:[#allocation7 + $0x30] sm:$0xff]
        %v611 = vld [vmem:[#allocation7 + $0x38] sm:$0xff]
        %v612 = vld [vmem:[#allocation7 + $0x40] sm:$0xff]
        %v613 = vld [vmem:[#allocation7 + $0x48] sm:$0xff]
        %v614 = vld [vmem:[#allocation7 + $0x50] sm:$0xff]
        %v615 = vld [vmem:[#allocation7 + $0x58] sm:$0xff]
        %v616 = vld [vmem:[#allocation7 + $0x60] sm:$0xff]
        %v617 = vld [vmem:[#allocation7 + $0x68] sm:$0xff]
        %v618 = vld [vmem:[#allocation7 + $0x70] sm:$0xff]
        %v619 = vld [vmem:[#allocation7 + $0x78] sm:$0xff]
        %v620 = vld [vmem:[#allocation7 + $0x80] sm:$0xff]
        %v621 = vld [vmem:[#allocation7 + $0x88] sm:$0xff]
        %v622 = vld [vmem:[#allocation7 + $0x90] sm:$0xff]
        %v623 = vld [vmem:[#allocation7 + $0x98] sm:$0xff]
        %v624 = vld [vmem:[#allocation7 + $0xa0] sm:$0xff]
        %v625 = vld [vmem:[#allocation7 + $0xa8] sm:$0xff]
        %v626 = vld [vmem:[#allocation7 + $0xb0] sm:$0xff]
        %v627 = vld [vmem:[#allocation7 + $0xb8] sm:$0xff]
        %v628 = vld [vmem:[#allocation7 + $0xc0] sm:$0xff]
        %v629 = vld [vmem:[#allocation7 + $0xc8] sm:$0xff]
        %v630 = vld [vmem:[#allocation7 + $0xd0] sm:$0xff]
        %v631 = vld [vmem:[#allocation7 + $0xd8] sm:$0xff]
        %v632 = vld [vmem:[#allocation7 + $0xe0] sm:$0xff]
        %v633 = vld [vmem:[#allocation7 + $0xe8] sm:$0xff]
        %v634 = vld [vmem:[#allocation7 + $0xf0] sm:$0xff]
        %v635 = vld [vmem:[#allocation7 + $0xf8] sm:$0xff]
        %v636 = vld [vmem:[#allocation7 + $0x100] sm:$0xff]
        %v637 = vld [vmem:[#allocation7 + $0x108] sm:$0xff]
        %v638 = vld [vmem:[#allocation7 + $0x110] sm:$0xff]
        %v639 = vld [vmem:[#allocation7 + $0x118] sm:$0xff]
        %v640 = vld [vmem:[#allocation7 + $0x120] sm:$0xff]
        %v641 = vld [vmem:[#allocation7 + $0x128] sm:$0xff]
        %v642 = vld [vmem:[#allocation7 + $0x130] sm:$0xff]
        %v643 = vld [vmem:[#allocation7 + $0x138] sm:$0xff]
        %v644 = vld [vmem:[#allocation7 + $0x140] sm:$0xff]
        %v645 = vld [vmem:[#allocation7 + $0x148] sm:$0xff]
        %v646 = vld [vmem:[#allocation7 + $0x150] sm:$0xff]
        %v647 = vld [vmem:[#allocation7 + $0x158] sm:$0xff]
        %v648 = vld [vmem:[#allocation7 + $0x160] sm:$0xff]
        %v649 = vld [vmem:[#allocation7 + $0x168] sm:$0xff]
        %v650 = vld [vmem:[#allocation7 + $0x170] sm:$0xff]
        %v651 = vld [vmem:[#allocation7 + $0x178] sm:$0xff]
        %v652 = vld [vmem:[%s3] sm:$0x7]
        %v654 = vlaneseq
        %v655 = vshrl.u32 %v654, 7
        %v656 = vsub.s32 0, %v655
        %v657 = vrot.slane %v652, %v656
        %v658 = vlaneseq
        %v659 = vshrl.u32 %v658, 7
        %v660 = vsub.s32 1, %v659
        %v661 = vrot.slane %v652, %v660
        %v662 = vlaneseq
        %v663 = vshrl.u32 %v662, 7
        %v664 = vsub.s32 2, %v663
        %v665 = vrot.slane %v652, %v664
        %669 = vmatprep.subr.mxu0 %v650
        %670 = vmatpush1.msra.mxu0 %v649
        %671 = vmatprep.subr.mxu0 %v647
        %672 = vmatpush1.msra.mxu0 %v646
        %673 = vmatprep.subr.mxu0 %v644
        %674 = vmatpush1.msra.mxu0 %v643
        %675 = vmatprep.subr.mxu0 %v641
        %676 = vmatpush1.msra.mxu0 %v640
        %677 = vmatprep.subr.mxu0 %v638
        %678 = vmatpush1.msra.mxu0 %v637
        %679 = vmatprep.subr.mxu0 %v635
        %680 = vmatpush1.msra.mxu0 %v634
        %681 = vmatprep.subr.mxu0 %v632
        %682 = vmatpush1.msra.mxu0 %v631
        %683 = vmatprep.subr.mxu0 %v629
        %684 = vmatpush1.msra.mxu0 %v628
        %685 = vmatprep.subr.mxu0 %v626
        %686 = vmatpush1.msra.mxu0 %v625
        %687 = vmatprep.subr.mxu0 %v623
        %688 = vmatpush1.msra.mxu0 %v622
        %689 = vmatprep.subr.mxu0 %v620
        %690 = vmatpush1.msra.mxu0 %v619
        %691 = vmatprep.subr.mxu0 %v617
        %692 = vmatpush1.msra.mxu0 %v616
        %693 = vmatprep.subr.mxu0 %v614
        %694 = vmatpush1.msra.mxu0 %v613
        %695 = vmatprep.subr.mxu0 %v611
        %696 = vmatpush1.msra.mxu0 %v610
        %697 = vmatprep.subr.mxu0 %v608
        %698 = vmatpush1.msra.mxu0 %v607
        %699 = vmatprep.subr.mxu0 %v605
        %700 = vmatpush1.msra.mxu0 %v604
        %701 = vmatprep.subr.mxu0 0.0
        %702 = vmatpush2.msra.mxu0 0.0
        %703 = vmatprep.subr.mxu0 0.0
        %704 = vmatpush2.msra.mxu0 0.0
        %705 = vmatprep.subr.mxu0 0.0
        %706 = vmatpush2.msra.mxu0 0.0
        %707 = vmatprep.subr.mxu0 0.0
        %708 = vmatpush2.msra.mxu0 0.0
        %709 = vmatprep.subr.mxu0 0.0
        %710 = vmatpush2.msra.mxu0 0.0
        %711 = vmatprep.subr.mxu0 0.0
        %712 = vmatpush2.msra.mxu0 0.0
        %713 = vmatprep.subr.mxu0 0.0
        %714 = vmatpush2.msra.mxu0 0.0
        %715 = vmatprep.subr.mxu0 0.0
        %716 = vmatpush2.msra.mxu0 0.0
        %717 = vmatprep.subr.mxu0 0.0
        %718 = vmatpush2.msra.mxu0 0.0
        %719 = vmatprep.subr.mxu0 0.0
        %720 = vmatpush2.msra.mxu0 0.0
        %721 = vmatprep.subr.mxu0 0.0
        %722 = vmatpush2.msra.mxu0 0.0
        %723 = vmatprep.subr.mxu0 0.0
        %724 = vmatpush2.msra.mxu0 0.0
        %725 = vmatprep.subr.mxu0 0.0
        %726 = vmatpush2.msra.mxu0 0.0
        %727 = vmatprep.subr.mxu0 0.0
        %728 = vmatpush2.msra.mxu0 0.0
        %729 = vmatprep.subr.mxu0 0.0
        %730 = vmatpush2.msra.mxu0 0.0
        %731 = vmatprep.subr.mxu0 0.0
        %732 = vmatpush2.msra.mxu0 0.0
        %733 = vmatprep.mubr.f32.mxu0 0.0
        %734 = vmatmul.mubr.f32.gmra.mxu0 %v588
        %v735 = vpop.f32.mrf.mxu0
        %v736 = vadd.f32 %v657, %v735
        %v737 = vpop.f32.mrf.mxu0
        %v738 = vadd.f32 %v661, %v737
        %739 = vmatprep.mubr.f32.mxu0 0.0
        %740 = vmatmul.mubr.f32.gmra.mxu0 %v589
        %v741 = vpop.f32.mrf.mxu0
        %v742 = vadd.f32 %v657, %v741
        %v743 = vpop.f32.mrf.mxu0
        %v744 = vadd.f32 %v661, %v743
        %745 = vmatprep.mubr.f32.mxu0 0.0
        %746 = vmatmul.mubr.f32.gmra.mxu0 %v590
        %v747 = vpop.f32.mrf.mxu0
        %v748 = vadd.f32 %v657, %v747
        %v749 = vpop.f32.mrf.mxu0
        %v750 = vadd.f32 %v661, %v749
        %751 = vmatprep.mubr.f32.mxu0 0.0
        %752 = vmatmul.mubr.f32.gmra.mxu0 %v591
        %v753 = vpop.f32.mrf.mxu0
        %v754 = vadd.f32 %v657, %v753
        %v755 = vpop.f32.mrf.mxu0
        %v756 = vadd.f32 %v661, %v755
        %757 = vmatprep.mubr.f32.mxu0 0.0
        %758 = vmatmul.mubr.f32.gmra.mxu0 %v592
        %v759 = vpop.f32.mrf.mxu0
        %v760 = vadd.f32 %v657, %v759
        %v761 = vpop.f32.mrf.mxu0
        %v762 = vadd.f32 %v661, %v761
        %763 = vmatprep.mubr.f32.mxu0 0.0
        %764 = vmatmul.mubr.f32.gmra.mxu0 %v593
        %v765 = vpop.f32.mrf.mxu0
        %v766 = vadd.f32 %v657, %v765
        %v767 = vpop.f32.mrf.mxu0
        %v768 = vadd.f32 %v661, %v767
        %769 = vmatprep.mubr.f32.mxu0 0.0
        %770 = vmatmul.mubr.f32.gmra.mxu0 %v594
        %v771 = vpop.f32.mrf.mxu0
        %v772 = vadd.f32 %v657, %v771
        %v773 = vpop.f32.mrf.mxu0
        %v774 = vadd.f32 %v661, %v773
        %775 = vmatprep.mubr.f32.mxu0 0.0
        %776 = vmatmul.mubr.f32.gmra.mxu0 %v595
        %v777 = vpop.f32.mrf.mxu0
        %v778 = vadd.f32 %v657, %v777
        %v779 = vpop.f32.mrf.mxu0
        %v780 = vadd.f32 %v661, %v779
        %781 = vmatprep.mubr.f32.mxu0 0.0
        %782 = vmatmul.mubr.f32.gmra.mxu0 %v596
        %v783 = vpop.f32.mrf.mxu0
        %v784 = vadd.f32 %v657, %v783
        %v785 = vpop.f32.mrf.mxu0
        %v786 = vadd.f32 %v661, %v785
        %787 = vmatprep.mubr.f32.mxu0 0.0
        %788 = vmatmul.mubr.f32.gmra.mxu0 %v597
        %v789 = vpop.f32.mrf.mxu0
        %v790 = vadd.f32 %v657, %v789
        %v791 = vpop.f32.mrf.mxu0
        %v792 = vadd.f32 %v661, %v791
        %793 = vmatprep.mubr.f32.mxu0 0.0
        %794 = vmatmul.mubr.f32.gmra.mxu0 %v598
        %v795 = vpop.f32.mrf.mxu0
        %v796 = vadd.f32 %v657, %v795
        %v797 = vpop.f32.mrf.mxu0
        %v798 = vadd.f32 %v661, %v797
        %799 = vmatprep.mubr.f32.mxu0 0.0
        %800 = vmatmul.mubr.f32.gmra.mxu0 %v599
        %v801 = vpop.f32.mrf.mxu0
        %v802 = vadd.f32 %v657, %v801
        %v803 = vpop.f32.mrf.mxu0
        %v804 = vadd.f32 %v661, %v803
        %805 = vmatprep.mubr.f32.mxu0 0.0
        %806 = vmatmul.mubr.f32.gmra.mxu0 %v600
        %v807 = vpop.f32.mrf.mxu0
        %v808 = vadd.f32 %v657, %v807
        %v809 = vpop.f32.mrf.mxu0
        %v810 = vadd.f32 %v661, %v809
        %811 = vmatprep.mubr.f32.mxu0 0.0
        %812 = vmatmul.mubr.f32.gmra.mxu0 %v601
        %v813 = vpop.f32.mrf.mxu0
        %v814 = vadd.f32 %v657, %v813
        %v815 = vpop.f32.mrf.mxu0
        %v816 = vadd.f32 %v661, %v815
        %817 = vmatprep.mubr.f32.mxu0 0.0
        %818 = vmatmul.mubr.f32.gmra.mxu0 %v602
        %v819 = vpop.f32.mrf.mxu0
        %v820 = vadd.f32 %v657, %v819
        %v821 = vpop.f32.mrf.mxu0
        %v822 = vadd.f32 %v661, %v821
        %823 = vmatprep.mubr.f32.mxu0 0.0
        %824 = vmatmul.mubr.f32.gmra.mxu0 %v603
        %v825 = vpop.f32.mrf.mxu0
        %v826 = vadd.f32 %v657, %v825
        %v827 = vpop.f32.mrf.mxu0
        %v828 = vadd.f32 %v661, %v827
        %829 = vdwg.mxu0
        %830 = vmatprep.subr.mxu0 0.0
        %831 = vmatpush1.msra.mxu0 %v651
        %832 = vmatprep.subr.mxu0 0.0
        %833 = vmatpush1.msra.mxu0 %v648
        %834 = vmatprep.subr.mxu0 0.0
        %835 = vmatpush1.msra.mxu0 %v645
        %836 = vmatprep.subr.mxu0 0.0
        %837 = vmatpush1.msra.mxu0 %v642
        %838 = vmatprep.subr.mxu0 0.0
        %839 = vmatpush1.msra.mxu0 %v639
        %840 = vmatprep.subr.mxu0 0.0
        %841 = vmatpush1.msra.mxu0 %v636
        %842 = vmatprep.subr.mxu0 0.0
        %843 = vmatpush1.msra.mxu0 %v633
        %844 = vmatprep.subr.mxu0 0.0
        %845 = vmatpush1.msra.mxu0 %v630
        %846 = vmatprep.subr.mxu0 0.0
        %847 = vmatpush1.msra.mxu0 %v627
        %848 = vmatprep.subr.mxu0 0.0
        %849 = vmatpush1.msra.mxu0 %v624
        %850 = vmatprep.subr.mxu0 0.0
        %851 = vmatpush1.msra.mxu0 %v621
        %852 = vmatprep.subr.mxu0 0.0
        %853 = vmatpush1.msra.mxu0 %v618
        %854 = vmatprep.subr.mxu0 0.0
        %855 = vmatpush1.msra.mxu0 %v615
        %856 = vmatprep.subr.mxu0 0.0
        %857 = vmatpush1.msra.mxu0 %v612
        %858 = vmatprep.subr.mxu0 0.0
        %859 = vmatpush1.msra.mxu0 %v609
        %860 = vmatprep.subr.mxu0 0.0
        %861 = vmatpush1.msra.mxu0 %v606
        %862 = vmatprep.subr.mxu0 0.0
        %863 = vmatpush2.msra.mxu0 0.0
        %864 = vmatprep.subr.mxu0 0.0
        %865 = vmatpush2.msra.mxu0 0.0
        %866 = vmatprep.subr.mxu0 0.0
        %867 = vmatpush2.msra.mxu0 0.0
        %868 = vmatprep.subr.mxu0 0.0
        %869 = vmatpush2.msra.mxu0 0.0
        %870 = vmatprep.subr.mxu0 0.0
        %871 = vmatpush2.msra.mxu0 0.0
        %872 = vmatprep.subr.mxu0 0.0
        %873 = vmatpush2.msra.mxu0 0.0
        %874 = vmatprep.subr.mxu0 0.0
        %875 = vmatpush2.msra.mxu0 0.0
        %876 = vmatprep.subr.mxu0 0.0
        %877 = vmatpush2.msra.mxu0 0.0
        %878 = vmatprep.subr.mxu0 0.0
        %879 = vmatpush2.msra.mxu0 0.0
        %880 = vmatprep.subr.mxu0 0.0
        %881 = vmatpush2.msra.mxu0 0.0
        %882 = vmatprep.subr.mxu0 0.0
        %883 = vmatpush2.msra.mxu0 0.0
        %884 = vmatprep.subr.mxu0 0.0
        %885 = vmatpush2.msra.mxu0 0.0
        %886 = vmatprep.subr.mxu0 0.0
        %887 = vmatpush2.msra.mxu0 0.0
        %888 = vmatprep.subr.mxu0 0.0
        %889 = vmatpush2.msra.mxu0 0.0
        %890 = vmatprep.subr.mxu0 0.0
        %891 = vmatpush2.msra.mxu0 0.0
        %892 = vmatprep.subr.mxu0 0.0
        %893 = vmatpush2.msra.mxu0 0.0
        %894 = vmatprep.mubr.f32.mxu0 0.0
        %895 = vmatmul.mubr.f32.gmra.mxu0 %v588
        %v896 = vpop.f32.mrf.mxu0
        %v897 = vadd.f32 %v665, %v896
        %v898 = vpop.f32.mrf.mxu0
        %899 = vmatprep.mubr.f32.mxu0 0.0
        %900 = vmatmul.mubr.f32.gmra.mxu0 %v589
        %v901 = vpop.f32.mrf.mxu0
        %v902 = vadd.f32 %v665, %v901
        %v903 = vpop.f32.mrf.mxu0
        %904 = vmatprep.mubr.f32.mxu0 0.0
        %905 = vmatmul.mubr.f32.gmra.mxu0 %v590
        %v906 = vpop.f32.mrf.mxu0
        %v907 = vadd.f32 %v665, %v906
        %v908 = vpop.f32.mrf.mxu0
        %909 = vmatprep.mubr.f32.mxu0 0.0
        %910 = vmatmul.mubr.f32.gmra.mxu0 %v591
        %v911 = vpop.f32.mrf.mxu0
        %v912 = vadd.f32 %v665, %v911
        %v913 = vpop.f32.mrf.mxu0
        %914 = vmatprep.mubr.f32.mxu0 0.0
        %915 = vmatmul.mubr.f32.gmra.mxu0 %v592
        %v916 = vpop.f32.mrf.mxu0
        %v917 = vadd.f32 %v665, %v916
        %v918 = vpop.f32.mrf.mxu0
        %919 = vmatprep.mubr.f32.mxu0 0.0
        %920 = vmatmul.mubr.f32.gmra.mxu0 %v593
        %v921 = vpop.f32.mrf.mxu0
        %v922 = vadd.f32 %v665, %v921
        %v923 = vpop.f32.mrf.mxu0
        %924 = vmatprep.mubr.f32.mxu0 0.0
        %925 = vmatmul.mubr.f32.gmra.mxu0 %v594
        %v926 = vpop.f32.mrf.mxu0
        %v927 = vadd.f32 %v665, %v926
        %v928 = vpop.f32.mrf.mxu0
        %929 = vmatprep.mubr.f32.mxu0 0.0
        %930 = vmatmul.mubr.f32.gmra.mxu0 %v595
        %v931 = vpop.f32.mrf.mxu0
        %v932 = vadd.f32 %v665, %v931
        %v933 = vpop.f32.mrf.mxu0
        %934 = vmatprep.mubr.f32.mxu0 0.0
        %935 = vmatmul.mubr.f32.gmra.mxu0 %v596
        %v936 = vpop.f32.mrf.mxu0
        %v937 = vadd.f32 %v665, %v936
        %v938 = vpop.f32.mrf.mxu0
        %939 = vmatprep.mubr.f32.mxu0 0.0
        %940 = vmatmul.mubr.f32.gmra.mxu0 %v597
        %v941 = vpop.f32.mrf.mxu0
        %v942 = vadd.f32 %v665, %v941
        %v943 = vpop.f32.mrf.mxu0
        %944 = vmatprep.mubr.f32.mxu0 0.0
        %945 = vmatmul.mubr.f32.gmra.mxu0 %v598
        %v946 = vpop.f32.mrf.mxu0
        %v947 = vadd.f32 %v665, %v946
        %v948 = vpop.f32.mrf.mxu0
        %949 = vmatprep.mubr.f32.mxu0 0.0
        %950 = vmatmul.mubr.f32.gmra.mxu0 %v599
        %v951 = vpop.f32.mrf.mxu0
        %v952 = vadd.f32 %v665, %v951
        %v953 = vpop.f32.mrf.mxu0
        %954 = vmatprep.mubr.f32.mxu0 0.0
        %955 = vmatmul.mubr.f32.gmra.mxu0 %v600
        %v956 = vpop.f32.mrf.mxu0
        %v957 = vadd.f32 %v665, %v956
        %v958 = vpop.f32.mrf.mxu0
        %959 = vmatprep.mubr.f32.mxu0 0.0
        %960 = vmatmul.mubr.f32.gmra.mxu0 %v601
        %v961 = vpop.f32.mrf.mxu0
        %v962 = vadd.f32 %v665, %v961
        %v963 = vpop.f32.mrf.mxu0
        %964 = vmatprep.mubr.f32.mxu0 0.0
        %965 = vmatmul.mubr.f32.gmra.mxu0 %v602
        %v966 = vpop.f32.mrf.mxu0
        %v967 = vadd.f32 %v665, %v966
        %v968 = vpop.f32.mrf.mxu0
        %969 = vmatprep.mubr.f32.mxu0 0.0
        %970 = vmatmul.mubr.f32.gmra.mxu0 %v603
        %v971 = vpop.f32.mrf.mxu0
        %v972 = vadd.f32 %v665, %v971
        %v973 = vpop.f32.mrf.mxu0
        %974 = vdwg.mxu0
        %v975 = vld [vmem:[%s518] sm:$0xff]
        %v976 = vld [vmem:[%s518 + $0x8] sm:$0xff]
        %v977 = vld [vmem:[%s518 + $0x10] sm:$0xff]
        %v978 = vld [vmem:[%s518 + $0x18] sm:$0xff]
        %vm979 = vnez %v975
        %vm980 = vnez %v976
        %vm981 = vnez %v977
        %vm982 = vnez %v978
        %v983 = vld [vmem:[%s5] sm:$0x1]
        %v985 = vlaneseq
        %v986 = vshrl.u32 %v985, 7
        %v987 = vsub.s32 0, %v986
        %v988 = vrot.slane %v983, %v987
        %vm990 = vcmask 261120
        %v992 = vsel %vm990, %v736, 0
        %v995 = vsel %vm990, %v742, 0
        %v998 = vsel %vm990, %v748, 0
        %v1001 = vsel %vm990, %v754, 0
        %v1004 = vsel %vm990, %v760, 0
        %v1007 = vsel %vm990, %v766, 0
        %v1010 = vsel %vm990, %v772, 0
        %v1013 = vsel %vm990, %v778, 0
        %v1016 = vsel %vm990, %v784, 0
        %v1019 = vsel %vm990, %v790, 0
        %v1022 = vsel %vm990, %v796, 0
        %v1025 = vsel %vm990, %v802, 0
        %v1028 = vsel %vm990, %v808, 0
        %v1031 = vsel %vm990, %v814, 0
        %v1034 = vsel %vm990, %v820, 0
        %v1037 = vsel %vm990, %v826, 0
        %v1040 = vsel %vm990, %v738, 0
        %v1043 = vsel %vm990, %v744, 0
        %v1046 = vsel %vm990, %v750, 0
        %v1049 = vsel %vm990, %v756, 0
        %v1052 = vsel %vm990, %v762, 0
        %v1055 = vsel %vm990, %v768, 0
        %v1058 = vsel %vm990, %v774, 0
        %v1061 = vsel %vm990, %v780, 0
        %v1064 = vsel %vm990, %v786, 0
        %v1067 = vsel %vm990, %v792, 0
        %v1070 = vsel %vm990, %v798, 0
        %v1073 = vsel %vm990, %v804, 0
        %v1076 = vsel %vm990, %v810, 0
        %v1079 = vsel %vm990, %v816, 0
        %v1082 = vsel %vm990, %v822, 0
        %v1085 = vsel %vm990, %v828, 0
        %1087 = vmatprep.subr.mxu0 0.0
        %1088 = vmatpush1.xpose.msra.mxu0 %v1085
        %1089 = vmatprep.subr.mxu0 0.0
        %1090 = vmatpush1.xpose.msra.mxu0 %v1082
        %1091 = vmatprep.subr.mxu0 0.0
        %1092 = vmatpush1.xpose.msra.mxu0 %v1079
        %1093 = vmatprep.subr.mxu0 0.0
        %1094 = vmatpush1.xpose.msra.mxu0 %v1076
        %1095 = vmatprep.subr.mxu0 0.0
        %1096 = vmatpush1.xpose.msra.mxu0 %v1073
        %1097 = vmatprep.subr.mxu0 0.0
        %1098 = vmatpush1.xpose.msra.mxu0 %v1070
        %1099 = vmatprep.subr.mxu0 0.0
        %1100 = vmatpush1.xpose.msra.mxu0 %v1067
        %1101 = vmatprep.subr.mxu0 0.0
        %1102 = vmatpush1.xpose.msra.mxu0 %v1064
        %1103 = vmatprep.subr.mxu0 0.0
        %1104 = vmatpush1.xpose.msra.mxu0 %v1061
        %1105 = vmatprep.subr.mxu0 0.0
        %1106 = vmatpush1.xpose.msra.mxu0 %v1058
        %1107 = vmatprep.subr.mxu0 0.0
        %1108 = vmatpush1.xpose.msra.mxu0 %v1055
        %1109 = vmatprep.subr.mxu0 0.0
        %1110 = vmatpush1.xpose.msra.mxu0 %v1052
        %1111 = vmatprep.subr.mxu0 0.0
        %1112 = vmatpush1.xpose.msra.mxu0 %v1049
        %1113 = vmatprep.subr.mxu0 0.0
        %1114 = vmatpush1.xpose.msra.mxu0 %v1046
        %1115 = vmatprep.subr.mxu0 0.0
        %1116 = vmatpush1.xpose.msra.mxu0 %v1043
        %1117 = vmatprep.subr.mxu0 0.0
        %1118 = vmatpush1.xpose.msra.mxu0 %v1040
        %1119 = vmatprep.subr.mxu0 0.0
        %1120 = vmatpush2.xpose.msra.mxu0 0.0
        %1121 = vmatprep.subr.mxu0 0.0
        %1122 = vmatpush2.xpose.msra.mxu0 0.0
        %1123 = vmatprep.subr.mxu0 0.0
        %1124 = vmatpush2.xpose.msra.mxu0 0.0
        %1125 = vmatprep.subr.mxu0 0.0
        %1126 = vmatpush2.xpose.msra.mxu0 0.0
        %1127 = vmatprep.subr.mxu0 0.0
        %1128 = vmatpush2.xpose.msra.mxu0 0.0
        %1129 = vmatprep.subr.mxu0 0.0
        %1130 = vmatpush2.xpose.msra.mxu0 0.0
        %1131 = vmatprep.subr.mxu0 0.0
        %1132 = vmatpush2.xpose.msra.mxu0 0.0
        %1133 = vmatprep.subr.mxu0 0.0
        %1134 = vmatpush2.xpose.msra.mxu0 0.0
        %1135 = vmatprep.subr.mxu0 0.0
        %1136 = vmatpush2.xpose.msra.mxu0 0.0
        %1137 = vmatprep.subr.mxu0 0.0
        %1138 = vmatpush2.xpose.msra.mxu0 0.0
        %1139 = vmatprep.subr.mxu0 0.0
        %1140 = vmatpush2.xpose.msra.mxu0 0.0
        %1141 = vmatprep.subr.mxu0 0.0
        %1142 = vmatpush2.xpose.msra.mxu0 0.0
        %1143 = vmatprep.subr.mxu0 0.0
        %1144 = vmatpush2.xpose.msra.mxu0 0.0
        %1145 = vmatprep.subr.mxu0 0.0
        %1146 = vmatpush2.xpose.msra.mxu0 0.0
        %1147 = vmatprep.subr.mxu0 0.0
        %1148 = vmatpush2.xpose.msra.mxu0 0.0
        %1149 = vmatprep.subr.mxu0 0.0
        %1150 = vmatpush2.xpose.msra.mxu0 0.0
        %1151 = vmatprep.mubr.f32.mxu0 0.0
        %1152 = vmatmul.mubr.f32.gmra.mxu0 %v992
        %v1153 = vpop.f32.mrf.mxu0
        %v1154 = vadd.f32 0.0, %v1153
        %v1155 = vpop.f32.mrf.mxu0
        %1156 = vmatprep.mubr.f32.mxu0 0.0
        %1157 = vmatmul.mubr.f32.gmra.mxu0 %v995
        %v1158 = vpop.f32.mrf.mxu0
        %v1159 = vadd.f32 0.0, %v1158
        %v1160 = vpop.f32.mrf.mxu0
        %1161 = vmatprep.mubr.f32.mxu0 0.0
        %1162 = vmatmul.mubr.f32.gmra.mxu0 %v998
        %v1163 = vpop.f32.mrf.mxu0
        %v1164 = vadd.f32 0.0, %v1163
        %v1165 = vpop.f32.mrf.mxu0
        %1166 = vmatprep.mubr.f32.mxu0 0.0
        %1167 = vmatmul.mubr.f32.gmra.mxu0 %v1001
        %v1168 = vpop.f32.mrf.mxu0
        %v1169 = vadd.f32 0.0, %v1168
        %v1170 = vpop.f32.mrf.mxu0
        %1171 = vmatprep.mubr.f32.mxu0 0.0
        %1172 = vmatmul.mubr.f32.gmra.mxu0 %v1004
        %v1173 = vpop.f32.mrf.mxu0
        %v1174 = vadd.f32 0.0, %v1173
        %v1175 = vpop.f32.mrf.mxu0
        %1176 = vmatprep.mubr.f32.mxu0 0.0
        %1177 = vmatmul.mubr.f32.gmra.mxu0 %v1007
        %v1178 = vpop.f32.mrf.mxu0
        %v1179 = vadd.f32 0.0, %v1178
        %v1180 = vpop.f32.mrf.mxu0
        %1181 = vmatprep.mubr.f32.mxu0 0.0
        %1182 = vmatmul.mubr.f32.gmra.mxu0 %v1010
        %v1183 = vpop.f32.mrf.mxu0
        %v1184 = vadd.f32 0.0, %v1183
        %v1185 = vpop.f32.mrf.mxu0
        %1186 = vmatprep.mubr.f32.mxu0 0.0
        %1187 = vmatmul.mubr.f32.gmra.mxu0 %v1013
        %v1188 = vpop.f32.mrf.mxu0
        %v1189 = vadd.f32 0.0, %v1188
        %v1190 = vpop.f32.mrf.mxu0
        %1191 = vmatprep.mubr.f32.mxu0 0.0
        %1192 = vmatmul.mubr.f32.gmra.mxu0 %v1016
        %v1193 = vpop.f32.mrf.mxu0
        %v1194 = vadd.f32 0.0, %v1193
        %v1195 = vpop.f32.mrf.mxu0
        %1196 = vmatprep.mubr.f32.mxu0 0.0
        %1197 = vmatmul.mubr.f32.gmra.mxu0 %v1019
        %v1198 = vpop.f32.mrf.mxu0
        %v1199 = vadd.f32 0.0, %v1198
        %v1200 = vpop.f32.mrf.mxu0
        %1201 = vmatprep.mubr.f32.mxu0 0.0
        %1202 = vmatmul.mubr.f32.gmra.mxu0 %v1022
        %v1203 = vpop.f32.mrf.mxu0
        %v1204 = vadd.f32 0.0, %v1203
        %v1205 = vpop.f32.mrf.mxu0
        %1206 = vmatprep.mubr.f32.mxu0 0.0
        %1207 = vmatmul.mubr.f32.gmra.mxu0 %v1025
        %v1208 = vpop.f32.mrf.mxu0
        %v1209 = vadd.f32 0.0, %v1208
        %v1210 = vpop.f32.mrf.mxu0
        %1211 = vmatprep.mubr.f32.mxu0 0.0
        %1212 = vmatmul.mubr.f32.gmra.mxu0 %v1028
        %v1213 = vpop.f32.mrf.mxu0
        %v1214 = vadd.f32 0.0, %v1213
        %v1215 = vpop.f32.mrf.mxu0
        %1216 = vmatprep.mubr.f32.mxu0 0.0
        %1217 = vmatmul.mubr.f32.gmra.mxu0 %v1031
        %v1218 = vpop.f32.mrf.mxu0
        %v1219 = vadd.f32 0.0, %v1218
        %v1220 = vpop.f32.mrf.mxu0
        %1221 = vmatprep.mubr.f32.mxu0 0.0
        %1222 = vmatmul.mubr.f32.gmra.mxu0 %v1034
        %v1223 = vpop.f32.mrf.mxu0
        %v1224 = vadd.f32 0.0, %v1223
        %v1225 = vpop.f32.mrf.mxu0
        %1226 = vmatprep.mubr.f32.mxu0 0.0
        %1227 = vmatmul.mubr.f32.gmra.mxu0 %v1037
        %v1228 = vpop.f32.mrf.mxu0
        %v1229 = vadd.f32 0.0, %v1228
        %v1230 = vpop.f32.mrf.mxu0
        %1231 = vdwg.mxu0
        %v1232 = vmul.f32 %v1154, 0.17677669
        %v1233 = vmul.f32 %v1159, 0.17677669
        %v1234 = vmul.f32 %v1164, 0.17677669
        %v1235 = vmul.f32 %v1169, 0.17677669
        %v1236 = vmul.f32 %v1174, 0.17677669
        %v1237 = vmul.f32 %v1179, 0.17677669
        %v1238 = vmul.f32 %v1184, 0.17677669
        %v1239 = vmul.f32 %v1189, 0.17677669
        %v1240 = vmul.f32 %v1194, 0.17677669
        %v1241 = vmul.f32 %v1199, 0.17677669
        %v1242 = vmul.f32 %v1204, 0.17677669
        %v1243 = vmul.f32 %v1209, 0.17677669
        %v1244 = vmul.f32 %v1214, 0.17677669
        %v1245 = vmul.f32 %v1219, 0.17677669
        %v1246 = vmul.f32 %v1224, 0.17677669
        %v1247 = vmul.f32 %v1229, 0.17677669
        %v1248 = vsel %vm979, 16843009, 0
        %v1249 = vsel %vm980, 16843009, 0
        %v1250 = vsel %vm981, 16843009, 0
        %v1251 = vsel %vm982, 16843009, 0
        %v1252 = vunpack.c.0.s8 %v1248
        %v1253 = vunpack.c.1.s8 %v1248
        %v1254 = vunpack.c.2.s8 %v1248
        %v1255 = vunpack.c.3.s8 %v1248
        %v1256 = vunpack.c.0.s8 %v1249
        %v1257 = vunpack.c.1.s8 %v1249
        %v1258 = vunpack.c.2.s8 %v1249
        %v1259 = vunpack.c.3.s8 %v1249
        %v1260 = vunpack.c.0.s8 %v1250
        %v1261 = vunpack.c.1.s8 %v1250
        %v1262 = vunpack.c.2.s8 %v1250
        %v1263 = vunpack.c.3.s8 %v1250
        %v1264 = vunpack.c.0.s8 %v1251
        %v1265 = vunpack.c.1.s8 %v1251
        %v1266 = vunpack.c.2.s8 %v1251
        %v1267 = vunpack.c.3.s8 %v1251
        %v1268 = vpack.c.b16 %v1252, %v1252
        %v1269 = vpack.c.b8 %v1268, %v1268
        %v1270 = vpack.c.b16 %v1253, %v1253
        %v1271 = vpack.c.b8 %v1270, %v1270
        %v1272 = vpack.c.b16 %v1254, %v1254
        %v1273 = vpack.c.b8 %v1272, %v1272
        %v1274 = vpack.c.b16 %v1255, %v1255
        %v1275 = vpack.c.b8 %v1274, %v1274
        %v1276 = vpack.c.b16 %v1256, %v1256
        %v1277 = vpack.c.b8 %v1276, %v1276
        %v1278 = vpack.c.b16 %v1257, %v1257
        %v1279 = vpack.c.b8 %v1278, %v1278
        %v1280 = vpack.c.b16 %v1258, %v1258
        %v1281 = vpack.c.b8 %v1280, %v1280
        %v1282 = vpack.c.b16 %v1259, %v1259
        %v1283 = vpack.c.b8 %v1282, %v1282
        %v1284 = vpack.c.b16 %v1260, %v1260
        %v1285 = vpack.c.b8 %v1284, %v1284
        %v1286 = vpack.c.b16 %v1261, %v1261
        %v1287 = vpack.c.b8 %v1286, %v1286
        %v1288 = vpack.c.b16 %v1262, %v1262
        %v1289 = vpack.c.b8 %v1288, %v1288
        %v1290 = vpack.c.b16 %v1263, %v1263
        %v1291 = vpack.c.b8 %v1290, %v1290
        %v1292 = vpack.c.b16 %v1264, %v1264
        %v1293 = vpack.c.b8 %v1292, %v1292
        %v1294 = vpack.c.b16 %v1265, %v1265
        %v1295 = vpack.c.b8 %v1294, %v1294
        %v1296 = vpack.c.b16 %v1266, %v1266
        %v1297 = vpack.c.b8 %v1296, %v1296
        %v1298 = vpack.c.b16 %v1267, %v1267
        %v1299 = vpack.c.b8 %v1298, %v1298
        %vm1300 = vnez %v1269
        %vm1301 = vnez %v1271
        %vm1302 = vnez %v1273
        %vm1303 = vnez %v1275
        %vm1304 = vnez %v1277
        %vm1305 = vnez %v1279
        %vm1306 = vnez %v1281
        %vm1307 = vnez %v1283
        %vm1308 = vnez %v1285
        %vm1309 = vnez %v1287
        %vm1310 = vnez %v1289
        %vm1311 = vnez %v1291
        %vm1312 = vnez %v1293
        %vm1313 = vnez %v1295
        %vm1314 = vnez %v1297
        %vm1315 = vnez %v1299
        %v1316 = vsel %vm1300, 16843009, 0
        %v1317 = vsel %vm1301, 16843009, 0
        %v1318 = vsel %vm1302, 16843009, 0
        %v1319 = vsel %vm1303, 16843009, 0
        %v1320 = vsel %vm1304, 16843009, 0
        %v1321 = vsel %vm1305, 16843009, 0
        %v1322 = vsel %vm1306, 16843009, 0
        %v1323 = vsel %vm1307, 16843009, 0
        %v1324 = vsel %vm1308, 16843009, 0
        %v1325 = vsel %vm1309, 16843009, 0
        %v1326 = vsel %vm1310, 16843009, 0
        %v1327 = vsel %vm1311, 16843009, 0
        %v1328 = vsel %vm1312, 16843009, 0
        %v1329 = vsel %vm1313, 16843009, 0
        %v1330 = vsel %vm1314, 16843009, 0
        %v1331 = vsel %vm1315, 16843009, 0
        %v1332 = vunpack.c.0.s8 %v1316
        %v1333 = vunpack.c.0.s8 %v1317
        %v1334 = vunpack.c.0.s8 %v1318
        %v1335 = vunpack.c.0.s8 %v1319
        %v1336 = vunpack.c.0.s8 %v1320
        %v1337 = vunpack.c.0.s8 %v1321
        %v1338 = vunpack.c.0.s8 %v1322
        %v1339 = vunpack.c.0.s8 %v1323
        %v1340 = vunpack.c.0.s8 %v1324
        %v1341 = vunpack.c.0.s8 %v1325
        %v1342 = vunpack.c.0.s8 %v1326
        %v1343 = vunpack.c.0.s8 %v1327
        %v1344 = vunpack.c.0.s8 %v1328
        %v1345 = vunpack.c.0.s8 %v1329
        %v1346 = vunpack.c.0.s8 %v1330
        %v1347 = vunpack.c.0.s8 %v1331
        %vm1348 = vcmp.ne.s32.totalorder %v1332, 0
        %vm1349 = vcmp.ne.s32.totalorder %v1333, 0
        %vm1350 = vcmp.ne.s32.totalorder %v1334, 0
        %vm1351 = vcmp.ne.s32.totalorder %v1335, 0
        %vm1352 = vcmp.ne.s32.totalorder %v1336, 0
        %vm1353 = vcmp.ne.s32.totalorder %v1337, 0
        %vm1354 = vcmp.ne.s32.totalorder %v1338, 0
        %vm1355 = vcmp.ne.s32.totalorder %v1339, 0
        %vm1356 = vcmp.ne.s32.totalorder %v1340, 0
        %vm1357 = vcmp.ne.s32.totalorder %v1341, 0
        %vm1358 = vcmp.ne.s32.totalorder %v1342, 0
        %vm1359 = vcmp.ne.s32.totalorder %v1343, 0
        %vm1360 = vcmp.ne.s32.totalorder %v1344, 0
        %vm1361 = vcmp.ne.s32.totalorder %v1345, 0
        %vm1362 = vcmp.ne.s32.totalorder %v1346, 0
        %vm1363 = vcmp.ne.s32.totalorder %v1347, 0
        %v1364 = vsel %vm1348, %v1232, -1e+09
        %v1365 = vsel %vm1349, %v1233, -1e+09
        %v1366 = vsel %vm1350, %v1234, -1e+09
        %v1367 = vsel %vm1351, %v1235, -1e+09
        %v1368 = vsel %vm1352, %v1236, -1e+09
        %v1369 = vsel %vm1353, %v1237, -1e+09
        %v1370 = vsel %vm1354, %v1238, -1e+09
        %v1371 = vsel %vm1355, %v1239, -1e+09
        %v1372 = vsel %vm1356, %v1240, -1e+09
        %v1373 = vsel %vm1357, %v1241, -1e+09
        %v1374 = vsel %vm1358, %v1242, -1e+09
        %v1375 = vsel %vm1359, %v1243, -1e+09
        %v1376 = vsel %vm1360, %v1244, -1e+09
        %v1377 = vsel %vm1361, %v1245, -1e+09
        %v1378 = vsel %vm1362, %v1246, -1e+09
        %v1379 = vsel %vm1363, %v1247, -1e+09
        %1380 = vmax.xlane.f32.xlu0 %v1364
        %v1381 = vpop.xlane.xlu0 %1380
        %1382 = vmax.xlane.f32.xlu0 %v1365
        %v1383 = vpop.xlane.xlu0 %1382
        %1384 = vmax.xlane.f32.xlu0 %v1366
        %v1385 = vpop.xlane.xlu0 %1384
        %1386 = vmax.xlane.f32.xlu0 %v1367
        %v1387 = vpop.xlane.xlu0 %1386
        %1388 = vmax.xlane.f32.xlu0 %v1368
        %v1389 = vpop.xlane.xlu0 %1388
        %1390 = vmax.xlane.f32.xlu0 %v1369
        %v1391 = vpop.xlane.xlu0 %1390
        %1392 = vmax.xlane.f32.xlu0 %v1370
        %v1393 = vpop.xlane.xlu0 %1392
        %1394 = vmax.xlane.f32.xlu0 %v1371
        %v1395 = vpop.xlane.xlu0 %1394
        %1396 = vmax.xlane.f32.xlu0 %v1372
        %v1397 = vpop.xlane.xlu0 %1396
        %1398 = vmax.xlane.f32.xlu0 %v1373
        %v1399 = vpop.xlane.xlu0 %1398
        %1400 = vmax.xlane.f32.xlu0 %v1374
        %v1401 = vpop.xlane.xlu0 %1400
        %1402 = vmax.xlane.f32.xlu0 %v1375
        %v1403 = vpop.xlane.xlu0 %1402
        %1404 = vmax.xlane.f32.xlu0 %v1376
        %v1405 = vpop.xlane.xlu0 %1404
        %1406 = vmax.xlane.f32.xlu0 %v1377
        %v1407 = vpop.xlane.xlu0 %1406
        %1408 = vmax.xlane.f32.xlu0 %v1378
        %v1409 = vpop.xlane.xlu0 %1408
        %1410 = vmax.xlane.f32.xlu0 %v1379
        %v1411 = vpop.xlane.xlu0 %1410
        %v1412 = vsub.f32 %v1364, %v1381
        %v1413 = vsub.f32 %v1365, %v1383
        %v1414 = vsub.f32 %v1366, %v1385
        %v1415 = vsub.f32 %v1367, %v1387
        %v1416 = vsub.f32 %v1368, %v1389
        %v1417 = vsub.f32 %v1369, %v1391
        %v1418 = vsub.f32 %v1370, %v1393
        %v1419 = vsub.f32 %v1371, %v1395
        %v1420 = vsub.f32 %v1372, %v1397
        %v1421 = vsub.f32 %v1373, %v1399
        %v1422 = vsub.f32 %v1374, %v1401
        %v1423 = vsub.f32 %v1375, %v1403
        %v1424 = vsub.f32 %v1376, %v1405
        %v1425 = vsub.f32 %v1377, %v1407
        %v1426 = vsub.f32 %v1378, %v1409
        %v1427 = vsub.f32 %v1379, %v1411
        %v1428 = vmul.f32 %v1412, 1.442695
        %v1429 = vpow.pop %v1428
        %v1430 = vmul.f32 %v1413, 1.442695
        %v1431 = vpow.pop %v1430
        %v1432 = vmul.f32 %v1414, 1.442695
        %v1433 = vpow.pop %v1432
        %v1434 = vmul.f32 %v1415, 1.442695
        %v1435 = vpow.pop %v1434
        %v1436 = vmul.f32 %v1416, 1.442695
        %v1437 = vpow.pop %v1436
        %v1438 = vmul.f32 %v1417, 1.442695
        %v1439 = vpow.pop %v1438
        %v1440 = vmul.f32 %v1418, 1.442695
        %v1441 = vpow.pop %v1440
        %v1442 = vmul.f32 %v1419, 1.442695
        %v1443 = vpow.pop %v1442
        %v1444 = vmul.f32 %v1420, 1.442695
        %v1445 = vpow.pop %v1444
        %v1446 = vmul.f32 %v1421, 1.442695
        %v1447 = vpow.pop %v1446
        %v1448 = vmul.f32 %v1422, 1.442695
        %v1449 = vpow.pop %v1448
        %v1450 = vmul.f32 %v1423, 1.442695
        %v1451 = vpow.pop %v1450
        %v1452 = vmul.f32 %v1424, 1.442695
        %v1453 = vpow.pop %v1452
        %v1454 = vmul.f32 %v1425, 1.442695
        %v1455 = vpow.pop %v1454
        %v1456 = vmul.f32 %v1426, 1.442695
        %v1457 = vpow.pop %v1456
        %v1458 = vmul.f32 %v1427, 1.442695
        %v1459 = vpow.pop %v1458
        %1460 = vadd.xlane.f32.xlu0 %v1429
        %v1461 = vpop.xlane.xlu0 %1460
        %1462 = vadd.xlane.f32.xlu0 %v1431
        %v1463 = vpop.xlane.xlu0 %1462
        %1464 = vadd.xlane.f32.xlu0 %v1433
        %v1465 = vpop.xlane.xlu0 %1464
        %1466 = vadd.xlane.f32.xlu0 %v1435
        %v1467 = vpop.xlane.xlu0 %1466
        %1468 = vadd.xlane.f32.xlu0 %v1437
        %v1469 = vpop.xlane.xlu0 %1468
        %1470 = vadd.xlane.f32.xlu0 %v1439
        %v1471 = vpop.xlane.xlu0 %1470
        %1472 = vadd.xlane.f32.xlu0 %v1441
        %v1473 = vpop.xlane.xlu0 %1472
        %1474 = vadd.xlane.f32.xlu0 %v1443
        %v1475 = vpop.xlane.xlu0 %1474
        %1476 = vadd.xlane.f32.xlu0 %v1445
        %v1477 = vpop.xlane.xlu0 %1476
        %1478 = vadd.xlane.f32.xlu0 %v1447
        %v1479 = vpop.xlane.xlu0 %1478
        %1480 = vadd.xlane.f32.xlu0 %v1449
        %v1481 = vpop.xlane.xlu0 %1480
        %1482 = vadd.xlane.f32.xlu0 %v1451
        %v1483 = vpop.xlane.xlu0 %1482
        %1484 = vadd.xlane.f32.xlu0 %v1453
        %v1485 = vpop.xlane.xlu0 %1484
        %1486 = vadd.xlane.f32.xlu0 %v1455
        %v1487 = vpop.xlane.xlu0 %1486
        %1488 = vadd.xlane.f32.xlu0 %v1457
        %v1489 = vpop.xlane.xlu0 %1488
        %1490 = vadd.xlane.f32.xlu0 %v1459
        %v1491 = vpop.xlane.xlu0 %1490
        %v1492 = vrcp.pop %v1461
        %v1493 = vmul.f32 %v1429, %v1492
        %v1494 = vrcp.pop %v1463
        %v1495 = vmul.f32 %v1431, %v1494
        %v1496 = vrcp.pop %v1465
        %v1497 = vmul.f32 %v1433, %v1496
        %v1498 = vrcp.pop %v1467
        %v1499 = vmul.f32 %v1435, %v1498
        %v1500 = vrcp.pop %v1469
        %v1501 = vmul.f32 %v1437, %v1500
        %v1502 = vrcp.pop %v1471
        %v1503 = vmul.f32 %v1439, %v1502
        %v1504 = vrcp.pop %v1473
        %v1505 = vmul.f32 %v1441, %v1504
        %v1506 = vrcp.pop %v1475
        %v1507 = vmul.f32 %v1443, %v1506
        %v1508 = vrcp.pop %v1477
        %v1509 = vmul.f32 %v1445, %v1508
        %v1510 = vrcp.pop %v1479
        %v1511 = vmul.f32 %v1447, %v1510
        %v1512 = vrcp.pop %v1481
        %v1513 = vmul.f32 %v1449, %v1512
        %v1514 = vrcp.pop %v1483
        %v1515 = vmul.f32 %v1451, %v1514
        %v1516 = vrcp.pop %v1485
        %v1517 = vmul.f32 %v1453, %v1516
        %v1518 = vrcp.pop %v1487
        %v1519 = vmul.f32 %v1455, %v1518
        %v1520 = vrcp.pop %v1489
        %v1521 = vmul.f32 %v1457, %v1520
        %v1522 = vrcp.pop %v1491
        %v1523 = vmul.f32 %v1459, %v1522
        %1524 = vmatprep.subr.mxu0 0.0
        %1525 = vmatpush1.msra.mxu0 %v972
        %1526 = vmatprep.subr.mxu0 0.0
        %1527 = vmatpush1.msra.mxu0 %v967
        %1528 = vmatprep.subr.mxu0 0.0
        %1529 = vmatpush1.msra.mxu0 %v962
        %1530 = vmatprep.subr.mxu0 0.0
        %1531 = vmatpush1.msra.mxu0 %v957
        %1532 = vmatprep.subr.mxu0 0.0
        %1533 = vmatpush1.msra.mxu0 %v952
        %1534 = vmatprep.subr.mxu0 0.0
        %1535 = vmatpush1.msra.mxu0 %v947
        %1536 = vmatprep.subr.mxu0 0.0
        %1537 = vmatpush1.msra.mxu0 %v942
        %1538 = vmatprep.subr.mxu0 0.0
        %1539 = vmatpush1.msra.mxu0 %v937
        %1540 = vmatprep.subr.mxu0 0.0
        %1541 = vmatpush1.msra.mxu0 %v932
        %1542 = vmatprep.subr.mxu0 0.0
        %1543 = vmatpush1.msra.mxu0 %v927
        %1544 = vmatprep.subr.mxu0 0.0
        %1545 = vmatpush1.msra.mxu0 %v922
        %1546 = vmatprep.subr.mxu0 0.0
        %1547 = vmatpush1.msra.mxu0 %v917
        %1548 = vmatprep.subr.mxu0 0.0
        %1549 = vmatpush1.msra.mxu0 %v912
        %1550 = vmatprep.subr.mxu0 0.0
        %1551 = vmatpush1.msra.mxu0 %v907
        %1552 = vmatprep.subr.mxu0 0.0
        %1553 = vmatpush1.msra.mxu0 %v902
        %1554 = vmatprep.subr.mxu0 0.0
        %1555 = vmatpush1.msra.mxu0 %v897
        %1556 = vmatprep.subr.mxu0 0.0
        %1557 = vmatpush2.msra.mxu0 0.0
        %1558 = vmatprep.subr.mxu0 0.0
        %1559 = vmatpush2.msra.mxu0 0.0
        %1560 = vmatprep.subr.mxu0 0.0
        %1561 = vmatpush2.msra.mxu0 0.0
        %1562 = vmatprep.subr.mxu0 0.0
        %1563 = vmatpush2.msra.mxu0 0.0
        %1564 = vmatprep.subr.mxu0 0.0
        %1565 = vmatpush2.msra.mxu0 0.0
        %1566 = vmatprep.subr.mxu0 0.0
        %1567 = vmatpush2.msra.mxu0 0.0
        %1568 = vmatprep.subr.mxu0 0.0
        %1569 = vmatpush2.msra.mxu0 0.0
        %1570 = vmatprep.subr.mxu0 0.0
        %1571 = vmatpush2.msra.mxu0 0.0
        %1572 = vmatprep.subr.mxu0 0.0
        %1573 = vmatpush2.msra.mxu0 0.0
        %1574 = vmatprep.subr.mxu0 0.0
        %1575 = vmatpush2.msra.mxu0 0.0
        %1576 = vmatprep.subr.mxu0 0.0
        %1577 = vmatpush2.msra.mxu0 0.0
        %1578 = vmatprep.subr.mxu0 0.0
        %1579 = vmatpush2.msra.mxu0 0.0
        %1580 = vmatprep.subr.mxu0 0.0
        %1581 = vmatpush2.msra.mxu0 0.0
        %1582 = vmatprep.subr.mxu0 0.0
        %1583 = vmatpush2.msra.mxu0 0.0
        %1584 = vmatprep.subr.mxu0 0.0
        %1585 = vmatpush2.msra.mxu0 0.0
        %1586 = vmatprep.subr.mxu0 0.0
        %1587 = vmatpush2.msra.mxu0 0.0
        %1588 = vmatprep.mubr.f32.mxu0 0.0
        %1589 = vmatmul.mubr.f32.gmra.mxu0 %v1493
        %v1590 = vpop.f32.mrf.mxu0
        %v1591 = vadd.f32 0.0, %v1590
        %v1592 = vpop.f32.mrf.mxu0
        %1593 = vmatprep.mubr.f32.mxu0 0.0
        %1594 = vmatmul.mubr.f32.gmra.mxu0 %v1495
        %v1595 = vpop.f32.mrf.mxu0
        %v1596 = vadd.f32 0.0, %v1595
        %v1597 = vpop.f32.mrf.mxu0
        %1598 = vmatprep.mubr.f32.mxu0 0.0
        %1599 = vmatmul.mubr.f32.gmra.mxu0 %v1497
        %v1600 = vpop.f32.mrf.mxu0
        %v1601 = vadd.f32 0.0, %v1600
        %v1602 = vpop.f32.mrf.mxu0
        %1603 = vmatprep.mubr.f32.mxu0 0.0
        %1604 = vmatmul.mubr.f32.gmra.mxu0 %v1499
        %v1605 = vpop.f32.mrf.mxu0
        %v1606 = vadd.f32 0.0, %v1605
        %v1607 = vpop.f32.mrf.mxu0
        %1608 = vmatprep.mubr.f32.mxu0 0.0
        %1609 = vmatmul.mubr.f32.gmra.mxu0 %v1501
        %v1610 = vpop.f32.mrf.mxu0
        %v1611 = vadd.f32 0.0, %v1610
        %v1612 = vpop.f32.mrf.mxu0
        %1613 = vmatprep.mubr.f32.mxu0 0.0
        %1614 = vmatmul.mubr.f32.gmra.mxu0 %v1503
        %v1615 = vpop.f32.mrf.mxu0
        %v1616 = vadd.f32 0.0, %v1615
        %v1617 = vpop.f32.mrf.mxu0
        %1618 = vmatprep.mubr.f32.mxu0 0.0
        %1619 = vmatmul.mubr.f32.gmra.mxu0 %v1505
        %v1620 = vpop.f32.mrf.mxu0
        %v1621 = vadd.f32 0.0, %v1620
        %v1622 = vpop.f32.mrf.mxu0
        %1623 = vmatprep.mubr.f32.mxu0 0.0
        %1624 = vmatmul.mubr.f32.gmra.mxu0 %v1507
        %v1625 = vpop.f32.mrf.mxu0
        %v1626 = vadd.f32 0.0, %v1625
        %v1627 = vpop.f32.mrf.mxu0
        %1628 = vmatprep.mubr.f32.mxu0 0.0
        %1629 = vmatmul.mubr.f32.gmra.mxu0 %v1509
        %v1630 = vpop.f32.mrf.mxu0
        %v1631 = vadd.f32 0.0, %v1630
        %v1632 = vpop.f32.mrf.mxu0
        %1633 = vmatprep.mubr.f32.mxu0 0.0
        %1634 = vmatmul.mubr.f32.gmra.mxu0 %v1511
        %v1635 = vpop.f32.mrf.mxu0
        %v1636 = vadd.f32 0.0, %v1635
        %v1637 = vpop.f32.mrf.mxu0
        %1638 = vmatprep.mubr.f32.mxu0 0.0
        %1639 = vmatmul.mubr.f32.gmra.mxu0 %v1513
        %v1640 = vpop.f32.mrf.mxu0
        %v1641 = vadd.f32 0.0, %v1640
        %v1642 = vpop.f32.mrf.mxu0
        %1643 = vmatprep.mubr.f32.mxu0 0.0
        %1644 = vmatmul.mubr.f32.gmra.mxu0 %v1515
        %v1645 = vpop.f32.mrf.mxu0
        %v1646 = vadd.f32 0.0, %v1645
        %v1647 = vpop.f32.mrf.mxu0
        %1648 = vmatprep.mubr.f32.mxu0 0.0
        %1649 = vmatmul.mubr.f32.gmra.mxu0 %v1517
        %v1650 = vpop.f32.mrf.mxu0
        %v1651 = vadd.f32 0.0, %v1650
        %v1652 = vpop.f32.mrf.mxu0
        %1653 = vmatprep.mubr.f32.mxu0 0.0
        %1654 = vmatmul.mubr.f32.gmra.mxu0 %v1519
        %v1655 = vpop.f32.mrf.mxu0
        %v1656 = vadd.f32 0.0, %v1655
        %v1657 = vpop.f32.mrf.mxu0
        %1658 = vmatprep.mubr.f32.mxu0 0.0
        %1659 = vmatmul.mubr.f32.gmra.mxu0 %v1521
        %v1660 = vpop.f32.mrf.mxu0
        %v1661 = vadd.f32 0.0, %v1660
        %v1662 = vpop.f32.mrf.mxu0
        %1663 = vmatprep.mubr.f32.mxu0 0.0
        %1664 = vmatmul.mubr.f32.gmra.mxu0 %v1523
        %v1665 = vpop.f32.mrf.mxu0
        %v1666 = vadd.f32 0.0, %v1665
        %v1667 = vpop.f32.mrf.mxu0
        %1668 = vdwg.mxu0
        %v1669 = vld [vmem:[#allocation8] sm:$0xff]
        %v1670 = vld [vmem:[#allocation8 + $0x8] sm:$0xff]
        %v1671 = vld [vmem:[#allocation8 + $0x10] sm:$0xff]
        %v1672 = vld [vmem:[#allocation8 + $0x18] sm:$0xff]
        %v1674 = vsel %vm990, %v1591, 0
        %v1677 = vsel %vm990, %v1596, 0
        %v1680 = vsel %vm990, %v1601, 0
        %v1683 = vsel %vm990, %v1606, 0
        %v1686 = vsel %vm990, %v1611, 0
        %v1689 = vsel %vm990, %v1616, 0
        %v1692 = vsel %vm990, %v1621, 0
        %v1695 = vsel %vm990, %v1626, 0
        %v1698 = vsel %vm990, %v1631, 0
        %v1701 = vsel %vm990, %v1636, 0
        %v1704 = vsel %vm990, %v1641, 0
        %v1707 = vsel %vm990, %v1646, 0
        %v1710 = vsel %vm990, %v1651, 0
        %v1713 = vsel %vm990, %v1656, 0
        %v1716 = vsel %vm990, %v1661, 0
        %v1719 = vsel %vm990, %v1666, 0
        %1721 = vmatprep.subr.mxu0 0.0
        %1722 = vmatpush1.msra.mxu0 0.0
        %1723 = vmatprep.subr.mxu0 0.0
        %1724 = vmatpush1.msra.mxu0 0.0
        %1725 = vmatprep.subr.mxu0 0.0
        %1726 = vmatpush1.msra.mxu0 0.0
        %1727 = vmatprep.subr.mxu0 0.0
        %1728 = vmatpush1.msra.mxu0 0.0
        %1729 = vmatprep.subr.mxu0 0.0
        %1730 = vmatpush1.msra.mxu0 0.0
        %1731 = vmatprep.subr.mxu0 0.0
        %1732 = vmatpush1.msra.mxu0 0.0
        %1733 = vmatprep.subr.mxu0 0.0
        %1734 = vmatpush1.msra.mxu0 0.0
        %1735 = vmatprep.subr.mxu0 0.0
        %1736 = vmatpush1.msra.mxu0 0.0
        %1737 = vmatprep.subr.mxu0 0.0
        %1738 = vmatpush1.msra.mxu0 0.0
        %1739 = vmatprep.subr.mxu0 0.0
        %1740 = vmatpush1.msra.mxu0 0.0
        %1741 = vmatprep.subr.mxu0 0.0
        %1742 = vmatpush1.msra.mxu0 0.0
        %1743 = vmatprep.subr.mxu0 0.0
        %1744 = vmatpush1.msra.mxu0 0.0
        %1745 = vmatprep.subr.mxu0 0.0
        %1746 = vmatpush1.msra.mxu0 %v1672
        %1747 = vmatprep.subr.mxu0 0.0
        %1748 = vmatpush1.msra.mxu0 %v1671
        %1749 = vmatprep.subr.mxu0 0.0
        %1750 = vmatpush1.msra.mxu0 %v1670
        %1751 = vmatprep.subr.mxu0 0.0
        %1752 = vmatpush1.msra.mxu0 %v1669
        %1753 = vmatprep.subr.mxu0 0.0
        %1754 = vmatpush2.msra.mxu0 0.0
        %1755 = vmatprep.subr.mxu0 0.0
        %1756 = vmatpush2.msra.mxu0 0.0
        %1757 = vmatprep.subr.mxu0 0.0
        %1758 = vmatpush2.msra.mxu0 0.0
        %1759 = vmatprep.subr.mxu0 0.0
        %1760 = vmatpush2.msra.mxu0 0.0
        %1761 = vmatprep.subr.mxu0 0.0
        %1762 = vmatpush2.msra.mxu0 0.0
        %1763 = vmatprep.subr.mxu0 0.0
        %1764 = vmatpush2.msra.mxu0 0.0
        %1765 = vmatprep.subr.mxu0 0.0
        %1766 = vmatpush2.msra.mxu0 0.0
        %1767 = vmatprep.subr.mxu0 0.0
        %1768 = vmatpush2.msra.mxu0 0.0
        %1769 = vmatprep.subr.mxu0 0.0
        %1770 = vmatpush2.msra.mxu0 0.0
        %1771 = vmatprep.subr.mxu0 0.0
        %1772 = vmatpush2.msra.mxu0 0.0
        %1773 = vmatprep.subr.mxu0 0.0
        %1774 = vmatpush2.msra.mxu0 0.0
        %1775 = vmatprep.subr.mxu0 0.0
        %1776 = vmatpush2.msra.mxu0 0.0
        %1777 = vmatprep.subr.mxu0 0.0
        %1778 = vmatpush2.msra.mxu0 0.0
        %1779 = vmatprep.subr.mxu0 0.0
        %1780 = vmatpush2.msra.mxu0 0.0
        %1781 = vmatprep.subr.mxu0 0.0
        %1782 = vmatpush2.msra.mxu0 0.0
        %1783 = vmatprep.subr.mxu0 0.0
        %1784 = vmatpush2.msra.mxu0 0.0
        %1785 = vmatprep.mubr.f32.mxu0 0.0
        %1786 = vmatmul.mubr.f32.gmra.mxu0 %v1674
        %v1787 = vpop.f32.mrf.mxu0
        %v1788 = vadd.f32 0.0, %v1787
        %v1789 = vpop.f32.mrf.mxu0
        %1790 = vmatprep.mubr.f32.mxu0 0.0
        %1791 = vmatmul.mubr.f32.gmra.mxu0 %v1677
        %v1792 = vpop.f32.mrf.mxu0
        %v1793 = vadd.f32 0.0, %v1792
        %v1794 = vpop.f32.mrf.mxu0
        %1795 = vmatprep.mubr.f32.mxu0 0.0
        %1796 = vmatmul.mubr.f32.gmra.mxu0 %v1680
        %v1797 = vpop.f32.mrf.mxu0
        %v1798 = vadd.f32 0.0, %v1797
        %v1799 = vpop.f32.mrf.mxu0
        %1800 = vmatprep.mubr.f32.mxu0 0.0
        %1801 = vmatmul.mubr.f32.gmra.mxu0 %v1683
        %v1802 = vpop.f32.mrf.mxu0
        %v1803 = vadd.f32 0.0, %v1802
        %v1804 = vpop.f32.mrf.mxu0
        %1805 = vmatprep.mubr.f32.mxu0 0.0
        %1806 = vmatmul.mubr.f32.gmra.mxu0 %v1686
        %v1807 = vpop.f32.mrf.mxu0
        %v1808 = vadd.f32 0.0, %v1807
        %v1809 = vpop.f32.mrf.mxu0
        %1810 = vmatprep.mubr.f32.mxu0 0.0
        %1811 = vmatmul.mubr.f32.gmra.mxu0 %v1689
        %v1812 = vpop.f32.mrf.mxu0
        %v1813 = vadd.f32 0.0, %v1812
        %v1814 = vpop.f32.mrf.mxu0
        %1815 = vmatprep.mubr.f32.mxu0 0.0
        %1816 = vmatmul.mubr.f32.gmra.mxu0 %v1692
        %v1817 = vpop.f32.mrf.mxu0
        %v1818 = vadd.f32 0.0, %v1817
        %v1819 = vpop.f32.mrf.mxu0
        %1820 = vmatprep.mubr.f32.mxu0 0.0
        %1821 = vmatmul.mubr.f32.gmra.mxu0 %v1695
        %v1822 = vpop.f32.mrf.mxu0
        %v1823 = vadd.f32 0.0, %v1822
        %v1824 = vpop.f32.mrf.mxu0
        %1825 = vmatprep.mubr.f32.mxu0 0.0
        %1826 = vmatmul.mubr.f32.gmra.mxu0 %v1698
        %v1827 = vpop.f32.mrf.mxu0
        %v1828 = vadd.f32 0.0, %v1827
        %v1829 = vpop.f32.mrf.mxu0
        %1830 = vmatprep.mubr.f32.mxu0 0.0
        %1831 = vmatmul.mubr.f32.gmra.mxu0 %v1701
        %v1832 = vpop.f32.mrf.mxu0
        %v1833 = vadd.f32 0.0, %v1832
        %v1834 = vpop.f32.mrf.mxu0
        %1835 = vmatprep.mubr.f32.mxu0 0.0
        %1836 = vmatmul.mubr.f32.gmra.mxu0 %v1704
        %v1837 = vpop.f32.mrf.mxu0
        %v1838 = vadd.f32 0.0, %v1837
        %v1839 = vpop.f32.mrf.mxu0
        %1840 = vmatprep.mubr.f32.mxu0 0.0
        %1841 = vmatmul.mubr.f32.gmra.mxu0 %v1707
        %v1842 = vpop.f32.mrf.mxu0
        %v1843 = vadd.f32 0.0, %v1842
        %v1844 = vpop.f32.mrf.mxu0
        %1845 = vmatprep.mubr.f32.mxu0 0.0
        %1846 = vmatmul.mubr.f32.gmra.mxu0 %v1710
        %v1847 = vpop.f32.mrf.mxu0
        %v1848 = vadd.f32 0.0, %v1847
        %v1849 = vpop.f32.mrf.mxu0
        %1850 = vmatprep.mubr.f32.mxu0 0.0
        %1851 = vmatmul.mubr.f32.gmra.mxu0 %v1713
        %v1852 = vpop.f32.mrf.mxu0
        %v1853 = vadd.f32 0.0, %v1852
        %v1854 = vpop.f32.mrf.mxu0
        %1855 = vmatprep.mubr.f32.mxu0 0.0
        %1856 = vmatmul.mubr.f32.gmra.mxu0 %v1716
        %v1857 = vpop.f32.mrf.mxu0
        %v1858 = vadd.f32 0.0, %v1857
        %v1859 = vpop.f32.mrf.mxu0
        %1860 = vmatprep.mubr.f32.mxu0 0.0
        %1861 = vmatmul.mubr.f32.gmra.mxu0 %v1719
        %v1862 = vpop.f32.mrf.mxu0
        %v1863 = vadd.f32 0.0, %v1862
        %v1864 = vpop.f32.mrf.mxu0
        %1865 = vdwg.mxu0
        %v1866 = vadd.f32 %v988, %v1788
        %v1867 = vadd.f32 %v988, %v1793
        %v1868 = vadd.f32 %v988, %v1798
        %v1869 = vadd.f32 %v988, %v1803
        %v1870 = vadd.f32 %v988, %v1808
        %v1871 = vadd.f32 %v988, %v1813
        %v1872 = vadd.f32 %v988, %v1818
        %v1873 = vadd.f32 %v988, %v1823
        %v1874 = vadd.f32 %v988, %v1828
        %v1875 = vadd.f32 %v988, %v1833
        %v1876 = vadd.f32 %v988, %v1838
        %v1877 = vadd.f32 %v988, %v1843
        %v1878 = vadd.f32 %v988, %v1848
        %v1879 = vadd.f32 %v988, %v1853
        %v1880 = vadd.f32 %v988, %v1858
        %v1881 = vadd.f32 %v988, %v1863
        %1882 = vrot.lane.b32.xlu0 %v736, 96
        %v1883 = vpop.permute.xlu0 %1882
        %1884 = vrot.lane.b32.xlu0 %v742, 96
        %v1885 = vpop.permute.xlu0 %1884
        %1886 = vrot.lane.b32.xlu0 %v748, 96
        %v1887 = vpop.permute.xlu0 %1886
        %1888 = vrot.lane.b32.xlu0 %v754, 96
        %v1889 = vpop.permute.xlu0 %1888
        %1890 = vrot.lane.b32.xlu0 %v760, 96
        %v1891 = vpop.permute.xlu0 %1890
        %1892 = vrot.lane.b32.xlu0 %v766, 96
        %v1893 = vpop.permute.xlu0 %1892
        %1894 = vrot.lane.b32.xlu0 %v772, 96
        %v1895 = vpop.permute.xlu0 %1894
        %1896 = vrot.lane.b32.xlu0 %v778, 96
        %v1897 = vpop.permute.xlu0 %1896
        %1898 = vrot.lane.b32.xlu0 %v784, 96
        %v1899 = vpop.permute.xlu0 %1898
        %1900 = vrot.lane.b32.xlu0 %v790, 96
        %v1901 = vpop.permute.xlu0 %1900
        %1902 = vrot.lane.b32.xlu0 %v796, 96
        %v1903 = vpop.permute.xlu0 %1902
        %1904 = vrot.lane.b32.xlu0 %v802, 96
        %v1905 = vpop.permute.xlu0 %1904
        %1906 = vrot.lane.b32.xlu0 %v808, 96
        %v1907 = vpop.permute.xlu0 %1906
        %1908 = vrot.lane.b32.xlu0 %v814, 96
        %v1909 = vpop.permute.xlu0 %1908
        %1910 = vrot.lane.b32.xlu0 %v820, 96
        %v1911 = vpop.permute.xlu0 %1910
        %1912 = vrot.lane.b32.xlu0 %v826, 96
        %v1913 = vpop.permute.xlu0 %1912
        %1914 = vrot.lane.b32.xlu0 %v738, 96
        %v1915 = vpop.permute.xlu0 %1914
        %1916 = vrot.lane.b32.xlu0 %v744, 96
        %v1917 = vpop.permute.xlu0 %1916
        %1918 = vrot.lane.b32.xlu0 %v750, 96
        %v1919 = vpop.permute.xlu0 %1918
        %1920 = vrot.lane.b32.xlu0 %v756, 96
        %v1921 = vpop.permute.xlu0 %1920
        %1922 = vrot.lane.b32.xlu0 %v762, 96
        %v1923 = vpop.permute.xlu0 %1922
        %1924 = vrot.lane.b32.xlu0 %v768, 96
        %v1925 = vpop.permute.xlu0 %1924
        %1926 = vrot.lane.b32.xlu0 %v774, 96
        %v1927 = vpop.permute.xlu0 %1926
        %1928 = vrot.lane.b32.xlu0 %v780, 96
        %v1929 = vpop.permute.xlu0 %1928
        %1930 = vrot.lane.b32.xlu0 %v786, 96
        %v1931 = vpop.permute.xlu0 %1930
        %1932 = vrot.lane.b32.xlu0 %v792, 96
        %v1933 = vpop.permute.xlu0 %1932
        %1934 = vrot.lane.b32.xlu0 %v798, 96
        %v1935 = vpop.permute.xlu0 %1934
        %1936 = vrot.lane.b32.xlu0 %v804, 96
        %v1937 = vpop.permute.xlu0 %1936
        %1938 = vrot.lane.b32.xlu0 %v810, 96
        %v1939 = vpop.permute.xlu0 %1938
        %1940 = vrot.lane.b32.xlu0 %v816, 96
        %v1941 = vpop.permute.xlu0 %1940
        %1942 = vrot.lane.b32.xlu0 %v822, 96
        %v1943 = vpop.permute.xlu0 %1942
        %1944 = vrot.lane.b32.xlu0 %v828, 96
        %v1945 = vpop.permute.xlu0 %1944
        %v1946 = vsel %vm990, %v1883, 0
        %v1948 = vsel %vm990, %v1885, 0
        %v1950 = vsel %vm990, %v1887, 0
        %v1952 = vsel %vm990, %v1889, 0
        %v1954 = vsel %vm990, %v1891, 0
        %v1956 = vsel %vm990, %v1893, 0
        %v1958 = vsel %vm990, %v1895, 0
        %v1960 = vsel %vm990, %v1897, 0
        %v1962 = vsel %vm990, %v1899, 0
        %v1964 = vsel %vm990, %v1901, 0
        %v1966 = vsel %vm990, %v1903, 0
        %v1968 = vsel %vm990, %v1905, 0
        %v1970 = vsel %vm990, %v1907, 0
        %v1972 = vsel %vm990, %v1909, 0
        %v1974 = vsel %vm990, %v1911, 0
        %v1976 = vsel %vm990, %v1913, 0
        %v1978 = vsel %vm990, %v1915, 0
        %v1980 = vsel %vm990, %v1917, 0
        %v1982 = vsel %vm990, %v1919, 0
        %v1984 = vsel %vm990, %v1921, 0
        %v1986 = vsel %vm990, %v1923, 0
        %v1988 = vsel %vm990, %v1925, 0
        %v1990 = vsel %vm990, %v1927, 0
        %v1992 = vsel %vm990, %v1929, 0
        %v1994 = vsel %vm990, %v1931, 0
        %v1996 = vsel %vm990, %v1933, 0
        %v1998 = vsel %vm990, %v1935, 0
        %v2000 = vsel %vm990, %v1937, 0
        %v2002 = vsel %vm990, %v1939, 0
        %v2004 = vsel %vm990, %v1941, 0
        %v2006 = vsel %vm990, %v1943, 0
        %v2008 = vsel %vm990, %v1945, 0
        %2010 = vmatprep.subr.mxu0 0.0
        %2011 = vmatpush1.xpose.msra.mxu0 %v2008
        %2012 = vmatprep.subr.mxu0 0.0
        %2013 = vmatpush1.xpose.msra.mxu0 %v2006
        %2014 = vmatprep.subr.mxu0 0.0
        %2015 = vmatpush1.xpose.msra.mxu0 %v2004
        %2016 = vmatprep.subr.mxu0 0.0
        %2017 = vmatpush1.xpose.msra.mxu0 %v2002
        %2018 = vmatprep.subr.mxu0 0.0
        %2019 = vmatpush1.xpose.msra.mxu0 %v2000
        %2020 = vmatprep.subr.mxu0 0.0
        %2021 = vmatpush1.xpose.msra.mxu0 %v1998
        %2022 = vmatprep.subr.mxu0 0.0
        %2023 = vmatpush1.xpose.msra.mxu0 %v1996
        %2024 = vmatprep.subr.mxu0 0.0
        %2025 = vmatpush1.xpose.msra.mxu0 %v1994
        %2026 = vmatprep.subr.mxu0 0.0
        %2027 = vmatpush1.xpose.msra.mxu0 %v1992
        %2028 = vmatprep.subr.mxu0 0.0
        %2029 = vmatpush1.xpose.msra.mxu0 %v1990
        %2030 = vmatprep.subr.mxu0 0.0
        %2031 = vmatpush1.xpose.msra.mxu0 %v1988
        %2032 = vmatprep.subr.mxu0 0.0
        %2033 = vmatpush1.xpose.msra.mxu0 %v1986
        %2034 = vmatprep.subr.mxu0 0.0
        %2035 = vmatpush1.xpose.msra.mxu0 %v1984
        %2036 = vmatprep.subr.mxu0 0.0
        %2037 = vmatpush1.xpose.msra.mxu0 %v1982
        %2038 = vmatprep.subr.mxu0 0.0
        %2039 = vmatpush1.xpose.msra.mxu0 %v1980
        %2040 = vmatprep.subr.mxu0 0.0
        %2041 = vmatpush1.xpose.msra.mxu0 %v1978
        %2042 = vmatprep.subr.mxu0 0.0
        %2043 = vmatpush2.xpose.msra.mxu0 0.0
        %2044 = vmatprep.subr.mxu0 0.0
        %2045 = vmatpush2.xpose.msra.mxu0 0.0
        %2046 = vmatprep.subr.mxu0 0.0
        %2047 = vmatpush2.xpose.msra.mxu0 0.0
        %2048 = vmatprep.subr.mxu0 0.0
        %2049 = vmatpush2.xpose.msra.mxu0 0.0
        %2050 = vmatprep.subr.mxu0 0.0
        %2051 = vmatpush2.xpose.msra.mxu0 0.0
        %2052 = vmatprep.subr.mxu0 0.0
        %2053 = vmatpush2.xpose.msra.mxu0 0.0
        %2054 = vmatprep.subr.mxu0 0.0
        %2055 = vmatpush2.xpose.msra.mxu0 0.0
        %2056 = vmatprep.subr.mxu0 0.0
        %2057 = vmatpush2.xpose.msra.mxu0 0.0
        %2058 = vmatprep.subr.mxu0 0.0
        %2059 = vmatpush2.xpose.msra.mxu0 0.0
        %2060 = vmatprep.subr.mxu0 0.0
        %2061 = vmatpush2.xpose.msra.mxu0 0.0
        %2062 = vmatprep.subr.mxu0 0.0
        %2063 = vmatpush2.xpose.msra.mxu0 0.0
        %2064 = vmatprep.subr.mxu0 0.0
        %2065 = vmatpush2.xpose.msra.mxu0 0.0
        %2066 = vmatprep.subr.mxu0 0.0
        %2067 = vmatpush2.xpose.msra.mxu0 0.0
        %2068 = vmatprep.subr.mxu0 0.0
        %2069 = vmatpush2.xpose.msra.mxu0 0.0
        %2070 = vmatprep.subr.mxu0 0.0
        %2071 = vmatpush2.xpose.msra.mxu0 0.0
        %2072 = vmatprep.subr.mxu0 0.0
        %2073 = vmatpush2.xpose.msra.mxu0 0.0
        %2074 = vmatprep.mubr.f32.mxu0 0.0
        %2075 = vmatmul.mubr.f32.gmra.mxu0 %v1946
        %v2076 = vpop.f32.mrf.mxu0
        %v2077 = vadd.f32 0.0, %v2076
        %v2078 = vpop.f32.mrf.mxu0
        %2079 = vmatprep.mubr.f32.mxu0 0.0
        %2080 = vmatmul.mubr.f32.gmra.mxu0 %v1948
        %v2081 = vpop.f32.mrf.mxu0
        %v2082 = vadd.f32 0.0, %v2081
        %v2083 = vpop.f32.mrf.mxu0
        %2084 = vmatprep.mubr.f32.mxu0 0.0
        %2085 = vmatmul.mubr.f32.gmra.mxu0 %v1950
        %v2086 = vpop.f32.mrf.mxu0
        %v2087 = vadd.f32 0.0, %v2086
        %v2088 = vpop.f32.mrf.mxu0
        %2089 = vmatprep.mubr.f32.mxu0 0.0
        %2090 = vmatmul.mubr.f32.gmra.mxu0 %v1952
        %v2091 = vpop.f32.mrf.mxu0
        %v2092 = vadd.f32 0.0, %v2091
        %v2093 = vpop.f32.mrf.mxu0
        %2094 = vmatprep.mubr.f32.mxu0 0.0
        %2095 = vmatmul.mubr.f32.gmra.mxu0 %v1954
        %v2096 = vpop.f32.mrf.mxu0
        %v2097 = vadd.f32 0.0, %v2096
        %v2098 = vpop.f32.mrf.mxu0
        %2099 = vmatprep.mubr.f32.mxu0 0.0
        %2100 = vmatmul.mubr.f32.gmra.mxu0 %v1956
        %v2101 = vpop.f32.mrf.mxu0
        %v2102 = vadd.f32 0.0, %v2101
        %v2103 = vpop.f32.mrf.mxu0
        %2104 = vmatprep.mubr.f32.mxu0 0.0
        %2105 = vmatmul.mubr.f32.gmra.mxu0 %v1958
        %v2106 = vpop.f32.mrf.mxu0
        %v2107 = vadd.f32 0.0, %v2106
        %v2108 = vpop.f32.mrf.mxu0
        %2109 = vmatprep.mubr.f32.mxu0 0.0
        %2110 = vmatmul.mubr.f32.gmra.mxu0 %v1960
        %v2111 = vpop.f32.mrf.mxu0
        %v2112 = vadd.f32 0.0, %v2111
        %v2113 = vpop.f32.mrf.mxu0
        %2114 = vmatprep.mubr.f32.mxu0 0.0
        %2115 = vmatmul.mubr.f32.gmra.mxu0 %v1962
        %v2116 = vpop.f32.mrf.mxu0
        %v2117 = vadd.f32 0.0, %v2116
        %v2118 = vpop.f32.mrf.mxu0
        %2119 = vmatprep.mubr.f32.mxu0 0.0
        %2120 = vmatmul.mubr.f32.gmra.mxu0 %v1964
        %v2121 = vpop.f32.mrf.mxu0
        %v2122 = vadd.f32 0.0, %v2121
        %v2123 = vpop.f32.mrf.mxu0
        %2124 = vmatprep.mubr.f32.mxu0 0.0
        %2125 = vmatmul.mubr.f32.gmra.mxu0 %v1966
        %v2126 = vpop.f32.mrf.mxu0
        %v2127 = vadd.f32 0.0, %v2126
        %v2128 = vpop.f32.mrf.mxu0
        %2129 = vmatprep.mubr.f32.mxu0 0.0
        %2130 = vmatmul.mubr.f32.gmra.mxu0 %v1968
        %v2131 = vpop.f32.mrf.mxu0
        %v2132 = vadd.f32 0.0, %v2131
        %v2133 = vpop.f32.mrf.mxu0
        %2134 = vmatprep.mubr.f32.mxu0 0.0
        %2135 = vmatmul.mubr.f32.gmra.mxu0 %v1970
        %v2136 = vpop.f32.mrf.mxu0
        %v2137 = vadd.f32 0.0, %v2136
        %v2138 = vpop.f32.mrf.mxu0
        %2139 = vmatprep.mubr.f32.mxu0 0.0
        %2140 = vmatmul.mubr.f32.gmra.mxu0 %v1972
        %v2141 = vpop.f32.mrf.mxu0
        %v2142 = vadd.f32 0.0, %v2141
        %v2143 = vpop.f32.mrf.mxu0
        %2144 = vmatprep.mubr.f32.mxu0 0.0
        %2145 = vmatmul.mubr.f32.gmra.mxu0 %v1974
        %v2146 = vpop.f32.mrf.mxu0
        %v2147 = vadd.f32 0.0, %v2146
        %v2148 = vpop.f32.mrf.mxu0
        %2149 = vmatprep.mubr.f32.mxu0 0.0
        %2150 = vmatmul.mubr.f32.gmra.mxu0 %v1976
        %v2151 = vpop.f32.mrf.mxu0
        %v2152 = vadd.f32 0.0, %v2151
        %v2153 = vpop.f32.mrf.mxu0
        %2154 = vdwg.mxu0
        %v2155 = vmul.f32 %v2077, 0.17677669
        %v2156 = vmul.f32 %v2082, 0.17677669
        %v2157 = vmul.f32 %v2087, 0.17677669
        %v2158 = vmul.f32 %v2092, 0.17677669
        %v2159 = vmul.f32 %v2097, 0.17677669
        %v2160 = vmul.f32 %v2102, 0.17677669
        %v2161 = vmul.f32 %v2107, 0.17677669
        %v2162 = vmul.f32 %v2112, 0.17677669
        %v2163 = vmul.f32 %v2117, 0.17677669
        %v2164 = vmul.f32 %v2122, 0.17677669
        %v2165 = vmul.f32 %v2127, 0.17677669
        %v2166 = vmul.f32 %v2132, 0.17677669
        %v2167 = vmul.f32 %v2137, 0.17677669
        %v2168 = vmul.f32 %v2142, 0.17677669
        %v2169 = vmul.f32 %v2147, 0.17677669
        %v2170 = vmul.f32 %v2152, 0.17677669
        %v2171 = vsel %vm1348, %v2155, -1e+09
        %v2172 = vsel %vm1349, %v2156, -1e+09
        %v2173 = vsel %vm1350, %v2157, -1e+09
        %v2174 = vsel %vm1351, %v2158, -1e+09
        %v2175 = vsel %vm1352, %v2159, -1e+09
        %v2176 = vsel %vm1353, %v2160, -1e+09
        %v2177 = vsel %vm1354, %v2161, -1e+09
        %v2178 = vsel %vm1355, %v2162, -1e+09
        %v2179 = vsel %vm1356, %v2163, -1e+09
        %v2180 = vsel %vm1357, %v2164, -1e+09
        %v2181 = vsel %vm1358, %v2165, -1e+09
        %v2182 = vsel %vm1359, %v2166, -1e+09
        %v2183 = vsel %vm1360, %v2167, -1e+09
        %v2184 = vsel %vm1361, %v2168, -1e+09
        %v2185 = vsel %vm1362, %v2169, -1e+09
        %v2186 = vsel %vm1363, %v2170, -1e+09
        %2187 = vmax.xlane.f32.xlu0 %v2171
        %v2188 = vpop.xlane.xlu0 %2187
        %2189 = vmax.xlane.f32.xlu0 %v2172
        %v2190 = vpop.xlane.xlu0 %2189
        %2191 = vmax.xlane.f32.xlu0 %v2173
        %v2192 = vpop.xlane.xlu0 %2191
        %2193 = vmax.xlane.f32.xlu0 %v2174
        %v2194 = vpop.xlane.xlu0 %2193
        %2195 = vmax.xlane.f32.xlu0 %v2175
        %v2196 = vpop.xlane.xlu0 %2195
        %2197 = vmax.xlane.f32.xlu0 %v2176
        %v2198 = vpop.xlane.xlu0 %2197
        %2199 = vmax.xlane.f32.xlu0 %v2177
        %v2200 = vpop.xlane.xlu0 %2199
        %2201 = vmax.xlane.f32.xlu0 %v2178
        %v2202 = vpop.xlane.xlu0 %2201
        %2203 = vmax.xlane.f32.xlu0 %v2179
        %v2204 = vpop.xlane.xlu0 %2203
        %2205 = vmax.xlane.f32.xlu0 %v2180
        %v2206 = vpop.xlane.xlu0 %2205
        %2207 = vmax.xlane.f32.xlu0 %v2181
        %v2208 = vpop.xlane.xlu0 %2207
        %2209 = vmax.xlane.f32.xlu0 %v2182
        %v2210 = vpop.xlane.xlu0 %2209
        %2211 = vmax.xlane.f32.xlu0 %v2183
        %v2212 = vpop.xlane.xlu0 %2211
        %2213 = vmax.xlane.f32.xlu0 %v2184
        %v2214 = vpop.xlane.xlu0 %2213
        %2215 = vmax.xlane.f32.xlu0 %v2185
        %v2216 = vpop.xlane.xlu0 %2215
        %2217 = vmax.xlane.f32.xlu0 %v2186
        %v2218 = vpop.xlane.xlu0 %2217
        %v2219 = vsub.f32 %v2171, %v2188
        %v2220 = vsub.f32 %v2172, %v2190
        %v2221 = vsub.f32 %v2173, %v2192
        %v2222 = vsub.f32 %v2174, %v2194
        %v2223 = vsub.f32 %v2175, %v2196
        %v2224 = vsub.f32 %v2176, %v2198
        %v2225 = vsub.f32 %v2177, %v2200
        %v2226 = vsub.f32 %v2178, %v2202
        %v2227 = vsub.f32 %v2179, %v2204
        %v2228 = vsub.f32 %v2180, %v2206
        %v2229 = vsub.f32 %v2181, %v2208
        %v2230 = vsub.f32 %v2182, %v2210
        %v2231 = vsub.f32 %v2183, %v2212
        %v2232 = vsub.f32 %v2184, %v2214
        %v2233 = vsub.f32 %v2185, %v2216
        %v2234 = vsub.f32 %v2186, %v2218
        %v2235 = vmul.f32 %v2219, 1.442695
        %v2236 = vpow.pop %v2235
        %v2237 = vmul.f32 %v2220, 1.442695
        %v2238 = vpow.pop %v2237
        %v2239 = vmul.f32 %v2221, 1.442695
        %v2240 = vpow.pop %v2239
        %v2241 = vmul.f32 %v2222, 1.442695
        %v2242 = vpow.pop %v2241
        %v2243 = vmul.f32 %v2223, 1.442695
        %v2244 = vpow.pop %v2243
        %v2245 = vmul.f32 %v2224, 1.442695
        %v2246 = vpow.pop %v2245
        %v2247 = vmul.f32 %v2225, 1.442695
        %v2248 = vpow.pop %v2247
        %v2249 = vmul.f32 %v2226, 1.442695
        %v2250 = vpow.pop %v2249
        %v2251 = vmul.f32 %v2227, 1.442695
        %v2252 = vpow.pop %v2251
        %v2253 = vmul.f32 %v2228, 1.442695
        %v2254 = vpow.pop %v2253
        %v2255 = vmul.f32 %v2229, 1.442695
        %v2256 = vpow.pop %v2255
        %v2257 = vmul.f32 %v2230, 1.442695
        %v2258 = vpow.pop %v2257
        %v2259 = vmul.f32 %v2231, 1.442695
        %v2260 = vpow.pop %v2259
        %v2261 = vmul.f32 %v2232, 1.442695
        %v2262 = vpow.pop %v2261
        %v2263 = vmul.f32 %v2233, 1.442695
        %v2264 = vpow.pop %v2263
        %v2265 = vmul.f32 %v2234, 1.442695
        %v2266 = vpow.pop %v2265
        %2267 = vadd.xlane.f32.xlu0 %v2236
        %v2268 = vpop.xlane.xlu0 %2267
        %2269 = vadd.xlane.f32.xlu0 %v2238
        %v2270 = vpop.xlane.xlu0 %2269
        %2271 = vadd.xlane.f32.xlu0 %v2240
        %v2272 = vpop.xlane.xlu0 %2271
        %2273 = vadd.xlane.f32.xlu0 %v2242
        %v2274 = vpop.xlane.xlu0 %2273
        %2275 = vadd.xlane.f32.xlu0 %v2244
        %v2276 = vpop.xlane.xlu0 %2275
        %2277 = vadd.xlane.f32.xlu0 %v2246
        %v2278 = vpop.xlane.xlu0 %2277
        %2279 = vadd.xlane.f32.xlu0 %v2248
        %v2280 = vpop.xlane.xlu0 %2279
        %2281 = vadd.xlane.f32.xlu0 %v2250
        %v2282 = vpop.xlane.xlu0 %2281
        %2283 = vadd.xlane.f32.xlu0 %v2252
        %v2284 = vpop.xlane.xlu0 %2283
        %2285 = vadd.xlane.f32.xlu0 %v2254
        %v2286 = vpop.xlane.xlu0 %2285
        %2287 = vadd.xlane.f32.xlu0 %v2256
        %v2288 = vpop.xlane.xlu0 %2287
        %2289 = vadd.xlane.f32.xlu0 %v2258
        %v2290 = vpop.xlane.xlu0 %2289
        %2291 = vadd.xlane.f32.xlu0 %v2260
        %v2292 = vpop.xlane.xlu0 %2291
        %2293 = vadd.xlane.f32.xlu0 %v2262
        %v2294 = vpop.xlane.xlu0 %2293
        %2295 = vadd.xlane.f32.xlu0 %v2264
        %v2296 = vpop.xlane.xlu0 %2295
        %2297 = vadd.xlane.f32.xlu0 %v2266
        %v2298 = vpop.xlane.xlu0 %2297
        %v2299 = vrcp.pop %v2268
        %v2300 = vmul.f32 %v2236, %v2299
        %v2301 = vrcp.pop %v2270
        %v2302 = vmul.f32 %v2238, %v2301
        %v2303 = vrcp.pop %v2272
        %v2304 = vmul.f32 %v2240, %v2303
        %v2305 = vrcp.pop %v2274
        %v2306 = vmul.f32 %v2242, %v2305
        %v2307 = vrcp.pop %v2276
        %v2308 = vmul.f32 %v2244, %v2307
        %v2309 = vrcp.pop %v2278
        %v2310 = vmul.f32 %v2246, %v2309
        %v2311 = vrcp.pop %v2280
        %v2312 = vmul.f32 %v2248, %v2311
        %v2313 = vrcp.pop %v2282
        %v2314 = vmul.f32 %v2250, %v2313
        %v2315 = vrcp.pop %v2284
        %v2316 = vmul.f32 %v2252, %v2315
        %v2317 = vrcp.pop %v2286
        %v2318 = vmul.f32 %v2254, %v2317
        %v2319 = vrcp.pop %v2288
        %v2320 = vmul.f32 %v2256, %v2319
        %v2321 = vrcp.pop %v2290
        %v2322 = vmul.f32 %v2258, %v2321
        %v2323 = vrcp.pop %v2292
        %v2324 = vmul.f32 %v2260, %v2323
        %v2325 = vrcp.pop %v2294
        %v2326 = vmul.f32 %v2262, %v2325
        %v2327 = vrcp.pop %v2296
        %v2328 = vmul.f32 %v2264, %v2327
        %v2329 = vrcp.pop %v2298
        %v2330 = vmul.f32 %v2266, %v2329
        %2347 = vrot.lane.b32.xlu0 %v897, 96
        %v2348 = vpop.permute.xlu0 %2347
        %2349 = vrot.lane.b32.xlu0 %v902, 96
        %v2350 = vpop.permute.xlu0 %2349
        %2351 = vrot.lane.b32.xlu0 %v907, 96
        %v2352 = vpop.permute.xlu0 %2351
        %2353 = vrot.lane.b32.xlu0 %v912, 96
        %v2354 = vpop.permute.xlu0 %2353
        %2355 = vrot.lane.b32.xlu0 %v917, 96
        %v2356 = vpop.permute.xlu0 %2355
        %2357 = vrot.lane.b32.xlu0 %v922, 96
        %v2358 = vpop.permute.xlu0 %2357
        %2359 = vrot.lane.b32.xlu0 %v927, 96
        %v2360 = vpop.permute.xlu0 %2359
        %2361 = vrot.lane.b32.xlu0 %v932, 96
        %v2362 = vpop.permute.xlu0 %2361
        %2363 = vrot.lane.b32.xlu0 %v937, 96
        %v2364 = vpop.permute.xlu0 %2363
        %2365 = vrot.lane.b32.xlu0 %v942, 96
        %v2366 = vpop.permute.xlu0 %2365
        %2367 = vrot.lane.b32.xlu0 %v947, 96
        %v2368 = vpop.permute.xlu0 %2367
        %2369 = vrot.lane.b32.xlu0 %v952, 96
        %v2370 = vpop.permute.xlu0 %2369
        %2371 = vrot.lane.b32.xlu0 %v957, 96
        %v2372 = vpop.permute.xlu0 %2371
        %2373 = vrot.lane.b32.xlu0 %v962, 96
        %v2374 = vpop.permute.xlu0 %2373
        %2375 = vrot.lane.b32.xlu0 %v967, 96
        %v2376 = vpop.permute.xlu0 %2375
        %2377 = vrot.lane.b32.xlu0 %v972, 96
        %v2378 = vpop.permute.xlu0 %2377
        %2395 = vmatprep.subr.mxu0 0.0
        %2396 = vmatpush1.msra.mxu0 %v2378
        %2397 = vmatprep.subr.mxu0 0.0
        %2398 = vmatpush1.msra.mxu0 %v2376
        %2399 = vmatprep.subr.mxu0 0.0
        %2400 = vmatpush1.msra.mxu0 %v2374
        %2401 = vmatprep.subr.mxu0 0.0
        %2402 = vmatpush1.msra.mxu0 %v2372
        %2403 = vmatprep.subr.mxu0 0.0
        %2404 = vmatpush1.msra.mxu0 %v2370
        %2405 = vmatprep.subr.mxu0 0.0
        %2406 = vmatpush1.msra.mxu0 %v2368
        %2407 = vmatprep.subr.mxu0 0.0
        %2408 = vmatpush1.msra.mxu0 %v2366
        %2409 = vmatprep.subr.mxu0 0.0
        %2410 = vmatpush1.msra.mxu0 %v2364
        %2411 = vmatprep.subr.mxu0 0.0
        %2412 = vmatpush1.msra.mxu0 %v2362
        %2413 = vmatprep.subr.mxu0 0.0
        %2414 = vmatpush1.msra.mxu0 %v2360
        %2415 = vmatprep.subr.mxu0 0.0
        %2416 = vmatpush1.msra.mxu0 %v2358
        %2417 = vmatprep.subr.mxu0 0.0
        %2418 = vmatpush1.msra.mxu0 %v2356
        %2419 = vmatprep.subr.mxu0 0.0
        %2420 = vmatpush1.msra.mxu0 %v2354
        %2421 = vmatprep.subr.mxu0 0.0
        %2422 = vmatpush1.msra.mxu0 %v2352
        %2423 = vmatprep.subr.mxu0 0.0
        %2424 = vmatpush1.msra.mxu0 %v2350
        %2425 = vmatprep.subr.mxu0 0.0
        %2426 = vmatpush1.msra.mxu0 %v2348
        %2427 = vmatprep.subr.mxu0 0.0
        %2428 = vmatpush2.msra.mxu0 0.0
        %2429 = vmatprep.subr.mxu0 0.0
        %2430 = vmatpush2.msra.mxu0 0.0
        %2431 = vmatprep.subr.mxu0 0.0
        %2432 = vmatpush2.msra.mxu0 0.0
        %2433 = vmatprep.subr.mxu0 0.0
        %2434 = vmatpush2.msra.mxu0 0.0
        %2435 = vmatprep.subr.mxu0 0.0
        %2436 = vmatpush2.msra.mxu0 0.0
        %2437 = vmatprep.subr.mxu0 0.0
        %2438 = vmatpush2.msra.mxu0 0.0
        %2439 = vmatprep.subr.mxu0 0.0
        %2440 = vmatpush2.msra.mxu0 0.0
        %2441 = vmatprep.subr.mxu0 0.0
        %2442 = vmatpush2.msra.mxu0 0.0
        %2443 = vmatprep.subr.mxu0 0.0
        %2444 = vmatpush2.msra.mxu0 0.0
        %2445 = vmatprep.subr.mxu0 0.0
        %2446 = vmatpush2.msra.mxu0 0.0
        %2447 = vmatprep.subr.mxu0 0.0
        %2448 = vmatpush2.msra.mxu0 0.0
        %2449 = vmatprep.subr.mxu0 0.0
        %2450 = vmatpush2.msra.mxu0 0.0
        %2451 = vmatprep.subr.mxu0 0.0
        %2452 = vmatpush2.msra.mxu0 0.0
        %2453 = vmatprep.subr.mxu0 0.0
        %2454 = vmatpush2.msra.mxu0 0.0
        %2455 = vmatprep.subr.mxu0 0.0
        %2456 = vmatpush2.msra.mxu0 0.0
        %2457 = vmatprep.subr.mxu0 0.0
        %2458 = vmatpush2.msra.mxu0 0.0
        %2459 = vmatprep.mubr.f32.mxu0 0.0
        %2460 = vmatmul.mubr.f32.gmra.mxu0 %v2300
        %v2461 = vpop.f32.mrf.mxu0
        %v2462 = vadd.f32 0.0, %v2461
        %v2463 = vpop.f32.mrf.mxu0
        %2464 = vmatprep.mubr.f32.mxu0 0.0
        %2465 = vmatmul.mubr.f32.gmra.mxu0 %v2302
        %v2466 = vpop.f32.mrf.mxu0
        %v2467 = vadd.f32 0.0, %v2466
        %v2468 = vpop.f32.mrf.mxu0
        %2469 = vmatprep.mubr.f32.mxu0 0.0
        %2470 = vmatmul.mubr.f32.gmra.mxu0 %v2304
        %v2471 = vpop.f32.mrf.mxu0
        %v2472 = vadd.f32 0.0, %v2471
        %v2473 = vpop.f32.mrf.mxu0
        %2474 = vmatprep.mubr.f32.mxu0 0.0
        %2475 = vmatmul.mubr.f32.gmra.mxu0 %v2306
        %v2476 = vpop.f32.mrf.mxu0
        %v2477 = vadd.f32 0.0, %v2476
        %v2478 = vpop.f32.mrf.mxu0
        %2479 = vmatprep.mubr.f32.mxu0 0.0
        %2480 = vmatmul.mubr.f32.gmra.mxu0 %v2308
        %v2481 = vpop.f32.mrf.mxu0
        %v2482 = vadd.f32 0.0, %v2481
        %v2483 = vpop.f32.mrf.mxu0
        %2484 = vmatprep.mubr.f32.mxu0 0.0
        %2485 = vmatmul.mubr.f32.gmra.mxu0 %v2310
        %v2486 = vpop.f32.mrf.mxu0
        %v2487 = vadd.f32 0.0, %v2486
        %v2488 = vpop.f32.mrf.mxu0
        %2489 = vmatprep.mubr.f32.mxu0 0.0
        %2490 = vmatmul.mubr.f32.gmra.mxu0 %v2312
        %v2491 = vpop.f32.mrf.mxu0
        %v2492 = vadd.f32 0.0, %v2491
        %v2493 = vpop.f32.mrf.mxu0
        %2494 = vmatprep.mubr.f32.mxu0 0.0
        %2495 = vmatmul.mubr.f32.gmra.mxu0 %v2314
        %v2496 = vpop.f32.mrf.mxu0
        %v2497 = vadd.f32 0.0, %v2496
        %v2498 = vpop.f32.mrf.mxu0
        %2499 = vmatprep.mubr.f32.mxu0 0.0
        %2500 = vmatmul.mubr.f32.gmra.mxu0 %v2316
        %v2501 = vpop.f32.mrf.mxu0
        %v2502 = vadd.f32 0.0, %v2501
        %v2503 = vpop.f32.mrf.mxu0
        %2504 = vmatprep.mubr.f32.mxu0 0.0
        %2505 = vmatmul.mubr.f32.gmra.mxu0 %v2318
        %v2506 = vpop.f32.mrf.mxu0
        %v2507 = vadd.f32 0.0, %v2506
        %v2508 = vpop.f32.mrf.mxu0
        %2509 = vmatprep.mubr.f32.mxu0 0.0
        %2510 = vmatmul.mubr.f32.gmra.mxu0 %v2320
        %v2511 = vpop.f32.mrf.mxu0
        %v2512 = vadd.f32 0.0, %v2511
        %v2513 = vpop.f32.mrf.mxu0
        %2514 = vmatprep.mubr.f32.mxu0 0.0
        %2515 = vmatmul.mubr.f32.gmra.mxu0 %v2322
        %v2516 = vpop.f32.mrf.mxu0
        %v2517 = vadd.f32 0.0, %v2516
        %v2518 = vpop.f32.mrf.mxu0
        %2519 = vmatprep.mubr.f32.mxu0 0.0
        %2520 = vmatmul.mubr.f32.gmra.mxu0 %v2324
        %v2521 = vpop.f32.mrf.mxu0
        %v2522 = vadd.f32 0.0, %v2521
        %v2523 = vpop.f32.mrf.mxu0
        %2524 = vmatprep.mubr.f32.mxu0 0.0
        %2525 = vmatmul.mubr.f32.gmra.mxu0 %v2326
        %v2526 = vpop.f32.mrf.mxu0
        %v2527 = vadd.f32 0.0, %v2526
        %v2528 = vpop.f32.mrf.mxu0
        %2529 = vmatprep.mubr.f32.mxu0 0.0
        %2530 = vmatmul.mubr.f32.gmra.mxu0 %v2328
        %v2531 = vpop.f32.mrf.mxu0
        %v2532 = vadd.f32 0.0, %v2531
        %v2533 = vpop.f32.mrf.mxu0
        %2534 = vmatprep.mubr.f32.mxu0 0.0
        %2535 = vmatmul.mubr.f32.gmra.mxu0 %v2330
        %v2536 = vpop.f32.mrf.mxu0
        %v2537 = vadd.f32 0.0, %v2536
        %v2538 = vpop.f32.mrf.mxu0
        %2539 = vdwg.mxu0
        %v2540 = vld [vmem:[#allocation8 + $0x20] sm:$0xff]
        %v2541 = vld [vmem:[#allocation8 + $0x28] sm:$0xff]
        %v2542 = vld [vmem:[#allocation8 + $0x30] sm:$0xff]
        %v2543 = vld [vmem:[#allocation8 + $0x38] sm:$0xff]
        %v2545 = vsel %vm990, %v2462, 0
        %v2548 = vsel %vm990, %v2467, 0
        %v2551 = vsel %vm990, %v2472, 0
        %v2554 = vsel %vm990, %v2477, 0
        %v2557 = vsel %vm990, %v2482, 0
        %v2560 = vsel %vm990, %v2487, 0
        %v2563 = vsel %vm990, %v2492, 0
        %v2566 = vsel %vm990, %v2497, 0
        %v2569 = vsel %vm990, %v2502, 0
        %v2572 = vsel %vm990, %v2507, 0
        %v2575 = vsel %vm990, %v2512, 0
        %v2578 = vsel %vm990, %v2517, 0
        %v2581 = vsel %vm990, %v2522, 0
        %v2584 = vsel %vm990, %v2527, 0
        %v2587 = vsel %vm990, %v2532, 0
        %v2590 = vsel %vm990, %v2537, 0
        %2592 = vmatprep.subr.mxu0 0.0
        %2593 = vmatpush1.msra.mxu0 0.0
        %2594 = vmatprep.subr.mxu0 0.0
        %2595 = vmatpush1.msra.mxu0 0.0
        %2596 = vmatprep.subr.mxu0 0.0
        %2597 = vmatpush1.msra.mxu0 0.0
        %2598 = vmatprep.subr.mxu0 0.0
        %2599 = vmatpush1.msra.mxu0 0.0
        %2600 = vmatprep.subr.mxu0 0.0
        %2601 = vmatpush1.msra.mxu0 0.0
        %2602 = vmatprep.subr.mxu0 0.0
        %2603 = vmatpush1.msra.mxu0 0.0
        %2604 = vmatprep.subr.mxu0 0.0
        %2605 = vmatpush1.msra.mxu0 0.0
        %2606 = vmatprep.subr.mxu0 0.0
        %2607 = vmatpush1.msra.mxu0 0.0
        %2608 = vmatprep.subr.mxu0 0.0
        %2609 = vmatpush1.msra.mxu0 0.0
        %2610 = vmatprep.subr.mxu0 0.0
        %2611 = vmatpush1.msra.mxu0 0.0
        %2612 = vmatprep.subr.mxu0 0.0
        %2613 = vmatpush1.msra.mxu0 0.0
        %2614 = vmatprep.subr.mxu0 0.0
        %2615 = vmatpush1.msra.mxu0 0.0
        %2616 = vmatprep.subr.mxu0 0.0
        %2617 = vmatpush1.msra.mxu0 %v2543
        %2618 = vmatprep.subr.mxu0 0.0
        %2619 = vmatpush1.msra.mxu0 %v2542
        %2620 = vmatprep.subr.mxu0 0.0
        %2621 = vmatpush1.msra.mxu0 %v2541
        %2622 = vmatprep.subr.mxu0 0.0
        %2623 = vmatpush1.msra.mxu0 %v2540
        %2624 = vmatprep.subr.mxu0 0.0
        %2625 = vmatpush2.msra.mxu0 0.0
        %2626 = vmatprep.subr.mxu0 0.0
        %2627 = vmatpush2.msra.mxu0 0.0
        %2628 = vmatprep.subr.mxu0 0.0
        %2629 = vmatpush2.msra.mxu0 0.0
        %2630 = vmatprep.subr.mxu0 0.0
        %2631 = vmatpush2.msra.mxu0 0.0
        %2632 = vmatprep.subr.mxu0 0.0
        %2633 = vmatpush2.msra.mxu0 0.0
        %2634 = vmatprep.subr.mxu0 0.0
        %2635 = vmatpush2.msra.mxu0 0.0
        %2636 = vmatprep.subr.mxu0 0.0
        %2637 = vmatpush2.msra.mxu0 0.0
        %2638 = vmatprep.subr.mxu0 0.0
        %2639 = vmatpush2.msra.mxu0 0.0
        %2640 = vmatprep.subr.mxu0 0.0
        %2641 = vmatpush2.msra.mxu0 0.0
        %2642 = vmatprep.subr.mxu0 0.0
        %2643 = vmatpush2.msra.mxu0 0.0
        %2644 = vmatprep.subr.mxu0 0.0
        %2645 = vmatpush2.msra.mxu0 0.0
        %2646 = vmatprep.subr.mxu0 0.0
        %2647 = vmatpush2.msra.mxu0 0.0
        %2648 = vmatprep.subr.mxu0 0.0
        %2649 = vmatpush2.msra.mxu0 0.0
        %2650 = vmatprep.subr.mxu0 0.0
        %2651 = vmatpush2.msra.mxu0 0.0
        %2652 = vmatprep.subr.mxu0 0.0
        %2653 = vmatpush2.msra.mxu0 0.0
        %2654 = vmatprep.subr.mxu0 0.0
        %2655 = vmatpush2.msra.mxu0 0.0
        %2656 = vmatprep.mubr.f32.mxu0 0.0
        %2657 = vmatmul.mubr.f32.gmra.mxu0 %v2545
        %v2658 = vpop.f32.mrf.mxu0
        %v2659 = vadd.f32 0.0, %v2658
        %v2660 = vpop.f32.mrf.mxu0
        %2661 = vmatprep.mubr.f32.mxu0 0.0
        %2662 = vmatmul.mubr.f32.gmra.mxu0 %v2548
        %v2663 = vpop.f32.mrf.mxu0
        %v2664 = vadd.f32 0.0, %v2663
        %v2665 = vpop.f32.mrf.mxu0
        %2666 = vmatprep.mubr.f32.mxu0 0.0
        %2667 = vmatmul.mubr.f32.gmra.mxu0 %v2551
        %v2668 = vpop.f32.mrf.mxu0
        %v2669 = vadd.f32 0.0, %v2668
        %v2670 = vpop.f32.mrf.mxu0
        %2671 = vmatprep.mubr.f32.mxu0 0.0
        %2672 = vmatmul.mubr.f32.gmra.mxu0 %v2554
        %v2673 = vpop.f32.mrf.mxu0
        %v2674 = vadd.f32 0.0, %v2673
        %v2675 = vpop.f32.mrf.mxu0
        %2676 = vmatprep.mubr.f32.mxu0 0.0
        %2677 = vmatmul.mubr.f32.gmra.mxu0 %v2557
        %v2678 = vpop.f32.mrf.mxu0
        %v2679 = vadd.f32 0.0, %v2678
        %v2680 = vpop.f32.mrf.mxu0
        %2681 = vmatprep.mubr.f32.mxu0 0.0
        %2682 = vmatmul.mubr.f32.gmra.mxu0 %v2560
        %v2683 = vpop.f32.mrf.mxu0
        %v2684 = vadd.f32 0.0, %v2683
        %v2685 = vpop.f32.mrf.mxu0
        %2686 = vmatprep.mubr.f32.mxu0 0.0
        %2687 = vmatmul.mubr.f32.gmra.mxu0 %v2563
        %v2688 = vpop.f32.mrf.mxu0
        %v2689 = vadd.f32 0.0, %v2688
        %v2690 = vpop.f32.mrf.mxu0
        %2691 = vmatprep.mubr.f32.mxu0 0.0
        %2692 = vmatmul.mubr.f32.gmra.mxu0 %v2566
        %v2693 = vpop.f32.mrf.mxu0
        %v2694 = vadd.f32 0.0, %v2693
        %v2695 = vpop.f32.mrf.mxu0
        %2696 = vmatprep.mubr.f32.mxu0 0.0
        %2697 = vmatmul.mubr.f32.gmra.mxu0 %v2569
        %v2698 = vpop.f32.mrf.mxu0
        %v2699 = vadd.f32 0.0, %v2698
        %v2700 = vpop.f32.mrf.mxu0
        %2701 = vmatprep.mubr.f32.mxu0 0.0
        %2702 = vmatmul.mubr.f32.gmra.mxu0 %v2572
        %v2703 = vpop.f32.mrf.mxu0
        %v2704 = vadd.f32 0.0, %v2703
        %v2705 = vpop.f32.mrf.mxu0
        %2706 = vmatprep.mubr.f32.mxu0 0.0
        %2707 = vmatmul.mubr.f32.gmra.mxu0 %v2575
        %v2708 = vpop.f32.mrf.mxu0
        %v2709 = vadd.f32 0.0, %v2708
        %v2710 = vpop.f32.mrf.mxu0
        %2711 = vmatprep.mubr.f32.mxu0 0.0
        %2712 = vmatmul.mubr.f32.gmra.mxu0 %v2578
        %v2713 = vpop.f32.mrf.mxu0
        %v2714 = vadd.f32 0.0, %v2713
        %v2715 = vpop.f32.mrf.mxu0
        %2716 = vmatprep.mubr.f32.mxu0 0.0
        %2717 = vmatmul.mubr.f32.gmra.mxu0 %v2581
        %v2718 = vpop.f32.mrf.mxu0
        %v2719 = vadd.f32 0.0, %v2718
        %v2720 = vpop.f32.mrf.mxu0
        %2721 = vmatprep.mubr.f32.mxu0 0.0
        %2722 = vmatmul.mubr.f32.gmra.mxu0 %v2584
        %v2723 = vpop.f32.mrf.mxu0
        %v2724 = vadd.f32 0.0, %v2723
        %v2725 = vpop.f32.mrf.mxu0
        %2726 = vmatprep.mubr.f32.mxu0 0.0
        %2727 = vmatmul.mubr.f32.gmra.mxu0 %v2587
        %v2728 = vpop.f32.mrf.mxu0
        %v2729 = vadd.f32 0.0, %v2728
        %v2730 = vpop.f32.mrf.mxu0
        %2731 = vmatprep.mubr.f32.mxu0 0.0
        %2732 = vmatmul.mubr.f32.gmra.mxu0 %v2590
        %v2733 = vpop.f32.mrf.mxu0
        %v2734 = vadd.f32 0.0, %v2733
        %v2735 = vpop.f32.mrf.mxu0
        %2736 = vdwg.mxu0
        %v2737 = vadd.f32 %v1866, %v2659
        %v2738 = vadd.f32 %v1867, %v2664
        %v2739 = vadd.f32 %v1868, %v2669
        %v2740 = vadd.f32 %v1869, %v2674
        %v2741 = vadd.f32 %v1870, %v2679
        %v2742 = vadd.f32 %v1871, %v2684
        %v2743 = vadd.f32 %v1872, %v2689
        %v2744 = vadd.f32 %v1873, %v2694
        %v2745 = vadd.f32 %v1874, %v2699
        %v2746 = vadd.f32 %v1875, %v2704
        %v2747 = vadd.f32 %v1876, %v2709
        %v2748 = vadd.f32 %v1877, %v2714
        %v2749 = vadd.f32 %v1878, %v2719
        %v2750 = vadd.f32 %v1879, %v2724
        %v2751 = vadd.f32 %v1880, %v2729
        %v2752 = vadd.f32 %v1881, %v2734
        %2753 = vrot.lane.b32.xlu0 %v736, 64
        %v2754 = vpop.permute.xlu0 %2753
        %2755 = vrot.lane.b32.xlu0 %v742, 64
        %v2756 = vpop.permute.xlu0 %2755
        %2757 = vrot.lane.b32.xlu0 %v748, 64
        %v2758 = vpop.permute.xlu0 %2757
        %2759 = vrot.lane.b32.xlu0 %v754, 64
        %v2760 = vpop.permute.xlu0 %2759
        %2761 = vrot.lane.b32.xlu0 %v760, 64
        %v2762 = vpop.permute.xlu0 %2761
        %2763 = vrot.lane.b32.xlu0 %v766, 64
        %v2764 = vpop.permute.xlu0 %2763
        %2765 = vrot.lane.b32.xlu0 %v772, 64
        %v2766 = vpop.permute.xlu0 %2765
        %2767 = vrot.lane.b32.xlu0 %v778, 64
        %v2768 = vpop.permute.xlu0 %2767
        %2769 = vrot.lane.b32.xlu0 %v784, 64
        %v2770 = vpop.permute.xlu0 %2769
        %2771 = vrot.lane.b32.xlu0 %v790, 64
        %v2772 = vpop.permute.xlu0 %2771
        %2773 = vrot.lane.b32.xlu0 %v796, 64
        %v2774 = vpop.permute.xlu0 %2773
        %2775 = vrot.lane.b32.xlu0 %v802, 64
        %v2776 = vpop.permute.xlu0 %2775
        %2777 = vrot.lane.b32.xlu0 %v808, 64
        %v2778 = vpop.permute.xlu0 %2777
        %2779 = vrot.lane.b32.xlu0 %v814, 64
        %v2780 = vpop.permute.xlu0 %2779
        %2781 = vrot.lane.b32.xlu0 %v820, 64
        %v2782 = vpop.permute.xlu0 %2781
        %2783 = vrot.lane.b32.xlu0 %v826, 64
        %v2784 = vpop.permute.xlu0 %2783
        %2785 = vrot.lane.b32.xlu0 %v738, 64
        %v2786 = vpop.permute.xlu0 %2785
        %2787 = vrot.lane.b32.xlu0 %v744, 64
        %v2788 = vpop.permute.xlu0 %2787
        %2789 = vrot.lane.b32.xlu0 %v750, 64
        %v2790 = vpop.permute.xlu0 %2789
        %2791 = vrot.lane.b32.xlu0 %v756, 64
        %v2792 = vpop.permute.xlu0 %2791
        %2793 = vrot.lane.b32.xlu0 %v762, 64
        %v2794 = vpop.permute.xlu0 %2793
        %2795 = vrot.lane.b32.xlu0 %v768, 64
        %v2796 = vpop.permute.xlu0 %2795
        %2797 = vrot.lane.b32.xlu0 %v774, 64
        %v2798 = vpop.permute.xlu0 %2797
        %2799 = vrot.lane.b32.xlu0 %v780, 64
        %v2800 = vpop.permute.xlu0 %2799
        %2801 = vrot.lane.b32.xlu0 %v786, 64
        %v2802 = vpop.permute.xlu0 %2801
        %2803 = vrot.lane.b32.xlu0 %v792, 64
        %v2804 = vpop.permute.xlu0 %2803
        %2805 = vrot.lane.b32.xlu0 %v798, 64
        %v2806 = vpop.permute.xlu0 %2805
        %2807 = vrot.lane.b32.xlu0 %v804, 64
        %v2808 = vpop.permute.xlu0 %2807
        %2809 = vrot.lane.b32.xlu0 %v810, 64
        %v2810 = vpop.permute.xlu0 %2809
        %2811 = vrot.lane.b32.xlu0 %v816, 64
        %v2812 = vpop.permute.xlu0 %2811
        %2813 = vrot.lane.b32.xlu0 %v822, 64
        %v2814 = vpop.permute.xlu0 %2813
        %2815 = vrot.lane.b32.xlu0 %v828, 64
        %v2816 = vpop.permute.xlu0 %2815
        %v2817 = vsel %vm990, %v2754, 0
        %v2819 = vsel %vm990, %v2756, 0
        %v2821 = vsel %vm990, %v2758, 0
        %v2823 = vsel %vm990, %v2760, 0
        %v2825 = vsel %vm990, %v2762, 0
        %v2827 = vsel %vm990, %v2764, 0
        %v2829 = vsel %vm990, %v2766, 0
        %v2831 = vsel %vm990, %v2768, 0
        %v2833 = vsel %vm990, %v2770, 0
        %v2835 = vsel %vm990, %v2772, 0
        %v2837 = vsel %vm990, %v2774, 0
        %v2839 = vsel %vm990, %v2776, 0
        %v2841 = vsel %vm990, %v2778, 0
        %v2843 = vsel %vm990, %v2780, 0
        %v2845 = vsel %vm990, %v2782, 0
        %v2847 = vsel %vm990, %v2784, 0
        %v2849 = vsel %vm990, %v2786, 0
        %v2851 = vsel %vm990, %v2788, 0
        %v2853 = vsel %vm990, %v2790, 0
        %v2855 = vsel %vm990, %v2792, 0
        %v2857 = vsel %vm990, %v2794, 0
        %v2859 = vsel %vm990, %v2796, 0
        %v2861 = vsel %vm990, %v2798, 0
        %v2863 = vsel %vm990, %v2800, 0
        %v2865 = vsel %vm990, %v2802, 0
        %v2867 = vsel %vm990, %v2804, 0
        %v2869 = vsel %vm990, %v2806, 0
        %v2871 = vsel %vm990, %v2808, 0
        %v2873 = vsel %vm990, %v2810, 0
        %v2875 = vsel %vm990, %v2812, 0
        %v2877 = vsel %vm990, %v2814, 0
        %v2879 = vsel %vm990, %v2816, 0
        %2881 = vmatprep.subr.mxu0 0.0
        %2882 = vmatpush1.xpose.msra.mxu0 %v2879
        %2883 = vmatprep.subr.mxu0 0.0
        %2884 = vmatpush1.xpose.msra.mxu0 %v2877
        %2885 = vmatprep.subr.mxu0 0.0
        %2886 = vmatpush1.xpose.msra.mxu0 %v2875
        %2887 = vmatprep.subr.mxu0 0.0
        %2888 = vmatpush1.xpose.msra.mxu0 %v2873
        %2889 = vmatprep.subr.mxu0 0.0
        %2890 = vmatpush1.xpose.msra.mxu0 %v2871
        %2891 = vmatprep.subr.mxu0 0.0
        %2892 = vmatpush1.xpose.msra.mxu0 %v2869
        %2893 = vmatprep.subr.mxu0 0.0
        %2894 = vmatpush1.xpose.msra.mxu0 %v2867
        %2895 = vmatprep.subr.mxu0 0.0
        %2896 = vmatpush1.xpose.msra.mxu0 %v2865
        %2897 = vmatprep.subr.mxu0 0.0
        %2898 = vmatpush1.xpose.msra.mxu0 %v2863
        %2899 = vmatprep.subr.mxu0 0.0
        %2900 = vmatpush1.xpose.msra.mxu0 %v2861
        %2901 = vmatprep.subr.mxu0 0.0
        %2902 = vmatpush1.xpose.msra.mxu0 %v2859
        %2903 = vmatprep.subr.mxu0 0.0
        %2904 = vmatpush1.xpose.msra.mxu0 %v2857
        %2905 = vmatprep.subr.mxu0 0.0
        %2906 = vmatpush1.xpose.msra.mxu0 %v2855
        %2907 = vmatprep.subr.mxu0 0.0
        %2908 = vmatpush1.xpose.msra.mxu0 %v2853
        %2909 = vmatprep.subr.mxu0 0.0
        %2910 = vmatpush1.xpose.msra.mxu0 %v2851
        %2911 = vmatprep.subr.mxu0 0.0
        %2912 = vmatpush1.xpose.msra.mxu0 %v2849
        %2913 = vmatprep.subr.mxu0 0.0
        %2914 = vmatpush2.xpose.msra.mxu0 0.0
        %2915 = vmatprep.subr.mxu0 0.0
        %2916 = vmatpush2.xpose.msra.mxu0 0.0
        %2917 = vmatprep.subr.mxu0 0.0
        %2918 = vmatpush2.xpose.msra.mxu0 0.0
        %2919 = vmatprep.subr.mxu0 0.0
        %2920 = vmatpush2.xpose.msra.mxu0 0.0
        %2921 = vmatprep.subr.mxu0 0.0
        %2922 = vmatpush2.xpose.msra.mxu0 0.0
        %2923 = vmatprep.subr.mxu0 0.0
        %2924 = vmatpush2.xpose.msra.mxu0 0.0
        %2925 = vmatprep.subr.mxu0 0.0
        %2926 = vmatpush2.xpose.msra.mxu0 0.0
        %2927 = vmatprep.subr.mxu0 0.0
        %2928 = vmatpush2.xpose.msra.mxu0 0.0
        %2929 = vmatprep.subr.mxu0 0.0
        %2930 = vmatpush2.xpose.msra.mxu0 0.0
        %2931 = vmatprep.subr.mxu0 0.0
        %2932 = vmatpush2.xpose.msra.mxu0 0.0
        %2933 = vmatprep.subr.mxu0 0.0
        %2934 = vmatpush2.xpose.msra.mxu0 0.0
        %2935 = vmatprep.subr.mxu0 0.0
        %2936 = vmatpush2.xpose.msra.mxu0 0.0
        %2937 = vmatprep.subr.mxu0 0.0
        %2938 = vmatpush2.xpose.msra.mxu0 0.0
        %2939 = vmatprep.subr.mxu0 0.0
        %2940 = vmatpush2.xpose.msra.mxu0 0.0
        %2941 = vmatprep.subr.mxu0 0.0
        %2942 = vmatpush2.xpose.msra.mxu0 0.0
        %2943 = vmatprep.subr.mxu0 0.0
        %2944 = vmatpush2.xpose.msra.mxu0 0.0
        %2945 = vmatprep.mubr.f32.mxu0 0.0
        %2946 = vmatmul.mubr.f32.gmra.mxu0 %v2817
        %v2947 = vpop.f32.mrf.mxu0
        %v2948 = vadd.f32 0.0, %v2947
        %v2949 = vpop.f32.mrf.mxu0
        %2950 = vmatprep.mubr.f32.mxu0 0.0
        %2951 = vmatmul.mubr.f32.gmra.mxu0 %v2819
        %v2952 = vpop.f32.mrf.mxu0
        %v2953 = vadd.f32 0.0, %v2952
        %v2954 = vpop.f32.mrf.mxu0
        %2955 = vmatprep.mubr.f32.mxu0 0.0
        %2956 = vmatmul.mubr.f32.gmra.mxu0 %v2821
        %v2957 = vpop.f32.mrf.mxu0
        %v2958 = vadd.f32 0.0, %v2957
        %v2959 = vpop.f32.mrf.mxu0
        %2960 = vmatprep.mubr.f32.mxu0 0.0
        %2961 = vmatmul.mubr.f32.gmra.mxu0 %v2823
        %v2962 = vpop.f32.mrf.mxu0
        %v2963 = vadd.f32 0.0, %v2962
        %v2964 = vpop.f32.mrf.mxu0
        %2965 = vmatprep.mubr.f32.mxu0 0.0
        %2966 = vmatmul.mubr.f32.gmra.mxu0 %v2825
        %v2967 = vpop.f32.mrf.mxu0
        %v2968 = vadd.f32 0.0, %v2967
        %v2969 = vpop.f32.mrf.mxu0
        %2970 = vmatprep.mubr.f32.mxu0 0.0
        %2971 = vmatmul.mubr.f32.gmra.mxu0 %v2827
        %v2972 = vpop.f32.mrf.mxu0
        %v2973 = vadd.f32 0.0, %v2972
        %v2974 = vpop.f32.mrf.mxu0
        %2975 = vmatprep.mubr.f32.mxu0 0.0
        %2976 = vmatmul.mubr.f32.gmra.mxu0 %v2829
        %v2977 = vpop.f32.mrf.mxu0
        %v2978 = vadd.f32 0.0, %v2977
        %v2979 = vpop.f32.mrf.mxu0
        %2980 = vmatprep.mubr.f32.mxu0 0.0
        %2981 = vmatmul.mubr.f32.gmra.mxu0 %v2831
        %v2982 = vpop.f32.mrf.mxu0
        %v2983 = vadd.f32 0.0, %v2982
        %v2984 = vpop.f32.mrf.mxu0
        %2985 = vmatprep.mubr.f32.mxu0 0.0
        %2986 = vmatmul.mubr.f32.gmra.mxu0 %v2833
        %v2987 = vpop.f32.mrf.mxu0
        %v2988 = vadd.f32 0.0, %v2987
        %v2989 = vpop.f32.mrf.mxu0
        %2990 = vmatprep.mubr.f32.mxu0 0.0
        %2991 = vmatmul.mubr.f32.gmra.mxu0 %v2835
        %v2992 = vpop.f32.mrf.mxu0
        %v2993 = vadd.f32 0.0, %v2992
        %v2994 = vpop.f32.mrf.mxu0
        %2995 = vmatprep.mubr.f32.mxu0 0.0
        %2996 = vmatmul.mubr.f32.gmra.mxu0 %v2837
        %v2997 = vpop.f32.mrf.mxu0
        %v2998 = vadd.f32 0.0, %v2997
        %v2999 = vpop.f32.mrf.mxu0
        %3000 = vmatprep.mubr.f32.mxu0 0.0
        %3001 = vmatmul.mubr.f32.gmra.mxu0 %v2839
        %v3002 = vpop.f32.mrf.mxu0
        %v3003 = vadd.f32 0.0, %v3002
        %v3004 = vpop.f32.mrf.mxu0
        %3005 = vmatprep.mubr.f32.mxu0 0.0
        %3006 = vmatmul.mubr.f32.gmra.mxu0 %v2841
        %v3007 = vpop.f32.mrf.mxu0
        %v3008 = vadd.f32 0.0, %v3007
        %v3009 = vpop.f32.mrf.mxu0
        %3010 = vmatprep.mubr.f32.mxu0 0.0
        %3011 = vmatmul.mubr.f32.gmra.mxu0 %v2843
        %v3012 = vpop.f32.mrf.mxu0
        %v3013 = vadd.f32 0.0, %v3012
        %v3014 = vpop.f32.mrf.mxu0
        %3015 = vmatprep.mubr.f32.mxu0 0.0
        %3016 = vmatmul.mubr.f32.gmra.mxu0 %v2845
        %v3017 = vpop.f32.mrf.mxu0
        %v3018 = vadd.f32 0.0, %v3017
        %v3019 = vpop.f32.mrf.mxu0
        %3020 = vmatprep.mubr.f32.mxu0 0.0
        %3021 = vmatmul.mubr.f32.gmra.mxu0 %v2847
        %v3022 = vpop.f32.mrf.mxu0
        %v3023 = vadd.f32 0.0, %v3022
        %v3024 = vpop.f32.mrf.mxu0
        %3025 = vdwg.mxu0
        %v3026 = vmul.f32 %v2948, 0.17677669
        %v3027 = vmul.f32 %v2953, 0.17677669
        %v3028 = vmul.f32 %v2958, 0.17677669
        %v3029 = vmul.f32 %v2963, 0.17677669
        %v3030 = vmul.f32 %v2968, 0.17677669
        %v3031 = vmul.f32 %v2973, 0.17677669
        %v3032 = vmul.f32 %v2978, 0.17677669
        %v3033 = vmul.f32 %v2983, 0.17677669
        %v3034 = vmul.f32 %v2988, 0.17677669
        %v3035 = vmul.f32 %v2993, 0.17677669
        %v3036 = vmul.f32 %v2998, 0.17677669
        %v3037 = vmul.f32 %v3003, 0.17677669
        %v3038 = vmul.f32 %v3008, 0.17677669
        %v3039 = vmul.f32 %v3013, 0.17677669
        %v3040 = vmul.f32 %v3018, 0.17677669
        %v3041 = vmul.f32 %v3023, 0.17677669
        %v3042 = vsel %vm1348, %v3026, -1e+09
        %v3043 = vsel %vm1349, %v3027, -1e+09
        %v3044 = vsel %vm1350, %v3028, -1e+09
        %v3045 = vsel %vm1351, %v3029, -1e+09
        %v3046 = vsel %vm1352, %v3030, -1e+09
        %v3047 = vsel %vm1353, %v3031, -1e+09
        %v3048 = vsel %vm1354, %v3032, -1e+09
        %v3049 = vsel %vm1355, %v3033, -1e+09
        %v3050 = vsel %vm1356, %v3034, -1e+09
        %v3051 = vsel %vm1357, %v3035, -1e+09
        %v3052 = vsel %vm1358, %v3036, -1e+09
        %v3053 = vsel %vm1359, %v3037, -1e+09
        %v3054 = vsel %vm1360, %v3038, -1e+09
        %v3055 = vsel %vm1361, %v3039, -1e+09
        %v3056 = vsel %vm1362, %v3040, -1e+09
        %v3057 = vsel %vm1363, %v3041, -1e+09
        %3058 = vmax.xlane.f32.xlu0 %v3042
        %v3059 = vpop.xlane.xlu0 %3058
        %3060 = vmax.xlane.f32.xlu0 %v3043
        %v3061 = vpop.xlane.xlu0 %3060
        %3062 = vmax.xlane.f32.xlu0 %v3044
        %v3063 = vpop.xlane.xlu0 %3062
        %3064 = vmax.xlane.f32.xlu0 %v3045
        %v3065 = vpop.xlane.xlu0 %3064
        %3066 = vmax.xlane.f32.xlu0 %v3046
        %v3067 = vpop.xlane.xlu0 %3066
        %3068 = vmax.xlane.f32.xlu0 %v3047
        %v3069 = vpop.xlane.xlu0 %3068
        %3070 = vmax.xlane.f32.xlu0 %v3048
        %v3071 = vpop.xlane.xlu0 %3070
        %3072 = vmax.xlane.f32.xlu0 %v3049
        %v3073 = vpop.xlane.xlu0 %3072
        %3074 = vmax.xlane.f32.xlu0 %v3050
        %v3075 = vpop.xlane.xlu0 %3074
        %3076 = vmax.xlane.f32.xlu0 %v3051
        %v3077 = vpop.xlane.xlu0 %3076
        %3078 = vmax.xlane.f32.xlu0 %v3052
        %v3079 = vpop.xlane.xlu0 %3078
        %3080 = vmax.xlane.f32.xlu0 %v3053
        %v3081 = vpop.xlane.xlu0 %3080
        %3082 = vmax.xlane.f32.xlu0 %v3054
        %v3083 = vpop.xlane.xlu0 %3082
        %3084 = vmax.xlane.f32.xlu0 %v3055
        %v3085 = vpop.xlane.xlu0 %3084
        %3086 = vmax.xlane.f32.xlu0 %v3056
        %v3087 = vpop.xlane.xlu0 %3086
        %3088 = vmax.xlane.f32.xlu0 %v3057
        %v3089 = vpop.xlane.xlu0 %3088
        %v3090 = vsub.f32 %v3042, %v3059
        %v3091 = vsub.f32 %v3043, %v3061
        %v3092 = vsub.f32 %v3044, %v3063
        %v3093 = vsub.f32 %v3045, %v3065
        %v3094 = vsub.f32 %v3046, %v3067
        %v3095 = vsub.f32 %v3047, %v3069
        %v3096 = vsub.f32 %v3048, %v3071
        %v3097 = vsub.f32 %v3049, %v3073
        %v3098 = vsub.f32 %v3050, %v3075
        %v3099 = vsub.f32 %v3051, %v3077
        %v3100 = vsub.f32 %v3052, %v3079
        %v3101 = vsub.f32 %v3053, %v3081
        %v3102 = vsub.f32 %v3054, %v3083
        %v3103 = vsub.f32 %v3055, %v3085
        %v3104 = vsub.f32 %v3056, %v3087
        %v3105 = vsub.f32 %v3057, %v3089
        %v3106 = vmul.f32 %v3090, 1.442695
        %v3107 = vpow.pop %v3106
        %v3108 = vmul.f32 %v3091, 1.442695
        %v3109 = vpow.pop %v3108
        %v3110 = vmul.f32 %v3092, 1.442695
        %v3111 = vpow.pop %v3110
        %v3112 = vmul.f32 %v3093, 1.442695
        %v3113 = vpow.pop %v3112
        %v3114 = vmul.f32 %v3094, 1.442695
        %v3115 = vpow.pop %v3114
        %v3116 = vmul.f32 %v3095, 1.442695
        %v3117 = vpow.pop %v3116
        %v3118 = vmul.f32 %v3096, 1.442695
        %v3119 = vpow.pop %v3118
        %v3120 = vmul.f32 %v3097, 1.442695
        %v3121 = vpow.pop %v3120
        %v3122 = vmul.f32 %v3098, 1.442695
        %v3123 = vpow.pop %v3122
        %v3124 = vmul.f32 %v3099, 1.442695
        %v3125 = vpow.pop %v3124
        %v3126 = vmul.f32 %v3100, 1.442695
        %v3127 = vpow.pop %v3126
        %v3128 = vmul.f32 %v3101, 1.442695
        %v3129 = vpow.pop %v3128
        %v3130 = vmul.f32 %v3102, 1.442695
        %v3131 = vpow.pop %v3130
        %v3132 = vmul.f32 %v3103, 1.442695
        %v3133 = vpow.pop %v3132
        %v3134 = vmul.f32 %v3104, 1.442695
        %v3135 = vpow.pop %v3134
        %v3136 = vmul.f32 %v3105, 1.442695
        %v3137 = vpow.pop %v3136
        %3138 = vadd.xlane.f32.xlu0 %v3107
        %v3139 = vpop.xlane.xlu0 %3138
        %3140 = vadd.xlane.f32.xlu0 %v3109
        %v3141 = vpop.xlane.xlu0 %3140
        %3142 = vadd.xlane.f32.xlu0 %v3111
        %v3143 = vpop.xlane.xlu0 %3142
        %3144 = vadd.xlane.f32.xlu0 %v3113
        %v3145 = vpop.xlane.xlu0 %3144
        %3146 = vadd.xlane.f32.xlu0 %v3115
        %v3147 = vpop.xlane.xlu0 %3146
        %3148 = vadd.xlane.f32.xlu0 %v3117
        %v3149 = vpop.xlane.xlu0 %3148
        %3150 = vadd.xlane.f32.xlu0 %v3119
        %v3151 = vpop.xlane.xlu0 %3150
        %3152 = vadd.xlane.f32.xlu0 %v3121
        %v3153 = vpop.xlane.xlu0 %3152
        %3154 = vadd.xlane.f32.xlu0 %v3123
        %v3155 = vpop.xlane.xlu0 %3154
        %3156 = vadd.xlane.f32.xlu0 %v3125
        %v3157 = vpop.xlane.xlu0 %3156
        %3158 = vadd.xlane.f32.xlu0 %v3127
        %v3159 = vpop.xlane.xlu0 %3158
        %3160 = vadd.xlane.f32.xlu0 %v3129
        %v3161 = vpop.xlane.xlu0 %3160
        %3162 = vadd.xlane.f32.xlu0 %v3131
        %v3163 = vpop.xlane.xlu0 %3162
        %3164 = vadd.xlane.f32.xlu0 %v3133
        %v3165 = vpop.xlane.xlu0 %3164
        %3166 = vadd.xlane.f32.xlu0 %v3135
        %v3167 = vpop.xlane.xlu0 %3166
        %3168 = vadd.xlane.f32.xlu0 %v3137
        %v3169 = vpop.xlane.xlu0 %3168
        %v3170 = vrcp.pop %v3139
        %v3171 = vmul.f32 %v3107, %v3170
        %v3172 = vrcp.pop %v3141
        %v3173 = vmul.f32 %v3109, %v3172
        %v3174 = vrcp.pop %v3143
        %v3175 = vmul.f32 %v3111, %v3174
        %v3176 = vrcp.pop %v3145
        %v3177 = vmul.f32 %v3113, %v3176
        %v3178 = vrcp.pop %v3147
        %v3179 = vmul.f32 %v3115, %v3178
        %v3180 = vrcp.pop %v3149
        %v3181 = vmul.f32 %v3117, %v3180
        %v3182 = vrcp.pop %v3151
        %v3183 = vmul.f32 %v3119, %v3182
        %v3184 = vrcp.pop %v3153
        %v3185 = vmul.f32 %v3121, %v3184
        %v3186 = vrcp.pop %v3155
        %v3187 = vmul.f32 %v3123, %v3186
        %v3188 = vrcp.pop %v3157
        %v3189 = vmul.f32 %v3125, %v3188
        %v3190 = vrcp.pop %v3159
        %v3191 = vmul.f32 %v3127, %v3190
        %v3192 = vrcp.pop %v3161
        %v3193 = vmul.f32 %v3129, %v3192
        %v3194 = vrcp.pop %v3163
        %v3195 = vmul.f32 %v3131, %v3194
        %v3196 = vrcp.pop %v3165
        %v3197 = vmul.f32 %v3133, %v3196
        %v3198 = vrcp.pop %v3167
        %v3199 = vmul.f32 %v3135, %v3198
        %v3200 = vrcp.pop %v3169
        %v3201 = vmul.f32 %v3137, %v3200
        %3202 = vrot.lane.b32.xlu0 %v897, 64
        %v3203 = vpop.permute.xlu0 %3202
        %3204 = vrot.lane.b32.xlu0 %v902, 64
        %v3205 = vpop.permute.xlu0 %3204
        %3206 = vrot.lane.b32.xlu0 %v907, 64
        %v3207 = vpop.permute.xlu0 %3206
        %3208 = vrot.lane.b32.xlu0 %v912, 64
        %v3209 = vpop.permute.xlu0 %3208
        %3210 = vrot.lane.b32.xlu0 %v917, 64
        %v3211 = vpop.permute.xlu0 %3210
        %3212 = vrot.lane.b32.xlu0 %v922, 64
        %v3213 = vpop.permute.xlu0 %3212
        %3214 = vrot.lane.b32.xlu0 %v927, 64
        %v3215 = vpop.permute.xlu0 %3214
        %3216 = vrot.lane.b32.xlu0 %v932, 64
        %v3217 = vpop.permute.xlu0 %3216
        %3218 = vrot.lane.b32.xlu0 %v937, 64
        %v3219 = vpop.permute.xlu0 %3218
        %3220 = vrot.lane.b32.xlu0 %v942, 64
        %v3221 = vpop.permute.xlu0 %3220
        %3222 = vrot.lane.b32.xlu0 %v947, 64
        %v3223 = vpop.permute.xlu0 %3222
        %3224 = vrot.lane.b32.xlu0 %v952, 64
        %v3225 = vpop.permute.xlu0 %3224
        %3226 = vrot.lane.b32.xlu0 %v957, 64
        %v3227 = vpop.permute.xlu0 %3226
        %3228 = vrot.lane.b32.xlu0 %v962, 64
        %v3229 = vpop.permute.xlu0 %3228
        %3230 = vrot.lane.b32.xlu0 %v967, 64
        %v3231 = vpop.permute.xlu0 %3230
        %3232 = vrot.lane.b32.xlu0 %v972, 64
        %v3233 = vpop.permute.xlu0 %3232
        %3250 = vmatprep.subr.mxu0 0.0
        %3251 = vmatpush1.msra.mxu0 %v3233
        %3252 = vmatprep.subr.mxu0 0.0
        %3253 = vmatpush1.msra.mxu0 %v3231
        %3254 = vmatprep.subr.mxu0 0.0
        %3255 = vmatpush1.msra.mxu0 %v3229
        %3256 = vmatprep.subr.mxu0 0.0
        %3257 = vmatpush1.msra.mxu0 %v3227
        %3258 = vmatprep.subr.mxu0 0.0
        %3259 = vmatpush1.msra.mxu0 %v3225
        %3260 = vmatprep.subr.mxu0 0.0
        %3261 = vmatpush1.msra.mxu0 %v3223
        %3262 = vmatprep.subr.mxu0 0.0
        %3263 = vmatpush1.msra.mxu0 %v3221
        %3264 = vmatprep.subr.mxu0 0.0
        %3265 = vmatpush1.msra.mxu0 %v3219
        %3266 = vmatprep.subr.mxu0 0.0
        %3267 = vmatpush1.msra.mxu0 %v3217
        %3268 = vmatprep.subr.mxu0 0.0
        %3269 = vmatpush1.msra.mxu0 %v3215
        %3270 = vmatprep.subr.mxu0 0.0
        %3271 = vmatpush1.msra.mxu0 %v3213
        %3272 = vmatprep.subr.mxu0 0.0
        %3273 = vmatpush1.msra.mxu0 %v3211
        %3274 = vmatprep.subr.mxu0 0.0
        %3275 = vmatpush1.msra.mxu0 %v3209
        %3276 = vmatprep.subr.mxu0 0.0
        %3277 = vmatpush1.msra.mxu0 %v3207
        %3278 = vmatprep.subr.mxu0 0.0
        %3279 = vmatpush1.msra.mxu0 %v3205
        %3280 = vmatprep.subr.mxu0 0.0
        %3281 = vmatpush1.msra.mxu0 %v3203
        %3282 = vmatprep.subr.mxu0 0.0
        %3283 = vmatpush2.msra.mxu0 0.0
        %3284 = vmatprep.subr.mxu0 0.0
        %3285 = vmatpush2.msra.mxu0 0.0
        %3286 = vmatprep.subr.mxu0 0.0
        %3287 = vmatpush2.msra.mxu0 0.0
        %3288 = vmatprep.subr.mxu0 0.0
        %3289 = vmatpush2.msra.mxu0 0.0
        %3290 = vmatprep.subr.mxu0 0.0
        %3291 = vmatpush2.msra.mxu0 0.0
        %3292 = vmatprep.subr.mxu0 0.0
        %3293 = vmatpush2.msra.mxu0 0.0
        %3294 = vmatprep.subr.mxu0 0.0
        %3295 = vmatpush2.msra.mxu0 0.0
        %3296 = vmatprep.subr.mxu0 0.0
        %3297 = vmatpush2.msra.mxu0 0.0
        %3298 = vmatprep.subr.mxu0 0.0
        %3299 = vmatpush2.msra.mxu0 0.0
        %3300 = vmatprep.subr.mxu0 0.0
        %3301 = vmatpush2.msra.mxu0 0.0
        %3302 = vmatprep.subr.mxu0 0.0
        %3303 = vmatpush2.msra.mxu0 0.0
        %3304 = vmatprep.subr.mxu0 0.0
        %3305 = vmatpush2.msra.mxu0 0.0
        %3306 = vmatprep.subr.mxu0 0.0
        %3307 = vmatpush2.msra.mxu0 0.0
        %3308 = vmatprep.subr.mxu0 0.0
        %3309 = vmatpush2.msra.mxu0 0.0
        %3310 = vmatprep.subr.mxu0 0.0
        %3311 = vmatpush2.msra.mxu0 0.0
        %3312 = vmatprep.subr.mxu0 0.0
        %3313 = vmatpush2.msra.mxu0 0.0
        %3314 = vmatprep.mubr.f32.mxu0 0.0
        %3315 = vmatmul.mubr.f32.gmra.mxu0 %v3171
        %v3316 = vpop.f32.mrf.mxu0
        %v3317 = vadd.f32 0.0, %v3316
        %v3318 = vpop.f32.mrf.mxu0
        %3319 = vmatprep.mubr.f32.mxu0 0.0
        %3320 = vmatmul.mubr.f32.gmra.mxu0 %v3173
        %v3321 = vpop.f32.mrf.mxu0
        %v3322 = vadd.f32 0.0, %v3321
        %v3323 = vpop.f32.mrf.mxu0
        %3324 = vmatprep.mubr.f32.mxu0 0.0
        %3325 = vmatmul.mubr.f32.gmra.mxu0 %v3175
        %v3326 = vpop.f32.mrf.mxu0
        %v3327 = vadd.f32 0.0, %v3326
        %v3328 = vpop.f32.mrf.mxu0
        %3329 = vmatprep.mubr.f32.mxu0 0.0
        %3330 = vmatmul.mubr.f32.gmra.mxu0 %v3177
        %v3331 = vpop.f32.mrf.mxu0
        %v3332 = vadd.f32 0.0, %v3331
        %v3333 = vpop.f32.mrf.mxu0
        %3334 = vmatprep.mubr.f32.mxu0 0.0
        %3335 = vmatmul.mubr.f32.gmra.mxu0 %v3179
        %v3336 = vpop.f32.mrf.mxu0
        %v3337 = vadd.f32 0.0, %v3336
        %v3338 = vpop.f32.mrf.mxu0
        %3339 = vmatprep.mubr.f32.mxu0 0.0
        %3340 = vmatmul.mubr.f32.gmra.mxu0 %v3181
        %v3341 = vpop.f32.mrf.mxu0
        %v3342 = vadd.f32 0.0, %v3341
        %v3343 = vpop.f32.mrf.mxu0
        %3344 = vmatprep.mubr.f32.mxu0 0.0
        %3345 = vmatmul.mubr.f32.gmra.mxu0 %v3183
        %v3346 = vpop.f32.mrf.mxu0
        %v3347 = vadd.f32 0.0, %v3346
        %v3348 = vpop.f32.mrf.mxu0
        %3349 = vmatprep.mubr.f32.mxu0 0.0
        %3350 = vmatmul.mubr.f32.gmra.mxu0 %v3185
        %v3351 = vpop.f32.mrf.mxu0
        %v3352 = vadd.f32 0.0, %v3351
        %v3353 = vpop.f32.mrf.mxu0
        %3354 = vmatprep.mubr.f32.mxu0 0.0
        %3355 = vmatmul.mubr.f32.gmra.mxu0 %v3187
        %v3356 = vpop.f32.mrf.mxu0
        %v3357 = vadd.f32 0.0, %v3356
        %v3358 = vpop.f32.mrf.mxu0
        %3359 = vmatprep.mubr.f32.mxu0 0.0
        %3360 = vmatmul.mubr.f32.gmra.mxu0 %v3189
        %v3361 = vpop.f32.mrf.mxu0
        %v3362 = vadd.f32 0.0, %v3361
        %v3363 = vpop.f32.mrf.mxu0
        %3364 = vmatprep.mubr.f32.mxu0 0.0
        %3365 = vmatmul.mubr.f32.gmra.mxu0 %v3191
        %v3366 = vpop.f32.mrf.mxu0
        %v3367 = vadd.f32 0.0, %v3366
        %v3368 = vpop.f32.mrf.mxu0
        %3369 = vmatprep.mubr.f32.mxu0 0.0
        %3370 = vmatmul.mubr.f32.gmra.mxu0 %v3193
        %v3371 = vpop.f32.mrf.mxu0
        %v3372 = vadd.f32 0.0, %v3371
        %v3373 = vpop.f32.mrf.mxu0
        %3374 = vmatprep.mubr.f32.mxu0 0.0
        %3375 = vmatmul.mubr.f32.gmra.mxu0 %v3195
        %v3376 = vpop.f32.mrf.mxu0
        %v3377 = vadd.f32 0.0, %v3376
        %v3378 = vpop.f32.mrf.mxu0
        %3379 = vmatprep.mubr.f32.mxu0 0.0
        %3380 = vmatmul.mubr.f32.gmra.mxu0 %v3197
        %v3381 = vpop.f32.mrf.mxu0
        %v3382 = vadd.f32 0.0, %v3381
        %v3383 = vpop.f32.mrf.mxu0
        %3384 = vmatprep.mubr.f32.mxu0 0.0
        %3385 = vmatmul.mubr.f32.gmra.mxu0 %v3199
        %v3386 = vpop.f32.mrf.mxu0
        %v3387 = vadd.f32 0.0, %v3386
        %v3388 = vpop.f32.mrf.mxu0
        %3389 = vmatprep.mubr.f32.mxu0 0.0
        %3390 = vmatmul.mubr.f32.gmra.mxu0 %v3201
        %v3391 = vpop.f32.mrf.mxu0
        %v3392 = vadd.f32 0.0, %v3391
        %v3393 = vpop.f32.mrf.mxu0
        %3394 = vdwg.mxu0
        %v3395 = vld [vmem:[#allocation8 + $0x40] sm:$0xff]
        %v3396 = vld [vmem:[#allocation8 + $0x48] sm:$0xff]
        %v3397 = vld [vmem:[#allocation8 + $0x50] sm:$0xff]
        %v3398 = vld [vmem:[#allocation8 + $0x58] sm:$0xff]
        %v3400 = vsel %vm990, %v3317, 0
        %v3403 = vsel %vm990, %v3322, 0
        %v3406 = vsel %vm990, %v3327, 0
        %v3409 = vsel %vm990, %v3332, 0
        %v3412 = vsel %vm990, %v3337, 0
        %v3415 = vsel %vm990, %v3342, 0
        %v3418 = vsel %vm990, %v3347, 0
        %v3421 = vsel %vm990, %v3352, 0
        %v3424 = vsel %vm990, %v3357, 0
        %v3427 = vsel %vm990, %v3362, 0
        %v3430 = vsel %vm990, %v3367, 0
        %v3433 = vsel %vm990, %v3372, 0
        %v3436 = vsel %vm990, %v3377, 0
        %v3439 = vsel %vm990, %v3382, 0
        %v3442 = vsel %vm990, %v3387, 0
        %v3445 = vsel %vm990, %v3392, 0
        %3447 = vmatprep.subr.mxu0 0.0
        %3448 = vmatpush1.msra.mxu0 0.0
        %3449 = vmatprep.subr.mxu0 0.0
        %3450 = vmatpush1.msra.mxu0 0.0
        %3451 = vmatprep.subr.mxu0 0.0
        %3452 = vmatpush1.msra.mxu0 0.0
        %3453 = vmatprep.subr.mxu0 0.0
        %3454 = vmatpush1.msra.mxu0 0.0
        %3455 = vmatprep.subr.mxu0 0.0
        %3456 = vmatpush1.msra.mxu0 0.0
        %3457 = vmatprep.subr.mxu0 0.0
        %3458 = vmatpush1.msra.mxu0 0.0
        %3459 = vmatprep.subr.mxu0 0.0
        %3460 = vmatpush1.msra.mxu0 0.0
        %3461 = vmatprep.subr.mxu0 0.0
        %3462 = vmatpush1.msra.mxu0 0.0
        %3463 = vmatprep.subr.mxu0 0.0
        %3464 = vmatpush1.msra.mxu0 0.0
        %3465 = vmatprep.subr.mxu0 0.0
        %3466 = vmatpush1.msra.mxu0 0.0
        %3467 = vmatprep.subr.mxu0 0.0
        %3468 = vmatpush1.msra.mxu0 0.0
        %3469 = vmatprep.subr.mxu0 0.0
        %3470 = vmatpush1.msra.mxu0 0.0
        %3471 = vmatprep.subr.mxu0 0.0
        %3472 = vmatpush1.msra.mxu0 %v3398
        %3473 = vmatprep.subr.mxu0 0.0
        %3474 = vmatpush1.msra.mxu0 %v3397
        %3475 = vmatprep.subr.mxu0 0.0
        %3476 = vmatpush1.msra.mxu0 %v3396
        %3477 = vmatprep.subr.mxu0 0.0
        %3478 = vmatpush1.msra.mxu0 %v3395
        %3479 = vmatprep.subr.mxu0 0.0
        %3480 = vmatpush2.msra.mxu0 0.0
        %3481 = vmatprep.subr.mxu0 0.0
        %3482 = vmatpush2.msra.mxu0 0.0
        %3483 = vmatprep.subr.mxu0 0.0
        %3484 = vmatpush2.msra.mxu0 0.0
        %3485 = vmatprep.subr.mxu0 0.0
        %3486 = vmatpush2.msra.mxu0 0.0
        %3487 = vmatprep.subr.mxu0 0.0
        %3488 = vmatpush2.msra.mxu0 0.0
        %3489 = vmatprep.subr.mxu0 0.0
        %3490 = vmatpush2.msra.mxu0 0.0
        %3491 = vmatprep.subr.mxu0 0.0
        %3492 = vmatpush2.msra.mxu0 0.0
        %3493 = vmatprep.subr.mxu0 0.0
        %3494 = vmatpush2.msra.mxu0 0.0
        %3495 = vmatprep.subr.mxu0 0.0
        %3496 = vmatpush2.msra.mxu0 0.0
        %3497 = vmatprep.subr.mxu0 0.0
        %3498 = vmatpush2.msra.mxu0 0.0
        %3499 = vmatprep.subr.mxu0 0.0
        %3500 = vmatpush2.msra.mxu0 0.0
        %3501 = vmatprep.subr.mxu0 0.0
        %3502 = vmatpush2.msra.mxu0 0.0
        %3503 = vmatprep.subr.mxu0 0.0
        %3504 = vmatpush2.msra.mxu0 0.0
        %3505 = vmatprep.subr.mxu0 0.0
        %3506 = vmatpush2.msra.mxu0 0.0
        %3507 = vmatprep.subr.mxu0 0.0
        %3508 = vmatpush2.msra.mxu0 0.0
        %3509 = vmatprep.subr.mxu0 0.0
        %3510 = vmatpush2.msra.mxu0 0.0
        %3511 = vmatprep.mubr.f32.mxu0 0.0
        %3512 = vmatmul.mubr.f32.gmra.mxu0 %v3400
        %v3513 = vpop.f32.mrf.mxu0
        %v3514 = vadd.f32 0.0, %v3513
        %v3515 = vpop.f32.mrf.mxu0
        %3516 = vmatprep.mubr.f32.mxu0 0.0
        %3517 = vmatmul.mubr.f32.gmra.mxu0 %v3403
        %v3518 = vpop.f32.mrf.mxu0
        %v3519 = vadd.f32 0.0, %v3518
        %v3520 = vpop.f32.mrf.mxu0
        %3521 = vmatprep.mubr.f32.mxu0 0.0
        %3522 = vmatmul.mubr.f32.gmra.mxu0 %v3406
        %v3523 = vpop.f32.mrf.mxu0
        %v3524 = vadd.f32 0.0, %v3523
        %v3525 = vpop.f32.mrf.mxu0
        %3526 = vmatprep.mubr.f32.mxu0 0.0
        %3527 = vmatmul.mubr.f32.gmra.mxu0 %v3409
        %v3528 = vpop.f32.mrf.mxu0
        %v3529 = vadd.f32 0.0, %v3528
        %v3530 = vpop.f32.mrf.mxu0
        %3531 = vmatprep.mubr.f32.mxu0 0.0
        %3532 = vmatmul.mubr.f32.gmra.mxu0 %v3412
        %v3533 = vpop.f32.mrf.mxu0
        %v3534 = vadd.f32 0.0, %v3533
        %v3535 = vpop.f32.mrf.mxu0
        %3536 = vmatprep.mubr.f32.mxu0 0.0
        %3537 = vmatmul.mubr.f32.gmra.mxu0 %v3415
        %v3538 = vpop.f32.mrf.mxu0
        %v3539 = vadd.f32 0.0, %v3538
        %v3540 = vpop.f32.mrf.mxu0
        %3541 = vmatprep.mubr.f32.mxu0 0.0
        %3542 = vmatmul.mubr.f32.gmra.mxu0 %v3418
        %v3543 = vpop.f32.mrf.mxu0
        %v3544 = vadd.f32 0.0, %v3543
        %v3545 = vpop.f32.mrf.mxu0
        %3546 = vmatprep.mubr.f32.mxu0 0.0
        %3547 = vmatmul.mubr.f32.gmra.mxu0 %v3421
        %v3548 = vpop.f32.mrf.mxu0
        %v3549 = vadd.f32 0.0, %v3548
        %v3550 = vpop.f32.mrf.mxu0
        %3551 = vmatprep.mubr.f32.mxu0 0.0
        %3552 = vmatmul.mubr.f32.gmra.mxu0 %v3424
        %v3553 = vpop.f32.mrf.mxu0
        %v3554 = vadd.f32 0.0, %v3553
        %v3555 = vpop.f32.mrf.mxu0
        %3556 = vmatprep.mubr.f32.mxu0 0.0
        %3557 = vmatmul.mubr.f32.gmra.mxu0 %v3427
        %v3558 = vpop.f32.mrf.mxu0
        %v3559 = vadd.f32 0.0, %v3558
        %v3560 = vpop.f32.mrf.mxu0
        %3561 = vmatprep.mubr.f32.mxu0 0.0
        %3562 = vmatmul.mubr.f32.gmra.mxu0 %v3430
        %v3563 = vpop.f32.mrf.mxu0
        %v3564 = vadd.f32 0.0, %v3563
        %v3565 = vpop.f32.mrf.mxu0
        %3566 = vmatprep.mubr.f32.mxu0 0.0
        %3567 = vmatmul.mubr.f32.gmra.mxu0 %v3433
        %v3568 = vpop.f32.mrf.mxu0
        %v3569 = vadd.f32 0.0, %v3568
        %v3570 = vpop.f32.mrf.mxu0
        %3571 = vmatprep.mubr.f32.mxu0 0.0
        %3572 = vmatmul.mubr.f32.gmra.mxu0 %v3436
        %v3573 = vpop.f32.mrf.mxu0
        %v3574 = vadd.f32 0.0, %v3573
        %v3575 = vpop.f32.mrf.mxu0
        %3576 = vmatprep.mubr.f32.mxu0 0.0
        %3577 = vmatmul.mubr.f32.gmra.mxu0 %v3439
        %v3578 = vpop.f32.mrf.mxu0
        %v3579 = vadd.f32 0.0, %v3578
        %v3580 = vpop.f32.mrf.mxu0
        %3581 = vmatprep.mubr.f32.mxu0 0.0
        %3582 = vmatmul.mubr.f32.gmra.mxu0 %v3442
        %v3583 = vpop.f32.mrf.mxu0
        %v3584 = vadd.f32 0.0, %v3583
        %v3585 = vpop.f32.mrf.mxu0
        %3586 = vmatprep.mubr.f32.mxu0 0.0
        %3587 = vmatmul.mubr.f32.gmra.mxu0 %v3445
        %v3588 = vpop.f32.mrf.mxu0
        %v3589 = vadd.f32 0.0, %v3588
        %v3590 = vpop.f32.mrf.mxu0
        %3591 = vdwg.mxu0
        %v3592 = vadd.f32 %v2737, %v3514
        %v3593 = vadd.f32 %v2738, %v3519
        %v3594 = vadd.f32 %v2739, %v3524
        %v3595 = vadd.f32 %v2740, %v3529
        %v3596 = vadd.f32 %v2741, %v3534
        %v3597 = vadd.f32 %v2742, %v3539
        %v3598 = vadd.f32 %v2743, %v3544
        %v3599 = vadd.f32 %v2744, %v3549
        %v3600 = vadd.f32 %v2745, %v3554
        %v3601 = vadd.f32 %v2746, %v3559
        %v3602 = vadd.f32 %v2747, %v3564
        %v3603 = vadd.f32 %v2748, %v3569
        %v3604 = vadd.f32 %v2749, %v3574
        %v3605 = vadd.f32 %v2750, %v3579
        %v3606 = vadd.f32 %v2751, %v3584
        %v3607 = vadd.f32 %v2752, %v3589
        %3608 = vrot.lane.b32.xlu0 %v736, 32
        %v3609 = vpop.permute.xlu0 %3608
        %3610 = vrot.lane.b32.xlu0 %v742, 32
        %v3611 = vpop.permute.xlu0 %3610
        %3612 = vrot.lane.b32.xlu0 %v748, 32
        %v3613 = vpop.permute.xlu0 %3612
        %3614 = vrot.lane.b32.xlu0 %v754, 32
        %v3615 = vpop.permute.xlu0 %3614
        %3616 = vrot.lane.b32.xlu0 %v760, 32
        %v3617 = vpop.permute.xlu0 %3616
        %3618 = vrot.lane.b32.xlu0 %v766, 32
        %v3619 = vpop.permute.xlu0 %3618
        %3620 = vrot.lane.b32.xlu0 %v772, 32
        %v3621 = vpop.permute.xlu0 %3620
        %3622 = vrot.lane.b32.xlu0 %v778, 32
        %v3623 = vpop.permute.xlu0 %3622
        %3624 = vrot.lane.b32.xlu0 %v784, 32
        %v3625 = vpop.permute.xlu0 %3624
        %3626 = vrot.lane.b32.xlu0 %v790, 32
        %v3627 = vpop.permute.xlu0 %3626
        %3628 = vrot.lane.b32.xlu0 %v796, 32
        %v3629 = vpop.permute.xlu0 %3628
        %3630 = vrot.lane.b32.xlu0 %v802, 32
        %v3631 = vpop.permute.xlu0 %3630
        %3632 = vrot.lane.b32.xlu0 %v808, 32
        %v3633 = vpop.permute.xlu0 %3632
        %3634 = vrot.lane.b32.xlu0 %v814, 32
        %v3635 = vpop.permute.xlu0 %3634
        %3636 = vrot.lane.b32.xlu0 %v820, 32
        %v3637 = vpop.permute.xlu0 %3636
        %3638 = vrot.lane.b32.xlu0 %v826, 32
        %v3639 = vpop.permute.xlu0 %3638
        %3640 = vrot.lane.b32.xlu0 %v738, 32
        %v3641 = vpop.permute.xlu0 %3640
        %3642 = vrot.lane.b32.xlu0 %v744, 32
        %v3643 = vpop.permute.xlu0 %3642
        %3644 = vrot.lane.b32.xlu0 %v750, 32
        %v3645 = vpop.permute.xlu0 %3644
        %3646 = vrot.lane.b32.xlu0 %v756, 32
        %v3647 = vpop.permute.xlu0 %3646
        %3648 = vrot.lane.b32.xlu0 %v762, 32
        %v3649 = vpop.permute.xlu0 %3648
        %3650 = vrot.lane.b32.xlu0 %v768, 32
        %v3651 = vpop.permute.xlu0 %3650
        %3652 = vrot.lane.b32.xlu0 %v774, 32
        %v3653 = vpop.permute.xlu0 %3652
        %3654 = vrot.lane.b32.xlu0 %v780, 32
        %v3655 = vpop.permute.xlu0 %3654
        %3656 = vrot.lane.b32.xlu0 %v786, 32
        %v3657 = vpop.permute.xlu0 %3656
        %3658 = vrot.lane.b32.xlu0 %v792, 32
        %v3659 = vpop.permute.xlu0 %3658
        %3660 = vrot.lane.b32.xlu0 %v798, 32
        %v3661 = vpop.permute.xlu0 %3660
        %3662 = vrot.lane.b32.xlu0 %v804, 32
        %v3663 = vpop.permute.xlu0 %3662
        %3664 = vrot.lane.b32.xlu0 %v810, 32
        %v3665 = vpop.permute.xlu0 %3664
        %3666 = vrot.lane.b32.xlu0 %v816, 32
        %v3667 = vpop.permute.xlu0 %3666
        %3668 = vrot.lane.b32.xlu0 %v822, 32
        %v3669 = vpop.permute.xlu0 %3668
        %3670 = vrot.lane.b32.xlu0 %v828, 32
        %v3671 = vpop.permute.xlu0 %3670
        %v3672 = vsel %vm990, %v3609, 0
        %v3674 = vsel %vm990, %v3611, 0
        %v3676 = vsel %vm990, %v3613, 0
        %v3678 = vsel %vm990, %v3615, 0
        %v3680 = vsel %vm990, %v3617, 0
        %v3682 = vsel %vm990, %v3619, 0
        %v3684 = vsel %vm990, %v3621, 0
        %v3686 = vsel %vm990, %v3623, 0
        %v3688 = vsel %vm990, %v3625, 0
        %v3690 = vsel %vm990, %v3627, 0
        %v3692 = vsel %vm990, %v3629, 0
        %v3694 = vsel %vm990, %v3631, 0
        %v3696 = vsel %vm990, %v3633, 0
        %v3698 = vsel %vm990, %v3635, 0
        %v3700 = vsel %vm990, %v3637, 0
        %v3702 = vsel %vm990, %v3639, 0
        %v3704 = vsel %vm990, %v3641, 0
        %v3706 = vsel %vm990, %v3643, 0
        %v3708 = vsel %vm990, %v3645, 0
        %v3710 = vsel %vm990, %v3647, 0
        %v3712 = vsel %vm990, %v3649, 0
        %v3714 = vsel %vm990, %v3651, 0
        %v3716 = vsel %vm990, %v3653, 0
        %v3718 = vsel %vm990, %v3655, 0
        %v3720 = vsel %vm990, %v3657, 0
        %v3722 = vsel %vm990, %v3659, 0
        %v3724 = vsel %vm990, %v3661, 0
        %v3726 = vsel %vm990, %v3663, 0
        %v3728 = vsel %vm990, %v3665, 0
        %v3730 = vsel %vm990, %v3667, 0
        %v3732 = vsel %vm990, %v3669, 0
        %v3734 = vsel %vm990, %v3671, 0
        %3736 = vmatprep.subr.mxu0 0.0
        %3737 = vmatpush1.xpose.msra.mxu0 %v3734
        %3738 = vmatprep.subr.mxu0 0.0
        %3739 = vmatpush1.xpose.msra.mxu0 %v3732
        %3740 = vmatprep.subr.mxu0 0.0
        %3741 = vmatpush1.xpose.msra.mxu0 %v3730
        %3742 = vmatprep.subr.mxu0 0.0
        %3743 = vmatpush1.xpose.msra.mxu0 %v3728
        %3744 = vmatprep.subr.mxu0 0.0
        %3745 = vmatpush1.xpose.msra.mxu0 %v3726
        %3746 = vmatprep.subr.mxu0 0.0
        %3747 = vmatpush1.xpose.msra.mxu0 %v3724
        %3748 = vmatprep.subr.mxu0 0.0
        %3749 = vmatpush1.xpose.msra.mxu0 %v3722
        %3750 = vmatprep.subr.mxu0 0.0
        %3751 = vmatpush1.xpose.msra.mxu0 %v3720
        %3752 = vmatprep.subr.mxu0 0.0
        %3753 = vmatpush1.xpose.msra.mxu0 %v3718
        %3754 = vmatprep.subr.mxu0 0.0
        %3755 = vmatpush1.xpose.msra.mxu0 %v3716
        %3756 = vmatprep.subr.mxu0 0.0
        %3757 = vmatpush1.xpose.msra.mxu0 %v3714
        %3758 = vmatprep.subr.mxu0 0.0
        %3759 = vmatpush1.xpose.msra.mxu0 %v3712
        %3760 = vmatprep.subr.mxu0 0.0
        %3761 = vmatpush1.xpose.msra.mxu0 %v3710
        %3762 = vmatprep.subr.mxu0 0.0
        %3763 = vmatpush1.xpose.msra.mxu0 %v3708
        %3764 = vmatprep.subr.mxu0 0.0
        %3765 = vmatpush1.xpose.msra.mxu0 %v3706
        %3766 = vmatprep.subr.mxu0 0.0
        %3767 = vmatpush1.xpose.msra.mxu0 %v3704
        %3768 = vmatprep.subr.mxu0 0.0
        %3769 = vmatpush2.xpose.msra.mxu0 0.0
        %3770 = vmatprep.subr.mxu0 0.0
        %3771 = vmatpush2.xpose.msra.mxu0 0.0
        %3772 = vmatprep.subr.mxu0 0.0
        %3773 = vmatpush2.xpose.msra.mxu0 0.0
        %3774 = vmatprep.subr.mxu0 0.0
        %3775 = vmatpush2.xpose.msra.mxu0 0.0
        %3776 = vmatprep.subr.mxu0 0.0
        %3777 = vmatpush2.xpose.msra.mxu0 0.0
        %3778 = vmatprep.subr.mxu0 0.0
        %3779 = vmatpush2.xpose.msra.mxu0 0.0
        %3780 = vmatprep.subr.mxu0 0.0
        %3781 = vmatpush2.xpose.msra.mxu0 0.0
        %3782 = vmatprep.subr.mxu0 0.0
        %3783 = vmatpush2.xpose.msra.mxu0 0.0
        %3784 = vmatprep.subr.mxu0 0.0
        %3785 = vmatpush2.xpose.msra.mxu0 0.0
        %3786 = vmatprep.subr.mxu0 0.0
        %3787 = vmatpush2.xpose.msra.mxu0 0.0
        %3788 = vmatprep.subr.mxu0 0.0
        %3789 = vmatpush2.xpose.msra.mxu0 0.0
        %3790 = vmatprep.subr.mxu0 0.0
        %3791 = vmatpush2.xpose.msra.mxu0 0.0
        %3792 = vmatprep.subr.mxu0 0.0
        %3793 = vmatpush2.xpose.msra.mxu0 0.0
        %3794 = vmatprep.subr.mxu0 0.0
        %3795 = vmatpush2.xpose.msra.mxu0 0.0
        %3796 = vmatprep.subr.mxu0 0.0
        %3797 = vmatpush2.xpose.msra.mxu0 0.0
        %3798 = vmatprep.subr.mxu0 0.0
        %3799 = vmatpush2.xpose.msra.mxu0 0.0
        %3800 = vmatprep.mubr.f32.mxu0 0.0
        %3801 = vmatmul.mubr.f32.gmra.mxu0 %v3672
        %v3802 = vpop.f32.mrf.mxu0
        %v3803 = vadd.f32 0.0, %v3802
        %v3804 = vpop.f32.mrf.mxu0
        %3805 = vmatprep.mubr.f32.mxu0 0.0
        %3806 = vmatmul.mubr.f32.gmra.mxu0 %v3674
        %v3807 = vpop.f32.mrf.mxu0
        %v3808 = vadd.f32 0.0, %v3807
        %v3809 = vpop.f32.mrf.mxu0
        %3810 = vmatprep.mubr.f32.mxu0 0.0
        %3811 = vmatmul.mubr.f32.gmra.mxu0 %v3676
        %v3812 = vpop.f32.mrf.mxu0
        %v3813 = vadd.f32 0.0, %v3812
        %v3814 = vpop.f32.mrf.mxu0
        %3815 = vmatprep.mubr.f32.mxu0 0.0
        %3816 = vmatmul.mubr.f32.gmra.mxu0 %v3678
        %v3817 = vpop.f32.mrf.mxu0
        %v3818 = vadd.f32 0.0, %v3817
        %v3819 = vpop.f32.mrf.mxu0
        %3820 = vmatprep.mubr.f32.mxu0 0.0
        %3821 = vmatmul.mubr.f32.gmra.mxu0 %v3680
        %v3822 = vpop.f32.mrf.mxu0
        %v3823 = vadd.f32 0.0, %v3822
        %v3824 = vpop.f32.mrf.mxu0
        %3825 = vmatprep.mubr.f32.mxu0 0.0
        %3826 = vmatmul.mubr.f32.gmra.mxu0 %v3682
        %v3827 = vpop.f32.mrf.mxu0
        %v3828 = vadd.f32 0.0, %v3827
        %v3829 = vpop.f32.mrf.mxu0
        %3830 = vmatprep.mubr.f32.mxu0 0.0
        %3831 = vmatmul.mubr.f32.gmra.mxu0 %v3684
        %v3832 = vpop.f32.mrf.mxu0
        %v3833 = vadd.f32 0.0, %v3832
        %v3834 = vpop.f32.mrf.mxu0
        %3835 = vmatprep.mubr.f32.mxu0 0.0
        %3836 = vmatmul.mubr.f32.gmra.mxu0 %v3686
        %v3837 = vpop.f32.mrf.mxu0
        %v3838 = vadd.f32 0.0, %v3837
        %v3839 = vpop.f32.mrf.mxu0
        %3840 = vmatprep.mubr.f32.mxu0 0.0
        %3841 = vmatmul.mubr.f32.gmra.mxu0 %v3688
        %v3842 = vpop.f32.mrf.mxu0
        %v3843 = vadd.f32 0.0, %v3842
        %v3844 = vpop.f32.mrf.mxu0
        %3845 = vmatprep.mubr.f32.mxu0 0.0
        %3846 = vmatmul.mubr.f32.gmra.mxu0 %v3690
        %v3847 = vpop.f32.mrf.mxu0
        %v3848 = vadd.f32 0.0, %v3847
        %v3849 = vpop.f32.mrf.mxu0
        %3850 = vmatprep.mubr.f32.mxu0 0.0
        %3851 = vmatmul.mubr.f32.gmra.mxu0 %v3692
        %v3852 = vpop.f32.mrf.mxu0
        %v3853 = vadd.f32 0.0, %v3852
        %v3854 = vpop.f32.mrf.mxu0
        %3855 = vmatprep.mubr.f32.mxu0 0.0
        %3856 = vmatmul.mubr.f32.gmra.mxu0 %v3694
        %v3857 = vpop.f32.mrf.mxu0
        %v3858 = vadd.f32 0.0, %v3857
        %v3859 = vpop.f32.mrf.mxu0
        %3860 = vmatprep.mubr.f32.mxu0 0.0
        %3861 = vmatmul.mubr.f32.gmra.mxu0 %v3696
        %v3862 = vpop.f32.mrf.mxu0
        %v3863 = vadd.f32 0.0, %v3862
        %v3864 = vpop.f32.mrf.mxu0
        %3865 = vmatprep.mubr.f32.mxu0 0.0
        %3866 = vmatmul.mubr.f32.gmra.mxu0 %v3698
        %v3867 = vpop.f32.mrf.mxu0
        %v3868 = vadd.f32 0.0, %v3867
        %v3869 = vpop.f32.mrf.mxu0
        %3870 = vmatprep.mubr.f32.mxu0 0.0
        %3871 = vmatmul.mubr.f32.gmra.mxu0 %v3700
        %v3872 = vpop.f32.mrf.mxu0
        %v3873 = vadd.f32 0.0, %v3872
        %v3874 = vpop.f32.mrf.mxu0
        %3875 = vmatprep.mubr.f32.mxu0 0.0
        %3876 = vmatmul.mubr.f32.gmra.mxu0 %v3702
        %v3877 = vpop.f32.mrf.mxu0
        %v3878 = vadd.f32 0.0, %v3877
        %v3879 = vpop.f32.mrf.mxu0
        %3880 = vdwg.mxu0
        %v3881 = vmul.f32 %v3803, 0.17677669
        %v3882 = vmul.f32 %v3808, 0.17677669
        %v3883 = vmul.f32 %v3813, 0.17677669
        %v3884 = vmul.f32 %v3818, 0.17677669
        %v3885 = vmul.f32 %v3823, 0.17677669
        %v3886 = vmul.f32 %v3828, 0.17677669
        %v3887 = vmul.f32 %v3833, 0.17677669
        %v3888 = vmul.f32 %v3838, 0.17677669
        %v3889 = vmul.f32 %v3843, 0.17677669
        %v3890 = vmul.f32 %v3848, 0.17677669
        %v3891 = vmul.f32 %v3853, 0.17677669
        %v3892 = vmul.f32 %v3858, 0.17677669
        %v3893 = vmul.f32 %v3863, 0.17677669
        %v3894 = vmul.f32 %v3868, 0.17677669
        %v3895 = vmul.f32 %v3873, 0.17677669
        %v3896 = vmul.f32 %v3878, 0.17677669
        %v3897 = vsel %vm1348, %v3881, -1e+09
        %v3898 = vsel %vm1349, %v3882, -1e+09
        %v3899 = vsel %vm1350, %v3883, -1e+09
        %v3900 = vsel %vm1351, %v3884, -1e+09
        %v3901 = vsel %vm1352, %v3885, -1e+09
        %v3902 = vsel %vm1353, %v3886, -1e+09
        %v3903 = vsel %vm1354, %v3887, -1e+09
        %v3904 = vsel %vm1355, %v3888, -1e+09
        %v3905 = vsel %vm1356, %v3889, -1e+09
        %v3906 = vsel %vm1357, %v3890, -1e+09
        %v3907 = vsel %vm1358, %v3891, -1e+09
        %v3908 = vsel %vm1359, %v3892, -1e+09
        %v3909 = vsel %vm1360, %v3893, -1e+09
        %v3910 = vsel %vm1361, %v3894, -1e+09
        %v3911 = vsel %vm1362, %v3895, -1e+09
        %v3912 = vsel %vm1363, %v3896, -1e+09
        %3913 = vmax.xlane.f32.xlu0 %v3897
        %v3914 = vpop.xlane.xlu0 %3913
        %3915 = vmax.xlane.f32.xlu0 %v3898
        %v3916 = vpop.xlane.xlu0 %3915
        %3917 = vmax.xlane.f32.xlu0 %v3899
        %v3918 = vpop.xlane.xlu0 %3917
        %3919 = vmax.xlane.f32.xlu0 %v3900
        %v3920 = vpop.xlane.xlu0 %3919
        %3921 = vmax.xlane.f32.xlu0 %v3901
        %v3922 = vpop.xlane.xlu0 %3921
        %3923 = vmax.xlane.f32.xlu0 %v3902
        %v3924 = vpop.xlane.xlu0 %3923
        %3925 = vmax.xlane.f32.xlu0 %v3903
        %v3926 = vpop.xlane.xlu0 %3925
        %3927 = vmax.xlane.f32.xlu0 %v3904
        %v3928 = vpop.xlane.xlu0 %3927
        %3929 = vmax.xlane.f32.xlu0 %v3905
        %v3930 = vpop.xlane.xlu0 %3929
        %3931 = vmax.xlane.f32.xlu0 %v3906
        %v3932 = vpop.xlane.xlu0 %3931
        %3933 = vmax.xlane.f32.xlu0 %v3907
        %v3934 = vpop.xlane.xlu0 %3933
        %3935 = vmax.xlane.f32.xlu0 %v3908
        %v3936 = vpop.xlane.xlu0 %3935
        %3937 = vmax.xlane.f32.xlu0 %v3909
        %v3938 = vpop.xlane.xlu0 %3937
        %3939 = vmax.xlane.f32.xlu0 %v3910
        %v3940 = vpop.xlane.xlu0 %3939
        %3941 = vmax.xlane.f32.xlu0 %v3911
        %v3942 = vpop.xlane.xlu0 %3941
        %3943 = vmax.xlane.f32.xlu0 %v3912
        %v3944 = vpop.xlane.xlu0 %3943
        %v3945 = vsub.f32 %v3897, %v3914
        %v3946 = vsub.f32 %v3898, %v3916
        %v3947 = vsub.f32 %v3899, %v3918
        %v3948 = vsub.f32 %v3900, %v3920
        %v3949 = vsub.f32 %v3901, %v3922
        %v3950 = vsub.f32 %v3902, %v3924
        %v3951 = vsub.f32 %v3903, %v3926
        %v3952 = vsub.f32 %v3904, %v3928
        %v3953 = vsub.f32 %v3905, %v3930
        %v3954 = vsub.f32 %v3906, %v3932
        %v3955 = vsub.f32 %v3907, %v3934
        %v3956 = vsub.f32 %v3908, %v3936
        %v3957 = vsub.f32 %v3909, %v3938
        %v3958 = vsub.f32 %v3910, %v3940
        %v3959 = vsub.f32 %v3911, %v3942
        %v3960 = vsub.f32 %v3912, %v3944
        %v3961 = vmul.f32 %v3945, 1.442695
        %v3962 = vpow.pop %v3961
        %v3963 = vmul.f32 %v3946, 1.442695
        %v3964 = vpow.pop %v3963
        %v3965 = vmul.f32 %v3947, 1.442695
        %v3966 = vpow.pop %v3965
        %v3967 = vmul.f32 %v3948, 1.442695
        %v3968 = vpow.pop %v3967
        %v3969 = vmul.f32 %v3949, 1.442695
        %v3970 = vpow.pop %v3969
        %v3971 = vmul.f32 %v3950, 1.442695
        %v3972 = vpow.pop %v3971
        %v3973 = vmul.f32 %v3951, 1.442695
        %v3974 = vpow.pop %v3973
        %v3975 = vmul.f32 %v3952, 1.442695
        %v3976 = vpow.pop %v3975
        %v3977 = vmul.f32 %v3953, 1.442695
        %v3978 = vpow.pop %v3977
        %v3979 = vmul.f32 %v3954, 1.442695
        %v3980 = vpow.pop %v3979
        %v3981 = vmul.f32 %v3955, 1.442695
        %v3982 = vpow.pop %v3981
        %v3983 = vmul.f32 %v3956, 1.442695
        %v3984 = vpow.pop %v3983
        %v3985 = vmul.f32 %v3957, 1.442695
        %v3986 = vpow.pop %v3985
        %v3987 = vmul.f32 %v3958, 1.442695
        %v3988 = vpow.pop %v3987
        %v3989 = vmul.f32 %v3959, 1.442695
        %v3990 = vpow.pop %v3989
        %v3991 = vmul.f32 %v3960, 1.442695
        %v3992 = vpow.pop %v3991
        %3993 = vadd.xlane.f32.xlu0 %v3962
        %v3994 = vpop.xlane.xlu0 %3993
        %3995 = vadd.xlane.f32.xlu0 %v3964
        %v3996 = vpop.xlane.xlu0 %3995
        %3997 = vadd.xlane.f32.xlu0 %v3966
        %v3998 = vpop.xlane.xlu0 %3997
        %3999 = vadd.xlane.f32.xlu0 %v3968
        %v4000 = vpop.xlane.xlu0 %3999
        %4001 = vadd.xlane.f32.xlu0 %v3970
        %v4002 = vpop.xlane.xlu0 %4001
        %4003 = vadd.xlane.f32.xlu0 %v3972
        %v4004 = vpop.xlane.xlu0 %4003
        %4005 = vadd.xlane.f32.xlu0 %v3974
        %v4006 = vpop.xlane.xlu0 %4005
        %4007 = vadd.xlane.f32.xlu0 %v3976
        %v4008 = vpop.xlane.xlu0 %4007
        %4009 = vadd.xlane.f32.xlu0 %v3978
        %v4010 = vpop.xlane.xlu0 %4009
        %4011 = vadd.xlane.f32.xlu0 %v3980
        %v4012 = vpop.xlane.xlu0 %4011
        %4013 = vadd.xlane.f32.xlu0 %v3982
        %v4014 = vpop.xlane.xlu0 %4013
        %4015 = vadd.xlane.f32.xlu0 %v3984
        %v4016 = vpop.xlane.xlu0 %4015
        %4017 = vadd.xlane.f32.xlu0 %v3986
        %v4018 = vpop.xlane.xlu0 %4017
        %4019 = vadd.xlane.f32.xlu0 %v3988
        %v4020 = vpop.xlane.xlu0 %4019
        %4021 = vadd.xlane.f32.xlu0 %v3990
        %v4022 = vpop.xlane.xlu0 %4021
        %4023 = vadd.xlane.f32.xlu0 %v3992
        %v4024 = vpop.xlane.xlu0 %4023
        %v4025 = vrcp.pop %v3994
        %v4026 = vmul.f32 %v3962, %v4025
        %v4027 = vrcp.pop %v3996
        %v4028 = vmul.f32 %v3964, %v4027
        %v4029 = vrcp.pop %v3998
        %v4030 = vmul.f32 %v3966, %v4029
        %v4031 = vrcp.pop %v4000
        %v4032 = vmul.f32 %v3968, %v4031
        %v4033 = vrcp.pop %v4002
        %v4034 = vmul.f32 %v3970, %v4033
        %v4035 = vrcp.pop %v4004
        %v4036 = vmul.f32 %v3972, %v4035
        %v4037 = vrcp.pop %v4006
        %v4038 = vmul.f32 %v3974, %v4037
        %v4039 = vrcp.pop %v4008
        %v4040 = vmul.f32 %v3976, %v4039
        %v4041 = vrcp.pop %v4010
        %v4042 = vmul.f32 %v3978, %v4041
        %v4043 = vrcp.pop %v4012
        %v4044 = vmul.f32 %v3980, %v4043
        %v4045 = vrcp.pop %v4014
        %v4046 = vmul.f32 %v3982, %v4045
        %v4047 = vrcp.pop %v4016
        %v4048 = vmul.f32 %v3984, %v4047
        %v4049 = vrcp.pop %v4018
        %v4050 = vmul.f32 %v3986, %v4049
        %v4051 = vrcp.pop %v4020
        %v4052 = vmul.f32 %v3988, %v4051
        %v4053 = vrcp.pop %v4022
        %v4054 = vmul.f32 %v3990, %v4053
        %v4055 = vrcp.pop %v4024
        %v4056 = vmul.f32 %v3992, %v4055
        %4057 = vrot.lane.b32.xlu0 %v897, 32
        %v4058 = vpop.permute.xlu0 %4057
        %4059 = vrot.lane.b32.xlu0 %v902, 32
        %v4060 = vpop.permute.xlu0 %4059
        %4061 = vrot.lane.b32.xlu0 %v907, 32
        %v4062 = vpop.permute.xlu0 %4061
        %4063 = vrot.lane.b32.xlu0 %v912, 32
        %v4064 = vpop.permute.xlu0 %4063
        %4065 = vrot.lane.b32.xlu0 %v917, 32
        %v4066 = vpop.permute.xlu0 %4065
        %4067 = vrot.lane.b32.xlu0 %v922, 32
        %v4068 = vpop.permute.xlu0 %4067
        %4069 = vrot.lane.b32.xlu0 %v927, 32
        %v4070 = vpop.permute.xlu0 %4069
        %4071 = vrot.lane.b32.xlu0 %v932, 32
        %v4072 = vpop.permute.xlu0 %4071
        %4073 = vrot.lane.b32.xlu0 %v937, 32
        %v4074 = vpop.permute.xlu0 %4073
        %4075 = vrot.lane.b32.xlu0 %v942, 32
        %v4076 = vpop.permute.xlu0 %4075
        %4077 = vrot.lane.b32.xlu0 %v947, 32
        %v4078 = vpop.permute.xlu0 %4077
        %4079 = vrot.lane.b32.xlu0 %v952, 32
        %v4080 = vpop.permute.xlu0 %4079
        %4081 = vrot.lane.b32.xlu0 %v957, 32
        %v4082 = vpop.permute.xlu0 %4081
        %4083 = vrot.lane.b32.xlu0 %v962, 32
        %v4084 = vpop.permute.xlu0 %4083
        %4085 = vrot.lane.b32.xlu0 %v967, 32
        %v4086 = vpop.permute.xlu0 %4085
        %4087 = vrot.lane.b32.xlu0 %v972, 32
        %v4088 = vpop.permute.xlu0 %4087
        %4105 = vmatprep.subr.mxu0 0.0
        %4106 = vmatpush1.msra.mxu0 %v4088
        %4107 = vmatprep.subr.mxu0 0.0
        %4108 = vmatpush1.msra.mxu0 %v4086
        %4109 = vmatprep.subr.mxu0 0.0
        %4110 = vmatpush1.msra.mxu0 %v4084
        %4111 = vmatprep.subr.mxu0 0.0
        %4112 = vmatpush1.msra.mxu0 %v4082
        %4113 = vmatprep.subr.mxu0 0.0
        %4114 = vmatpush1.msra.mxu0 %v4080
        %4115 = vmatprep.subr.mxu0 0.0
        %4116 = vmatpush1.msra.mxu0 %v4078
        %4117 = vmatprep.subr.mxu0 0.0
        %4118 = vmatpush1.msra.mxu0 %v4076
        %4119 = vmatprep.subr.mxu0 0.0
        %4120 = vmatpush1.msra.mxu0 %v4074
        %4121 = vmatprep.subr.mxu0 0.0
        %4122 = vmatpush1.msra.mxu0 %v4072
        %4123 = vmatprep.subr.mxu0 0.0
        %4124 = vmatpush1.msra.mxu0 %v4070
        %4125 = vmatprep.subr.mxu0 0.0
        %4126 = vmatpush1.msra.mxu0 %v4068
        %4127 = vmatprep.subr.mxu0 0.0
        %4128 = vmatpush1.msra.mxu0 %v4066
        %4129 = vmatprep.subr.mxu0 0.0
        %4130 = vmatpush1.msra.mxu0 %v4064
        %4131 = vmatprep.subr.mxu0 0.0
        %4132 = vmatpush1.msra.mxu0 %v4062
        %4133 = vmatprep.subr.mxu0 0.0
        %4134 = vmatpush1.msra.mxu0 %v4060
        %4135 = vmatprep.subr.mxu0 0.0
        %4136 = vmatpush1.msra.mxu0 %v4058
        %4137 = vmatprep.subr.mxu0 0.0
        %4138 = vmatpush2.msra.mxu0 0.0
        %4139 = vmatprep.subr.mxu0 0.0
        %4140 = vmatpush2.msra.mxu0 0.0
        %4141 = vmatprep.subr.mxu0 0.0
        %4142 = vmatpush2.msra.mxu0 0.0
        %4143 = vmatprep.subr.mxu0 0.0
        %4144 = vmatpush2.msra.mxu0 0.0
        %4145 = vmatprep.subr.mxu0 0.0
        %4146 = vmatpush2.msra.mxu0 0.0
        %4147 = vmatprep.subr.mxu0 0.0
        %4148 = vmatpush2.msra.mxu0 0.0
        %4149 = vmatprep.subr.mxu0 0.0
        %4150 = vmatpush2.msra.mxu0 0.0
        %4151 = vmatprep.subr.mxu0 0.0
        %4152 = vmatpush2.msra.mxu0 0.0
        %4153 = vmatprep.subr.mxu0 0.0
        %4154 = vmatpush2.msra.mxu0 0.0
        %4155 = vmatprep.subr.mxu0 0.0
        %4156 = vmatpush2.msra.mxu0 0.0
        %4157 = vmatprep.subr.mxu0 0.0
        %4158 = vmatpush2.msra.mxu0 0.0
        %4159 = vmatprep.subr.mxu0 0.0
        %4160 = vmatpush2.msra.mxu0 0.0
        %4161 = vmatprep.subr.mxu0 0.0
        %4162 = vmatpush2.msra.mxu0 0.0
        %4163 = vmatprep.subr.mxu0 0.0
        %4164 = vmatpush2.msra.mxu0 0.0
        %4165 = vmatprep.subr.mxu0 0.0
        %4166 = vmatpush2.msra.mxu0 0.0
        %4167 = vmatprep.subr.mxu0 0.0
        %4168 = vmatpush2.msra.mxu0 0.0
        %4169 = vmatprep.mubr.f32.mxu0 0.0
        %4170 = vmatmul.mubr.f32.gmra.mxu0 %v4026
        %v4171 = vpop.f32.mrf.mxu0
        %v4172 = vadd.f32 0.0, %v4171
        %v4173 = vpop.f32.mrf.mxu0
        %4174 = vmatprep.mubr.f32.mxu0 0.0
        %4175 = vmatmul.mubr.f32.gmra.mxu0 %v4028
        %v4176 = vpop.f32.mrf.mxu0
        %v4177 = vadd.f32 0.0, %v4176
        %v4178 = vpop.f32.mrf.mxu0
        %4179 = vmatprep.mubr.f32.mxu0 0.0
        %4180 = vmatmul.mubr.f32.gmra.mxu0 %v4030
        %v4181 = vpop.f32.mrf.mxu0
        %v4182 = vadd.f32 0.0, %v4181
        %v4183 = vpop.f32.mrf.mxu0
        %4184 = vmatprep.mubr.f32.mxu0 0.0
        %4185 = vmatmul.mubr.f32.gmra.mxu0 %v4032
        %v4186 = vpop.f32.mrf.mxu0
        %v4187 = vadd.f32 0.0, %v4186
        %v4188 = vpop.f32.mrf.mxu0
        %4189 = vmatprep.mubr.f32.mxu0 0.0
        %4190 = vmatmul.mubr.f32.gmra.mxu0 %v4034
        %v4191 = vpop.f32.mrf.mxu0
        %v4192 = vadd.f32 0.0, %v4191
        %v4193 = vpop.f32.mrf.mxu0
        %4194 = vmatprep.mubr.f32.mxu0 0.0
        %4195 = vmatmul.mubr.f32.gmra.mxu0 %v4036
        %v4196 = vpop.f32.mrf.mxu0
        %v4197 = vadd.f32 0.0, %v4196
        %v4198 = vpop.f32.mrf.mxu0
        %4199 = vmatprep.mubr.f32.mxu0 0.0
        %4200 = vmatmul.mubr.f32.gmra.mxu0 %v4038
        %v4201 = vpop.f32.mrf.mxu0
        %v4202 = vadd.f32 0.0, %v4201
        %v4203 = vpop.f32.mrf.mxu0
        %4204 = vmatprep.mubr.f32.mxu0 0.0
        %4205 = vmatmul.mubr.f32.gmra.mxu0 %v4040
        %v4206 = vpop.f32.mrf.mxu0
        %v4207 = vadd.f32 0.0, %v4206
        %v4208 = vpop.f32.mrf.mxu0
        %4209 = vmatprep.mubr.f32.mxu0 0.0
        %4210 = vmatmul.mubr.f32.gmra.mxu0 %v4042
        %v4211 = vpop.f32.mrf.mxu0
        %v4212 = vadd.f32 0.0, %v4211
        %v4213 = vpop.f32.mrf.mxu0
        %4214 = vmatprep.mubr.f32.mxu0 0.0
        %4215 = vmatmul.mubr.f32.gmra.mxu0 %v4044
        %v4216 = vpop.f32.mrf.mxu0
        %v4217 = vadd.f32 0.0, %v4216
        %v4218 = vpop.f32.mrf.mxu0
        %4219 = vmatprep.mubr.f32.mxu0 0.0
        %4220 = vmatmul.mubr.f32.gmra.mxu0 %v4046
        %v4221 = vpop.f32.mrf.mxu0
        %v4222 = vadd.f32 0.0, %v4221
        %v4223 = vpop.f32.mrf.mxu0
        %4224 = vmatprep.mubr.f32.mxu0 0.0
        %4225 = vmatmul.mubr.f32.gmra.mxu0 %v4048
        %v4226 = vpop.f32.mrf.mxu0
        %v4227 = vadd.f32 0.0, %v4226
        %v4228 = vpop.f32.mrf.mxu0
        %4229 = vmatprep.mubr.f32.mxu0 0.0
        %4230 = vmatmul.mubr.f32.gmra.mxu0 %v4050
        %v4231 = vpop.f32.mrf.mxu0
        %v4232 = vadd.f32 0.0, %v4231
        %v4233 = vpop.f32.mrf.mxu0
        %4234 = vmatprep.mubr.f32.mxu0 0.0
        %4235 = vmatmul.mubr.f32.gmra.mxu0 %v4052
        %v4236 = vpop.f32.mrf.mxu0
        %v4237 = vadd.f32 0.0, %v4236
        %v4238 = vpop.f32.mrf.mxu0
        %4239 = vmatprep.mubr.f32.mxu0 0.0
        %4240 = vmatmul.mubr.f32.gmra.mxu0 %v4054
        %v4241 = vpop.f32.mrf.mxu0
        %v4242 = vadd.f32 0.0, %v4241
        %v4243 = vpop.f32.mrf.mxu0
        %4244 = vmatprep.mubr.f32.mxu0 0.0
        %4245 = vmatmul.mubr.f32.gmra.mxu0 %v4056
        %v4246 = vpop.f32.mrf.mxu0
        %v4247 = vadd.f32 0.0, %v4246
        %v4248 = vpop.f32.mrf.mxu0
        %4249 = vdwg.mxu0
        %v4250 = vld [vmem:[#allocation8 + $0x60] sm:$0xff]
        %v4251 = vld [vmem:[#allocation8 + $0x68] sm:$0xff]
        %v4252 = vld [vmem:[#allocation8 + $0x70] sm:$0xff]
        %v4253 = vld [vmem:[#allocation8 + $0x78] sm:$0xff]
        %v4255 = vsel %vm990, %v4172, 0
        %v4258 = vsel %vm990, %v4177, 0
        %v4261 = vsel %vm990, %v4182, 0
        %v4264 = vsel %vm990, %v4187, 0
        %v4267 = vsel %vm990, %v4192, 0
        %v4270 = vsel %vm990, %v4197, 0
        %v4273 = vsel %vm990, %v4202, 0
        %v4276 = vsel %vm990, %v4207, 0
        %v4279 = vsel %vm990, %v4212, 0
        %v4282 = vsel %vm990, %v4217, 0
        %v4285 = vsel %vm990, %v4222, 0
        %v4288 = vsel %vm990, %v4227, 0
        %v4291 = vsel %vm990, %v4232, 0
        %v4294 = vsel %vm990, %v4237, 0
        %v4297 = vsel %vm990, %v4242, 0
        %v4300 = vsel %vm990, %v4247, 0
        %4302 = vmatprep.subr.mxu0 0.0
        %4303 = vmatpush1.msra.mxu0 0.0
        %4304 = vmatprep.subr.mxu0 0.0
        %4305 = vmatpush1.msra.mxu0 0.0
        %4306 = vmatprep.subr.mxu0 0.0
        %4307 = vmatpush1.msra.mxu0 0.0
        %4308 = vmatprep.subr.mxu0 0.0
        %4309 = vmatpush1.msra.mxu0 0.0
        %4310 = vmatprep.subr.mxu0 0.0
        %4311 = vmatpush1.msra.mxu0 0.0
        %4312 = vmatprep.subr.mxu0 0.0
        %4313 = vmatpush1.msra.mxu0 0.0
        %4314 = vmatprep.subr.mxu0 0.0
        %4315 = vmatpush1.msra.mxu0 0.0
        %4316 = vmatprep.subr.mxu0 0.0
        %4317 = vmatpush1.msra.mxu0 0.0
        %4318 = vmatprep.subr.mxu0 0.0
        %4319 = vmatpush1.msra.mxu0 0.0
        %4320 = vmatprep.subr.mxu0 0.0
        %4321 = vmatpush1.msra.mxu0 0.0
        %4322 = vmatprep.subr.mxu0 0.0
        %4323 = vmatpush1.msra.mxu0 0.0
        %4324 = vmatprep.subr.mxu0 0.0
        %4325 = vmatpush1.msra.mxu0 0.0
        %4326 = vmatprep.subr.mxu0 0.0
        %4327 = vmatpush1.msra.mxu0 %v4253
        %4328 = vmatprep.subr.mxu0 0.0
        %4329 = vmatpush1.msra.mxu0 %v4252
        %4330 = vmatprep.subr.mxu0 0.0
        %4331 = vmatpush1.msra.mxu0 %v4251
        %4332 = vmatprep.subr.mxu0 0.0
        %4333 = vmatpush1.msra.mxu0 %v4250
        %4334 = vmatprep.subr.mxu0 0.0
        %4335 = vmatpush2.msra.mxu0 0.0
        %4336 = vmatprep.subr.mxu0 0.0
        %4337 = vmatpush2.msra.mxu0 0.0
        %4338 = vmatprep.subr.mxu0 0.0
        %4339 = vmatpush2.msra.mxu0 0.0
        %4340 = vmatprep.subr.mxu0 0.0
        %4341 = vmatpush2.msra.mxu0 0.0
        %4342 = vmatprep.subr.mxu0 0.0
        %4343 = vmatpush2.msra.mxu0 0.0
        %4344 = vmatprep.subr.mxu0 0.0
        %4345 = vmatpush2.msra.mxu0 0.0
        %4346 = vmatprep.subr.mxu0 0.0
        %4347 = vmatpush2.msra.mxu0 0.0
        %4348 = vmatprep.subr.mxu0 0.0
        %4349 = vmatpush2.msra.mxu0 0.0
        %4350 = vmatprep.subr.mxu0 0.0
        %4351 = vmatpush2.msra.mxu0 0.0
        %4352 = vmatprep.subr.mxu0 0.0
        %4353 = vmatpush2.msra.mxu0 0.0
        %4354 = vmatprep.subr.mxu0 0.0
        %4355 = vmatpush2.msra.mxu0 0.0
        %4356 = vmatprep.subr.mxu0 0.0
        %4357 = vmatpush2.msra.mxu0 0.0
        %4358 = vmatprep.subr.mxu0 0.0
        %4359 = vmatpush2.msra.mxu0 0.0
        %4360 = vmatprep.subr.mxu0 0.0
        %4361 = vmatpush2.msra.mxu0 0.0
        %4362 = vmatprep.subr.mxu0 0.0
        %4363 = vmatpush2.msra.mxu0 0.0
        %4364 = vmatprep.subr.mxu0 0.0
        %4365 = vmatpush2.msra.mxu0 0.0
        %4366 = vmatprep.mubr.f32.mxu0 0.0
        %4367 = vmatmul.mubr.f32.gmra.mxu0 %v4255
        %v4368 = vpop.f32.mrf.mxu0
        %v4369 = vadd.f32 0.0, %v4368
        %v4370 = vpop.f32.mrf.mxu0
        %4371 = vmatprep.mubr.f32.mxu0 0.0
        %4372 = vmatmul.mubr.f32.gmra.mxu0 %v4258
        %v4373 = vpop.f32.mrf.mxu0
        %v4374 = vadd.f32 0.0, %v4373
        %v4375 = vpop.f32.mrf.mxu0
        %4376 = vmatprep.mubr.f32.mxu0 0.0
        %4377 = vmatmul.mubr.f32.gmra.mxu0 %v4261
        %v4378 = vpop.f32.mrf.mxu0
        %v4379 = vadd.f32 0.0, %v4378
        %v4380 = vpop.f32.mrf.mxu0
        %4381 = vmatprep.mubr.f32.mxu0 0.0
        %4382 = vmatmul.mubr.f32.gmra.mxu0 %v4264
        %v4383 = vpop.f32.mrf.mxu0
        %v4384 = vadd.f32 0.0, %v4383
        %v4385 = vpop.f32.mrf.mxu0
        %4386 = vmatprep.mubr.f32.mxu0 0.0
        %4387 = vmatmul.mubr.f32.gmra.mxu0 %v4267
        %v4388 = vpop.f32.mrf.mxu0
        %v4389 = vadd.f32 0.0, %v4388
        %v4390 = vpop.f32.mrf.mxu0
        %4391 = vmatprep.mubr.f32.mxu0 0.0
        %4392 = vmatmul.mubr.f32.gmra.mxu0 %v4270
        %v4393 = vpop.f32.mrf.mxu0
        %v4394 = vadd.f32 0.0, %v4393
        %v4395 = vpop.f32.mrf.mxu0
        %4396 = vmatprep.mubr.f32.mxu0 0.0
        %4397 = vmatmul.mubr.f32.gmra.mxu0 %v4273
        %v4398 = vpop.f32.mrf.mxu0
        %v4399 = vadd.f32 0.0, %v4398
        %v4400 = vpop.f32.mrf.mxu0
        %4401 = vmatprep.mubr.f32.mxu0 0.0
        %4402 = vmatmul.mubr.f32.gmra.mxu0 %v4276
        %v4403 = vpop.f32.mrf.mxu0
        %v4404 = vadd.f32 0.0, %v4403
        %v4405 = vpop.f32.mrf.mxu0
        %4406 = vmatprep.mubr.f32.mxu0 0.0
        %4407 = vmatmul.mubr.f32.gmra.mxu0 %v4279
        %v4408 = vpop.f32.mrf.mxu0
        %v4409 = vadd.f32 0.0, %v4408
        %v4410 = vpop.f32.mrf.mxu0
        %4411 = vmatprep.mubr.f32.mxu0 0.0
        %4412 = vmatmul.mubr.f32.gmra.mxu0 %v4282
        %v4413 = vpop.f32.mrf.mxu0
        %v4414 = vadd.f32 0.0, %v4413
        %v4415 = vpop.f32.mrf.mxu0
        %4416 = vmatprep.mubr.f32.mxu0 0.0
        %4417 = vmatmul.mubr.f32.gmra.mxu0 %v4285
        %v4418 = vpop.f32.mrf.mxu0
        %v4419 = vadd.f32 0.0, %v4418
        %v4420 = vpop.f32.mrf.mxu0
        %4421 = vmatprep.mubr.f32.mxu0 0.0
        %4422 = vmatmul.mubr.f32.gmra.mxu0 %v4288
        %v4423 = vpop.f32.mrf.mxu0
        %v4424 = vadd.f32 0.0, %v4423
        %v4425 = vpop.f32.mrf.mxu0
        %4426 = vmatprep.mubr.f32.mxu0 0.0
        %4427 = vmatmul.mubr.f32.gmra.mxu0 %v4291
        %v4428 = vpop.f32.mrf.mxu0
        %v4429 = vadd.f32 0.0, %v4428
        %v4430 = vpop.f32.mrf.mxu0
        %4431 = vmatprep.mubr.f32.mxu0 0.0
        %4432 = vmatmul.mubr.f32.gmra.mxu0 %v4294
        %v4433 = vpop.f32.mrf.mxu0
        %v4434 = vadd.f32 0.0, %v4433
        %v4435 = vpop.f32.mrf.mxu0
        %4436 = vmatprep.mubr.f32.mxu0 0.0
        %4437 = vmatmul.mubr.f32.gmra.mxu0 %v4297
        %v4438 = vpop.f32.mrf.mxu0
        %v4439 = vadd.f32 0.0, %v4438
        %v4440 = vpop.f32.mrf.mxu0
        %4441 = vmatprep.mubr.f32.mxu0 0.0
        %4442 = vmatmul.mubr.f32.gmra.mxu0 %v4300
        %v4443 = vpop.f32.mrf.mxu0
        %v4444 = vadd.f32 0.0, %v4443
        %v4445 = vpop.f32.mrf.mxu0
        %4446 = vdwg.mxu0
        %v4447 = vadd.f32 %v3592, %v4369
        %v4448 = vadd.f32 %v3593, %v4374
        %v4449 = vadd.f32 %v3594, %v4379
        %v4450 = vadd.f32 %v3595, %v4384
        %v4451 = vadd.f32 %v3596, %v4389
        %v4452 = vadd.f32 %v3597, %v4394
        %v4453 = vadd.f32 %v3598, %v4399
        %v4454 = vadd.f32 %v3599, %v4404
        %v4455 = vadd.f32 %v3600, %v4409
        %v4456 = vadd.f32 %v3601, %v4414
        %v4457 = vadd.f32 %v3602, %v4419
        %v4458 = vadd.f32 %v3603, %v4424
        %v4459 = vadd.f32 %v3604, %v4429
        %v4460 = vadd.f32 %v3605, %v4434
        %v4461 = vadd.f32 %v3606, %v4439
        %v4462 = vadd.f32 %v3607, %v4444
        %v4463 = vadd.f32 %v588, %v4447
        %v4464 = vadd.f32 %v589, %v4448
        %v4465 = vadd.f32 %v590, %v4449
        %v4466 = vadd.f32 %v591, %v4450
        %v4467 = vadd.f32 %v592, %v4451
        %v4468 = vadd.f32 %v593, %v4452
        %v4469 = vadd.f32 %v594, %v4453
        %v4470 = vadd.f32 %v595, %v4454
        %v4471 = vadd.f32 %v596, %v4455
        %v4472 = vadd.f32 %v597, %v4456
        %v4473 = vadd.f32 %v598, %v4457
        %v4474 = vadd.f32 %v599, %v4458
        %v4475 = vadd.f32 %v600, %v4459
        %v4476 = vadd.f32 %v601, %v4460
        %v4477 = vadd.f32 %v602, %v4461
        %v4478 = vadd.f32 %v603, %v4462
        %v4479 = vld [vmem:[%s6] sm:$0x1]
        %v4480 = vld [vmem:[%s7] sm:$0x1]
        %4481 = vadd.xlane.f32.xlu0 %v4463
        %v4482 = vpop.xlane.xlu0 %4481
        %4483 = vadd.xlane.f32.xlu0 %v4464
        %v4484 = vpop.xlane.xlu0 %4483
        %4485 = vadd.xlane.f32.xlu0 %v4465
        %v4486 = vpop.xlane.xlu0 %4485
        %4487 = vadd.xlane.f32.xlu0 %v4466
        %v4488 = vpop.xlane.xlu0 %4487
        %4489 = vadd.xlane.f32.xlu0 %v4467
        %v4490 = vpop.xlane.xlu0 %4489
        %4491 = vadd.xlane.f32.xlu0 %v4468
        %v4492 = vpop.xlane.xlu0 %4491
        %4493 = vadd.xlane.f32.xlu0 %v4469
        %v4494 = vpop.xlane.xlu0 %4493
        %4495 = vadd.xlane.f32.xlu0 %v4470
        %v4496 = vpop.xlane.xlu0 %4495
        %4497 = vadd.xlane.f32.xlu0 %v4471
        %v4498 = vpop.xlane.xlu0 %4497
        %4499 = vadd.xlane.f32.xlu0 %v4472
        %v4500 = vpop.xlane.xlu0 %4499
        %4501 = vadd.xlane.f32.xlu0 %v4473
        %v4502 = vpop.xlane.xlu0 %4501
        %4503 = vadd.xlane.f32.xlu0 %v4474
        %v4504 = vpop.xlane.xlu0 %4503
        %4505 = vadd.xlane.f32.xlu0 %v4475
        %v4506 = vpop.xlane.xlu0 %4505
        %4507 = vadd.xlane.f32.xlu0 %v4476
        %v4508 = vpop.xlane.xlu0 %4507
        %4509 = vadd.xlane.f32.xlu0 %v4477
        %v4510 = vpop.xlane.xlu0 %4509
        %4511 = vadd.xlane.f32.xlu0 %v4478
        %v4512 = vpop.xlane.xlu0 %4511
        %v4513 = vrcp.pop 128.0
        %v4514 = vmul.f32 %v4482, %v4513
        %v4515 = vmul.f32 %v4484, %v4513
        %v4516 = vmul.f32 %v4486, %v4513
        %v4517 = vmul.f32 %v4488, %v4513
        %v4518 = vmul.f32 %v4490, %v4513
        %v4519 = vmul.f32 %v4492, %v4513
        %v4520 = vmul.f32 %v4494, %v4513
        %v4521 = vmul.f32 %v4496, %v4513
        %v4522 = vmul.f32 %v4498, %v4513
        %v4523 = vmul.f32 %v4500, %v4513
        %v4524 = vmul.f32 %v4502, %v4513
        %v4525 = vmul.f32 %v4504, %v4513
        %v4526 = vmul.f32 %v4506, %v4513
        %v4527 = vmul.f32 %v4508, %v4513
        %v4528 = vmul.f32 %v4510, %v4513
        %v4529 = vmul.f32 %v4512, %v4513
        %v4530 = vsub.f32 %v4463, %v4514
        %v4531 = vsub.f32 %v4464, %v4515
        %v4532 = vsub.f32 %v4465, %v4516
        %v4533 = vsub.f32 %v4466, %v4517
        %v4534 = vsub.f32 %v4467, %v4518
        %v4535 = vsub.f32 %v4468, %v4519
        %v4536 = vsub.f32 %v4469, %v4520
        %v4537 = vsub.f32 %v4470, %v4521
        %v4538 = vsub.f32 %v4471, %v4522
        %v4539 = vsub.f32 %v4472, %v4523
        %v4540 = vsub.f32 %v4473, %v4524
        %v4541 = vsub.f32 %v4474, %v4525
        %v4542 = vsub.f32 %v4475, %v4526
        %v4543 = vsub.f32 %v4476, %v4527
        %v4544 = vsub.f32 %v4477, %v4528
        %v4545 = vsub.f32 %v4478, %v4529
        %v4546 = vmul.f32 %v4530, %v4530
        %v4547 = vmul.f32 %v4531, %v4531
        %v4548 = vmul.f32 %v4532, %v4532
        %v4549 = vmul.f32 %v4533, %v4533
        %v4550 = vmul.f32 %v4534, %v4534
        %v4551 = vmul.f32 %v4535, %v4535
        %v4552 = vmul.f32 %v4536, %v4536
        %v4553 = vmul.f32 %v4537, %v4537
        %v4554 = vmul.f32 %v4538, %v4538
        %v4555 = vmul.f32 %v4539, %v4539
        %v4556 = vmul.f32 %v4540, %v4540
        %v4557 = vmul.f32 %v4541, %v4541
        %v4558 = vmul.f32 %v4542, %v4542
        %v4559 = vmul.f32 %v4543, %v4543
        %v4560 = vmul.f32 %v4544, %v4544
        %v4561 = vmul.f32 %v4545, %v4545
        %4562 = vadd.xlane.f32.xlu0 %v4546
        %v4563 = vpop.xlane.xlu0 %4562
        %4564 = vadd.xlane.f32.xlu0 %v4547
        %v4565 = vpop.xlane.xlu0 %4564
        %4566 = vadd.xlane.f32.xlu0 %v4548
        %v4567 = vpop.xlane.xlu0 %4566
        %4568 = vadd.xlane.f32.xlu0 %v4549
        %v4569 = vpop.xlane.xlu0 %4568
        %4570 = vadd.xlane.f32.xlu0 %v4550
        %v4571 = vpop.xlane.xlu0 %4570
        %4572 = vadd.xlane.f32.xlu0 %v4551
        %v4573 = vpop.xlane.xlu0 %4572
        %4574 = vadd.xlane.f32.xlu0 %v4552
        %v4575 = vpop.xlane.xlu0 %4574
        %4576 = vadd.xlane.f32.xlu0 %v4553
        %v4577 = vpop.xlane.xlu0 %4576
        %4578 = vadd.xlane.f32.xlu0 %v4554
        %v4579 = vpop.xlane.xlu0 %4578
        %4580 = vadd.xlane.f32.xlu0 %v4555
        %v4581 = vpop.xlane.xlu0 %4580
        %4582 = vadd.xlane.f32.xlu0 %v4556
        %v4583 = vpop.xlane.xlu0 %4582
        %4584 = vadd.xlane.f32.xlu0 %v4557
        %v4585 = vpop.xlane.xlu0 %4584
        %4586 = vadd.xlane.f32.xlu0 %v4558
        %v4587 = vpop.xlane.xlu0 %4586
        %4588 = vadd.xlane.f32.xlu0 %v4559
        %v4589 = vpop.xlane.xlu0 %4588
        %4590 = vadd.xlane.f32.xlu0 %v4560
        %v4591 = vpop.xlane.xlu0 %4590
        %4592 = vadd.xlane.f32.xlu0 %v4561
        %v4593 = vpop.xlane.xlu0 %4592
        %v4594 = vmul.f32 %v4563, %v4513
        %v4595 = vmul.f32 %v4565, %v4513
        %v4596 = vmul.f32 %v4567, %v4513
        %v4597 = vmul.f32 %v4569, %v4513
        %v4598 = vmul.f32 %v4571, %v4513
        %v4599 = vmul.f32 %v4573, %v4513
        %v4600 = vmul.f32 %v4575, %v4513
        %v4601 = vmul.f32 %v4577, %v4513
        %v4602 = vmul.f32 %v4579, %v4513
        %v4603 = vmul.f32 %v4581, %v4513
        %v4604 = vmul.f32 %v4583, %v4513
        %v4605 = vmul.f32 %v4585, %v4513
        %v4606 = vmul.f32 %v4587, %v4513
        %v4607 = vmul.f32 %v4589, %v4513
        %v4608 = vmul.f32 %v4591, %v4513
        %v4609 = vmul.f32 %v4593, %v4513
        %v4610 = vadd.f32 %v4594, 1e-05
        %v4611 = vadd.f32 %v4595, 1e-05
        %v4612 = vadd.f32 %v4596, 1e-05
        %v4613 = vadd.f32 %v4597, 1e-05
        %v4614 = vadd.f32 %v4598, 1e-05
        %v4615 = vadd.f32 %v4599, 1e-05
        %v4616 = vadd.f32 %v4600, 1e-05
        %v4617 = vadd.f32 %v4601, 1e-05
        %v4618 = vadd.f32 %v4602, 1e-05
        %v4619 = vadd.f32 %v4603, 1e-05
        %v4620 = vadd.f32 %v4604, 1e-05
        %v4621 = vadd.f32 %v4605, 1e-05
        %v4622 = vadd.f32 %v4606, 1e-05
        %v4623 = vadd.f32 %v4607, 1e-05
        %v4624 = vadd.f32 %v4608, 1e-05
        %v4625 = vadd.f32 %v4609, 1e-05
        %v4626 = vrsqrt.pop %v4610
        %v4627 = vrsqrt.pop %v4611
        %v4628 = vrsqrt.pop %v4612
        %v4629 = vrsqrt.pop %v4613
        %v4630 = vrsqrt.pop %v4614
        %v4631 = vrsqrt.pop %v4615
        %v4632 = vrsqrt.pop %v4616
        %v4633 = vrsqrt.pop %v4617
        %v4634 = vrsqrt.pop %v4618
        %v4635 = vrsqrt.pop %v4619
        %v4636 = vrsqrt.pop %v4620
        %v4637 = vrsqrt.pop %v4621
        %v4638 = vrsqrt.pop %v4622
        %v4639 = vrsqrt.pop %v4623
        %v4640 = vrsqrt.pop %v4624
        %v4641 = vrsqrt.pop %v4625
        %v4642 = vmul.f32 %v4530, %v4626
        %v4643 = vmul.f32 %v4531, %v4627
        %v4644 = vmul.f32 %v4532, %v4628
        %v4645 = vmul.f32 %v4533, %v4629
        %v4646 = vmul.f32 %v4534, %v4630
        %v4647 = vmul.f32 %v4535, %v4631
        %v4648 = vmul.f32 %v4536, %v4632
        %v4649 = vmul.f32 %v4537, %v4633
        %v4650 = vmul.f32 %v4538, %v4634
        %v4651 = vmul.f32 %v4539, %v4635
        %v4652 = vmul.f32 %v4540, %v4636
        %v4653 = vmul.f32 %v4541, %v4637
        %v4654 = vmul.f32 %v4542, %v4638
        %v4655 = vmul.f32 %v4543, %v4639
        %v4656 = vmul.f32 %v4544, %v4640
        %v4657 = vmul.f32 %v4545, %v4641
        %v4659 = vlaneseq
        %v4660 = vshrl.u32 %v4659, 7
        %v4661 = vsub.s32 0, %v4660
        %v4662 = vrot.slane %v4479, %v4661
        %v4664 = vmul.f32 %v4642, %v4662
        %v4665 = vmul.f32 %v4643, %v4662
        %v4666 = vmul.f32 %v4644, %v4662
        %v4667 = vmul.f32 %v4645, %v4662
        %v4668 = vmul.f32 %v4646, %v4662
        %v4669 = vmul.f32 %v4647, %v4662
        %v4670 = vmul.f32 %v4648, %v4662
        %v4671 = vmul.f32 %v4649, %v4662
        %v4672 = vmul.f32 %v4650, %v4662
        %v4673 = vmul.f32 %v4651, %v4662
        %v4674 = vmul.f32 %v4652, %v4662
        %v4675 = vmul.f32 %v4653, %v4662
        %v4676 = vmul.f32 %v4654, %v4662
        %v4677 = vmul.f32 %v4655, %v4662
        %v4678 = vmul.f32 %v4656, %v4662
        %v4679 = vmul.f32 %v4657, %v4662
        %v4681 = vlaneseq
        %v4682 = vshrl.u32 %v4681, 7
        %v4683 = vsub.s32 0, %v4682
        %v4684 = vrot.slane %v4480, %v4683
        %v4686 = vadd.f32 %v4664, %v4684
        %v4687 = vadd.f32 %v4665, %v4684
        %v4688 = vadd.f32 %v4666, %v4684
        %v4689 = vadd.f32 %v4667, %v4684
        %v4690 = vadd.f32 %v4668, %v4684
        %v4691 = vadd.f32 %v4669, %v4684
        %v4692 = vadd.f32 %v4670, %v4684
        %v4693 = vadd.f32 %v4671, %v4684
        %v4694 = vadd.f32 %v4672, %v4684
        %v4695 = vadd.f32 %v4673, %v4684
        %v4696 = vadd.f32 %v4674, %v4684
        %v4697 = vadd.f32 %v4675, %v4684
        %v4698 = vadd.f32 %v4676, %v4684
        %v4699 = vadd.f32 %v4677, %v4684
        %v4700 = vadd.f32 %v4678, %v4684
        %v4701 = vadd.f32 %v4679, %v4684
        %v4702 = vld [vmem:[#allocation10] sm:$0xff]
        %v4703 = vld [vmem:[#allocation10 + $0x8] sm:$0xff]
        %v4704 = vld [vmem:[#allocation10 + $0x10] sm:$0xff]
        %v4705 = vld [vmem:[#allocation10 + $0x18] sm:$0xff]
        %v4706 = vld [vmem:[#allocation10 + $0x20] sm:$0xff]
        %v4707 = vld [vmem:[#allocation10 + $0x28] sm:$0xff]
        %v4708 = vld [vmem:[#allocation10 + $0x30] sm:$0xff]
        %v4709 = vld [vmem:[#allocation10 + $0x38] sm:$0xff]
        %v4710 = vld [vmem:[#allocation10 + $0x40] sm:$0xff]
        %v4711 = vld [vmem:[#allocation10 + $0x48] sm:$0xff]
        %v4712 = vld [vmem:[#allocation10 + $0x50] sm:$0xff]
        %v4713 = vld [vmem:[#allocation10 + $0x58] sm:$0xff]
        %v4714 = vld [vmem:[#allocation10 + $0x60] sm:$0xff]
        %v4715 = vld [vmem:[#allocation10 + $0x68] sm:$0xff]
        %v4716 = vld [vmem:[#allocation10 + $0x70] sm:$0xff]
        %v4717 = vld [vmem:[#allocation10 + $0x78] sm:$0xff]
        %v4718 = vld [vmem:[%s9] sm:$0x1]
        %v4720 = vlaneseq
        %v4721 = vshrl.u32 %v4720, 7
        %v4722 = vsub.s32 0, %v4721
        %v4723 = vrot.slane %v4718, %v4722
        %4725 = vmatprep.subr.mxu0 0.0
        %4726 = vmatpush1.msra.mxu0 %v4717
        %4727 = vmatprep.subr.mxu0 0.0
        %4728 = vmatpush1.msra.mxu0 %v4716
        %4729 = vmatprep.subr.mxu0 0.0
        %4730 = vmatpush1.msra.mxu0 %v4715
        %4731 = vmatprep.subr.mxu0 0.0
        %4732 = vmatpush1.msra.mxu0 %v4714
        %4733 = vmatprep.subr.mxu0 0.0
        %4734 = vmatpush1.msra.mxu0 %v4713
        %4735 = vmatprep.subr.mxu0 0.0
        %4736 = vmatpush1.msra.mxu0 %v4712
        %4737 = vmatprep.subr.mxu0 0.0
        %4738 = vmatpush1.msra.mxu0 %v4711
        %4739 = vmatprep.subr.mxu0 0.0
        %4740 = vmatpush1.msra.mxu0 %v4710
        %4741 = vmatprep.subr.mxu0 0.0
        %4742 = vmatpush1.msra.mxu0 %v4709
        %4743 = vmatprep.subr.mxu0 0.0
        %4744 = vmatpush1.msra.mxu0 %v4708
        %4745 = vmatprep.subr.mxu0 0.0
        %4746 = vmatpush1.msra.mxu0 %v4707
        %4747 = vmatprep.subr.mxu0 0.0
        %4748 = vmatpush1.msra.mxu0 %v4706
        %4749 = vmatprep.subr.mxu0 0.0
        %4750 = vmatpush1.msra.mxu0 %v4705
        %4751 = vmatprep.subr.mxu0 0.0
        %4752 = vmatpush1.msra.mxu0 %v4704
        %4753 = vmatprep.subr.mxu0 0.0
        %4754 = vmatpush1.msra.mxu0 %v4703
        %4755 = vmatprep.subr.mxu0 0.0
        %4756 = vmatpush1.msra.mxu0 %v4702
        %4757 = vmatprep.subr.mxu0 0.0
        %4758 = vmatpush2.msra.mxu0 0.0
        %4759 = vmatprep.subr.mxu0 0.0
        %4760 = vmatpush2.msra.mxu0 0.0
        %4761 = vmatprep.subr.mxu0 0.0
        %4762 = vmatpush2.msra.mxu0 0.0
        %4763 = vmatprep.subr.mxu0 0.0
        %4764 = vmatpush2.msra.mxu0 0.0
        %4765 = vmatprep.subr.mxu0 0.0
        %4766 = vmatpush2.msra.mxu0 0.0
        %4767 = vmatprep.subr.mxu0 0.0
        %4768 = vmatpush2.msra.mxu0 0.0
        %4769 = vmatprep.subr.mxu0 0.0
        %4770 = vmatpush2.msra.mxu0 0.0
        %4771 = vmatprep.subr.mxu0 0.0
        %4772 = vmatpush2.msra.mxu0 0.0
        %4773 = vmatprep.subr.mxu0 0.0
        %4774 = vmatpush2.msra.mxu0 0.0
        %4775 = vmatprep.subr.mxu0 0.0
        %4776 = vmatpush2.msra.mxu0 0.0
        %4777 = vmatprep.subr.mxu0 0.0
        %4778 = vmatpush2.msra.mxu0 0.0
        %4779 = vmatprep.subr.mxu0 0.0
        %4780 = vmatpush2.msra.mxu0 0.0
        %4781 = vmatprep.subr.mxu0 0.0
        %4782 = vmatpush2.msra.mxu0 0.0
        %4783 = vmatprep.subr.mxu0 0.0
        %4784 = vmatpush2.msra.mxu0 0.0
        %4785 = vmatprep.subr.mxu0 0.0
        %4786 = vmatpush2.msra.mxu0 0.0
        %4787 = vmatprep.subr.mxu0 0.0
        %4788 = vmatpush2.msra.mxu0 0.0
        %4789 = vmatprep.mubr.f32.mxu0 0.0
        %4790 = vmatmul.mubr.f32.gmra.mxu0 %v4686
        %v4791 = vpop.f32.mrf.mxu0
        %v4792 = vadd.f32 %v4723, %v4791
        %v4793 = vpop.f32.mrf.mxu0
        %4794 = vmatprep.mubr.f32.mxu0 0.0
        %4795 = vmatmul.mubr.f32.gmra.mxu0 %v4687
        %v4796 = vpop.f32.mrf.mxu0
        %v4797 = vadd.f32 %v4723, %v4796
        %v4798 = vpop.f32.mrf.mxu0
        %4799 = vmatprep.mubr.f32.mxu0 0.0
        %4800 = vmatmul.mubr.f32.gmra.mxu0 %v4688
        %v4801 = vpop.f32.mrf.mxu0
        %v4802 = vadd.f32 %v4723, %v4801
        %v4803 = vpop.f32.mrf.mxu0
        %4804 = vmatprep.mubr.f32.mxu0 0.0
        %4805 = vmatmul.mubr.f32.gmra.mxu0 %v4689
        %v4806 = vpop.f32.mrf.mxu0
        %v4807 = vadd.f32 %v4723, %v4806
        %v4808 = vpop.f32.mrf.mxu0
        %4809 = vmatprep.mubr.f32.mxu0 0.0
        %4810 = vmatmul.mubr.f32.gmra.mxu0 %v4690
        %v4811 = vpop.f32.mrf.mxu0
        %v4812 = vadd.f32 %v4723, %v4811
        %v4813 = vpop.f32.mrf.mxu0
        %4814 = vmatprep.mubr.f32.mxu0 0.0
        %4815 = vmatmul.mubr.f32.gmra.mxu0 %v4691
        %v4816 = vpop.f32.mrf.mxu0
        %v4817 = vadd.f32 %v4723, %v4816
        %v4818 = vpop.f32.mrf.mxu0
        %4819 = vmatprep.mubr.f32.mxu0 0.0
        %4820 = vmatmul.mubr.f32.gmra.mxu0 %v4692
        %v4821 = vpop.f32.mrf.mxu0
        %v4822 = vadd.f32 %v4723, %v4821
        %v4823 = vpop.f32.mrf.mxu0
        %4824 = vmatprep.mubr.f32.mxu0 0.0
        %4825 = vmatmul.mubr.f32.gmra.mxu0 %v4693
        %v4826 = vpop.f32.mrf.mxu0
        %v4827 = vadd.f32 %v4723, %v4826
        %v4828 = vpop.f32.mrf.mxu0
        %4829 = vmatprep.mubr.f32.mxu0 0.0
        %4830 = vmatmul.mubr.f32.gmra.mxu0 %v4694
        %v4831 = vpop.f32.mrf.mxu0
        %v4832 = vadd.f32 %v4723, %v4831
        %v4833 = vpop.f32.mrf.mxu0
        %4834 = vmatprep.mubr.f32.mxu0 0.0
        %4835 = vmatmul.mubr.f32.gmra.mxu0 %v4695
        %v4836 = vpop.f32.mrf.mxu0
        %v4837 = vadd.f32 %v4723, %v4836
        %v4838 = vpop.f32.mrf.mxu0
        %4839 = vmatprep.mubr.f32.mxu0 0.0
        %4840 = vmatmul.mubr.f32.gmra.mxu0 %v4696
        %v4841 = vpop.f32.mrf.mxu0
        %v4842 = vadd.f32 %v4723, %v4841
        %v4843 = vpop.f32.mrf.mxu0
        %4844 = vmatprep.mubr.f32.mxu0 0.0
        %4845 = vmatmul.mubr.f32.gmra.mxu0 %v4697
        %v4846 = vpop.f32.mrf.mxu0
        %v4847 = vadd.f32 %v4723, %v4846
        %v4848 = vpop.f32.mrf.mxu0
        %4849 = vmatprep.mubr.f32.mxu0 0.0
        %4850 = vmatmul.mubr.f32.gmra.mxu0 %v4698
        %v4851 = vpop.f32.mrf.mxu0
        %v4852 = vadd.f32 %v4723, %v4851
        %v4853 = vpop.f32.mrf.mxu0
        %4854 = vmatprep.mubr.f32.mxu0 0.0
        %4855 = vmatmul.mubr.f32.gmra.mxu0 %v4699
        %v4856 = vpop.f32.mrf.mxu0
        %v4857 = vadd.f32 %v4723, %v4856
        %v4858 = vpop.f32.mrf.mxu0
        %4859 = vmatprep.mubr.f32.mxu0 0.0
        %4860 = vmatmul.mubr.f32.gmra.mxu0 %v4700
        %v4861 = vpop.f32.mrf.mxu0
        %v4862 = vadd.f32 %v4723, %v4861
        %v4863 = vpop.f32.mrf.mxu0
        %4864 = vmatprep.mubr.f32.mxu0 0.0
        %4865 = vmatmul.mubr.f32.gmra.mxu0 %v4701
        %v4866 = vpop.f32.mrf.mxu0
        %v4867 = vadd.f32 %v4723, %v4866
        %v4868 = vpop.f32.mrf.mxu0
        %4869 = vdwg.mxu0
        %vm4870 = vcmp.ge.f32.partialorder %v4792, 0.0
        %vm4871 = vcmp.ge.f32.partialorder %v4797, 0.0
        %vm4872 = vcmp.ge.f32.partialorder %v4802, 0.0
        %vm4873 = vcmp.ge.f32.partialorder %v4807, 0.0
        %vm4874 = vcmp.ge.f32.partialorder %v4812, 0.0
        %vm4875 = vcmp.ge.f32.partialorder %v4817, 0.0
        %vm4876 = vcmp.ge.f32.partialorder %v4822, 0.0
        %vm4877 = vcmp.ge.f32.partialorder %v4827, 0.0
        %vm4878 = vcmp.ge.f32.partialorder %v4832, 0.0
        %vm4879 = vcmp.ge.f32.partialorder %v4837, 0.0
        %vm4880 = vcmp.ge.f32.partialorder %v4842, 0.0
        %vm4881 = vcmp.ge.f32.partialorder %v4847, 0.0
        %vm4882 = vcmp.ge.f32.partialorder %v4852, 0.0
        %vm4883 = vcmp.ge.f32.partialorder %v4857, 0.0
        %vm4884 = vcmp.ge.f32.partialorder %v4862, 0.0
        %vm4885 = vcmp.ge.f32.partialorder %v4867, 0.0
        %v4886 = vmul.f32 %v4792, 0.01
        %v4887 = vmul.f32 %v4797, 0.01
        %v4888 = vmul.f32 %v4802, 0.01
        %v4889 = vmul.f32 %v4807, 0.01
        %v4890 = vmul.f32 %v4812, 0.01
        %v4891 = vmul.f32 %v4817, 0.01
        %v4892 = vmul.f32 %v4822, 0.01
        %v4893 = vmul.f32 %v4827, 0.01
        %v4894 = vmul.f32 %v4832, 0.01
        %v4895 = vmul.f32 %v4837, 0.01
        %v4896 = vmul.f32 %v4842, 0.01
        %v4897 = vmul.f32 %v4847, 0.01
        %v4898 = vmul.f32 %v4852, 0.01
        %v4899 = vmul.f32 %v4857, 0.01
        %v4900 = vmul.f32 %v4862, 0.01
        %v4901 = vmul.f32 %v4867, 0.01
        %v4902 = vsel %vm4870, %v4792, %v4886
        %v4903 = vsel %vm4871, %v4797, %v4887
        %v4904 = vsel %vm4872, %v4802, %v4888
        %v4905 = vsel %vm4873, %v4807, %v4889
        %v4906 = vsel %vm4874, %v4812, %v4890
        %v4907 = vsel %vm4875, %v4817, %v4891
        %v4908 = vsel %vm4876, %v4822, %v4892
        %v4909 = vsel %vm4877, %v4827, %v4893
        %v4910 = vsel %vm4878, %v4832, %v4894
        %v4911 = vsel %vm4879, %v4837, %v4895
        %v4912 = vsel %vm4880, %v4842, %v4896
        %v4913 = vsel %vm4881, %v4847, %v4897
        %v4914 = vsel %vm4882, %v4852, %v4898
        %v4915 = vsel %vm4883, %v4857, %v4899
        %v4916 = vsel %vm4884, %v4862, %v4900
        %v4917 = vsel %vm4885, %v4867, %v4901
        %v4918 = vld [vmem:[#allocation11] sm:$0xff]
        %v4919 = vld [vmem:[#allocation11 + $0x8] sm:$0xff]
        %v4920 = vld [vmem:[#allocation11 + $0x10] sm:$0xff]
        %v4921 = vld [vmem:[#allocation11 + $0x18] sm:$0xff]
        %v4922 = vld [vmem:[#allocation11 + $0x20] sm:$0xff]
        %v4923 = vld [vmem:[#allocation11 + $0x28] sm:$0xff]
        %v4924 = vld [vmem:[#allocation11 + $0x30] sm:$0xff]
        %v4925 = vld [vmem:[#allocation11 + $0x38] sm:$0xff]
        %v4926 = vld [vmem:[#allocation11 + $0x40] sm:$0xff]
        %v4927 = vld [vmem:[#allocation11 + $0x48] sm:$0xff]
        %v4928 = vld [vmem:[#allocation11 + $0x50] sm:$0xff]
        %v4929 = vld [vmem:[#allocation11 + $0x58] sm:$0xff]
        %v4930 = vld [vmem:[#allocation11 + $0x60] sm:$0xff]
        %v4931 = vld [vmem:[#allocation11 + $0x68] sm:$0xff]
        %v4932 = vld [vmem:[#allocation11 + $0x70] sm:$0xff]
        %v4933 = vld [vmem:[#allocation11 + $0x78] sm:$0xff]
        %v4934 = vld [vmem:[%s11] sm:$0x1]
        %v4936 = vlaneseq
        %v4937 = vshrl.u32 %v4936, 7
        %v4938 = vsub.s32 0, %v4937
        %v4939 = vrot.slane %v4934, %v4938
        %4941 = vmatprep.subr.mxu0 0.0
        %4942 = vmatpush1.msra.mxu0 %v4933
        %4943 = vmatprep.subr.mxu0 0.0
        %4944 = vmatpush1.msra.mxu0 %v4932
        %4945 = vmatprep.subr.mxu0 0.0
        %4946 = vmatpush1.msra.mxu0 %v4931
        %4947 = vmatprep.subr.mxu0 0.0
        %4948 = vmatpush1.msra.mxu0 %v4930
        %4949 = vmatprep.subr.mxu0 0.0
        %4950 = vmatpush1.msra.mxu0 %v4929
        %4951 = vmatprep.subr.mxu0 0.0
        %4952 = vmatpush1.msra.mxu0 %v4928
        %4953 = vmatprep.subr.mxu0 0.0
        %4954 = vmatpush1.msra.mxu0 %v4927
        %4955 = vmatprep.subr.mxu0 0.0
        %4956 = vmatpush1.msra.mxu0 %v4926
        %4957 = vmatprep.subr.mxu0 0.0
        %4958 = vmatpush1.msra.mxu0 %v4925
        %4959 = vmatprep.subr.mxu0 0.0
        %4960 = vmatpush1.msra.mxu0 %v4924
        %4961 = vmatprep.subr.mxu0 0.0
        %4962 = vmatpush1.msra.mxu0 %v4923
        %4963 = vmatprep.subr.mxu0 0.0
        %4964 = vmatpush1.msra.mxu0 %v4922
        %4965 = vmatprep.subr.mxu0 0.0
        %4966 = vmatpush1.msra.mxu0 %v4921
        %4967 = vmatprep.subr.mxu0 0.0
        %4968 = vmatpush1.msra.mxu0 %v4920
        %4969 = vmatprep.subr.mxu0 0.0
        %4970 = vmatpush1.msra.mxu0 %v4919
        %4971 = vmatprep.subr.mxu0 0.0
        %4972 = vmatpush1.msra.mxu0 %v4918
        %4973 = vmatprep.subr.mxu0 0.0
        %4974 = vmatpush2.msra.mxu0 0.0
        %4975 = vmatprep.subr.mxu0 0.0
        %4976 = vmatpush2.msra.mxu0 0.0
        %4977 = vmatprep.subr.mxu0 0.0
        %4978 = vmatpush2.msra.mxu0 0.0
        %4979 = vmatprep.subr.mxu0 0.0
        %4980 = vmatpush2.msra.mxu0 0.0
        %4981 = vmatprep.subr.mxu0 0.0
        %4982 = vmatpush2.msra.mxu0 0.0
        %4983 = vmatprep.subr.mxu0 0.0
        %4984 = vmatpush2.msra.mxu0 0.0
        %4985 = vmatprep.subr.mxu0 0.0
        %4986 = vmatpush2.msra.mxu0 0.0
        %4987 = vmatprep.subr.mxu0 0.0
        %4988 = vmatpush2.msra.mxu0 0.0
        %4989 = vmatprep.subr.mxu0 0.0
        %4990 = vmatpush2.msra.mxu0 0.0
        %4991 = vmatprep.subr.mxu0 0.0
        %4992 = vmatpush2.msra.mxu0 0.0
        %4993 = vmatprep.subr.mxu0 0.0
        %4994 = vmatpush2.msra.mxu0 0.0
        %4995 = vmatprep.subr.mxu0 0.0
        %4996 = vmatpush2.msra.mxu0 0.0
        %4997 = vmatprep.subr.mxu0 0.0
        %4998 = vmatpush2.msra.mxu0 0.0
        %4999 = vmatprep.subr.mxu0 0.0
        %5000 = vmatpush2.msra.mxu0 0.0
        %5001 = vmatprep.subr.mxu0 0.0
        %5002 = vmatpush2.msra.mxu0 0.0
        %5003 = vmatprep.subr.mxu0 0.0
        %5004 = vmatpush2.msra.mxu0 0.0
        %5005 = vmatprep.mubr.f32.mxu0 0.0
        %5006 = vmatmul.mubr.f32.gmra.mxu0 %v4902
        %v5007 = vpop.f32.mrf.mxu0
        %v5008 = vadd.f32 %v4939, %v5007
        %v5009 = vpop.f32.mrf.mxu0
        %5010 = vmatprep.mubr.f32.mxu0 0.0
        %5011 = vmatmul.mubr.f32.gmra.mxu0 %v4903
        %v5012 = vpop.f32.mrf.mxu0
        %v5013 = vadd.f32 %v4939, %v5012
        %v5014 = vpop.f32.mrf.mxu0
        %5015 = vmatprep.mubr.f32.mxu0 0.0
        %5016 = vmatmul.mubr.f32.gmra.mxu0 %v4904
        %v5017 = vpop.f32.mrf.mxu0
        %v5018 = vadd.f32 %v4939, %v5017
        %v5019 = vpop.f32.mrf.mxu0
        %5020 = vmatprep.mubr.f32.mxu0 0.0
        %5021 = vmatmul.mubr.f32.gmra.mxu0 %v4905
        %v5022 = vpop.f32.mrf.mxu0
        %v5023 = vadd.f32 %v4939, %v5022
        %v5024 = vpop.f32.mrf.mxu0
        %5025 = vmatprep.mubr.f32.mxu0 0.0
        %5026 = vmatmul.mubr.f32.gmra.mxu0 %v4906
        %v5027 = vpop.f32.mrf.mxu0
        %v5028 = vadd.f32 %v4939, %v5027
        %v5029 = vpop.f32.mrf.mxu0
        %5030 = vmatprep.mubr.f32.mxu0 0.0
        %5031 = vmatmul.mubr.f32.gmra.mxu0 %v4907
        %v5032 = vpop.f32.mrf.mxu0
        %v5033 = vadd.f32 %v4939, %v5032
        %v5034 = vpop.f32.mrf.mxu0
        %5035 = vmatprep.mubr.f32.mxu0 0.0
        %5036 = vmatmul.mubr.f32.gmra.mxu0 %v4908
        %v5037 = vpop.f32.mrf.mxu0
        %v5038 = vadd.f32 %v4939, %v5037
        %v5039 = vpop.f32.mrf.mxu0
        %5040 = vmatprep.mubr.f32.mxu0 0.0
        %5041 = vmatmul.mubr.f32.gmra.mxu0 %v4909
        %v5042 = vpop.f32.mrf.mxu0
        %v5043 = vadd.f32 %v4939, %v5042
        %v5044 = vpop.f32.mrf.mxu0
        %5045 = vmatprep.mubr.f32.mxu0 0.0
        %5046 = vmatmul.mubr.f32.gmra.mxu0 %v4910
        %v5047 = vpop.f32.mrf.mxu0
        %v5048 = vadd.f32 %v4939, %v5047
        %v5049 = vpop.f32.mrf.mxu0
        %5050 = vmatprep.mubr.f32.mxu0 0.0
        %5051 = vmatmul.mubr.f32.gmra.mxu0 %v4911
        %v5052 = vpop.f32.mrf.mxu0
        %v5053 = vadd.f32 %v4939, %v5052
        %v5054 = vpop.f32.mrf.mxu0
        %5055 = vmatprep.mubr.f32.mxu0 0.0
        %5056 = vmatmul.mubr.f32.gmra.mxu0 %v4912
        %v5057 = vpop.f32.mrf.mxu0
        %v5058 = vadd.f32 %v4939, %v5057
        %v5059 = vpop.f32.mrf.mxu0
        %5060 = vmatprep.mubr.f32.mxu0 0.0
        %5061 = vmatmul.mubr.f32.gmra.mxu0 %v4913
        %v5062 = vpop.f32.mrf.mxu0
        %v5063 = vadd.f32 %v4939, %v5062
        %v5064 = vpop.f32.mrf.mxu0
        %5065 = vmatprep.mubr.f32.mxu0 0.0
        %5066 = vmatmul.mubr.f32.gmra.mxu0 %v4914
        %v5067 = vpop.f32.mrf.mxu0
        %v5068 = vadd.f32 %v4939, %v5067
        %v5069 = vpop.f32.mrf.mxu0
        %5070 = vmatprep.mubr.f32.mxu0 0.0
        %5071 = vmatmul.mubr.f32.gmra.mxu0 %v4915
        %v5072 = vpop.f32.mrf.mxu0
        %v5073 = vadd.f32 %v4939, %v5072
        %v5074 = vpop.f32.mrf.mxu0
        %5075 = vmatprep.mubr.f32.mxu0 0.0
        %5076 = vmatmul.mubr.f32.gmra.mxu0 %v4916
        %v5077 = vpop.f32.mrf.mxu0
        %v5078 = vadd.f32 %v4939, %v5077
        %v5079 = vpop.f32.mrf.mxu0
        %5080 = vmatprep.mubr.f32.mxu0 0.0
        %5081 = vmatmul.mubr.f32.gmra.mxu0 %v4917
        %v5082 = vpop.f32.mrf.mxu0
        %v5083 = vadd.f32 %v4939, %v5082
        %v5084 = vpop.f32.mrf.mxu0
        %5085 = vdwg.mxu0
        %v5086 = vadd.f32 %v4686, %v5008
        %v5087 = vadd.f32 %v4687, %v5013
        %v5088 = vadd.f32 %v4688, %v5018
        %v5089 = vadd.f32 %v4689, %v5023
        %v5090 = vadd.f32 %v4690, %v5028
        %v5091 = vadd.f32 %v4691, %v5033
        %v5092 = vadd.f32 %v4692, %v5038
        %v5093 = vadd.f32 %v4693, %v5043
        %v5094 = vadd.f32 %v4694, %v5048
        %v5095 = vadd.f32 %v4695, %v5053
        %v5096 = vadd.f32 %v4696, %v5058
        %v5097 = vadd.f32 %v4697, %v5063
        %v5098 = vadd.f32 %v4698, %v5068
        %v5099 = vadd.f32 %v4699, %v5073
        %v5100 = vadd.f32 %v4700, %v5078
        %v5101 = vadd.f32 %v4701, %v5083
        %v5102 = vld [vmem:[%s12] sm:$0x1]
        %v5103 = vld [vmem:[%s13] sm:$0x1]
        %5104 = vadd.xlane.f32.xlu0 %v5086
        %v5105 = vpop.xlane.xlu0 %5104
        %5106 = vadd.xlane.f32.xlu0 %v5087
        %v5107 = vpop.xlane.xlu0 %5106
        %5108 = vadd.xlane.f32.xlu0 %v5088
        %v5109 = vpop.xlane.xlu0 %5108
        %5110 = vadd.xlane.f32.xlu0 %v5089
        %v5111 = vpop.xlane.xlu0 %5110
        %5112 = vadd.xlane.f32.xlu0 %v5090
        %v5113 = vpop.xlane.xlu0 %5112
        %5114 = vadd.xlane.f32.xlu0 %v5091
        %v5115 = vpop.xlane.xlu0 %5114
        %5116 = vadd.xlane.f32.xlu0 %v5092
        %v5117 = vpop.xlane.xlu0 %5116
        %5118 = vadd.xlane.f32.xlu0 %v5093
        %v5119 = vpop.xlane.xlu0 %5118
        %5120 = vadd.xlane.f32.xlu0 %v5094
        %v5121 = vpop.xlane.xlu0 %5120
        %5122 = vadd.xlane.f32.xlu0 %v5095
        %v5123 = vpop.xlane.xlu0 %5122
        %5124 = vadd.xlane.f32.xlu0 %v5096
        %v5125 = vpop.xlane.xlu0 %5124
        %5126 = vadd.xlane.f32.xlu0 %v5097
        %v5127 = vpop.xlane.xlu0 %5126
        %5128 = vadd.xlane.f32.xlu0 %v5098
        %v5129 = vpop.xlane.xlu0 %5128
        %5130 = vadd.xlane.f32.xlu0 %v5099
        %v5131 = vpop.xlane.xlu0 %5130
        %5132 = vadd.xlane.f32.xlu0 %v5100
        %v5133 = vpop.xlane.xlu0 %5132
        %5134 = vadd.xlane.f32.xlu0 %v5101
        %v5135 = vpop.xlane.xlu0 %5134
        %v5136 = vmul.f32 %v5105, %v4513
        %v5137 = vmul.f32 %v5107, %v4513
        %v5138 = vmul.f32 %v5109, %v4513
        %v5139 = vmul.f32 %v5111, %v4513
        %v5140 = vmul.f32 %v5113, %v4513
        %v5141 = vmul.f32 %v5115, %v4513
        %v5142 = vmul.f32 %v5117, %v4513
        %v5143 = vmul.f32 %v5119, %v4513
        %v5144 = vmul.f32 %v5121, %v4513
        %v5145 = vmul.f32 %v5123, %v4513
        %v5146 = vmul.f32 %v5125, %v4513
        %v5147 = vmul.f32 %v5127, %v4513
        %v5148 = vmul.f32 %v5129, %v4513
        %v5149 = vmul.f32 %v5131, %v4513
        %v5150 = vmul.f32 %v5133, %v4513
        %v5151 = vmul.f32 %v5135, %v4513
        %v5152 = vsub.f32 %v5086, %v5136
        %v5153 = vsub.f32 %v5087, %v5137
        %v5154 = vsub.f32 %v5088, %v5138
        %v5155 = vsub.f32 %v5089, %v5139
        %v5156 = vsub.f32 %v5090, %v5140
        %v5157 = vsub.f32 %v5091, %v5141
        %v5158 = vsub.f32 %v5092, %v5142
        %v5159 = vsub.f32 %v5093, %v5143
        %v5160 = vsub.f32 %v5094, %v5144
        %v5161 = vsub.f32 %v5095, %v5145
        %v5162 = vsub.f32 %v5096, %v5146
        %v5163 = vsub.f32 %v5097, %v5147
        %v5164 = vsub.f32 %v5098, %v5148
        %v5165 = vsub.f32 %v5099, %v5149
        %v5166 = vsub.f32 %v5100, %v5150
        %v5167 = vsub.f32 %v5101, %v5151
        %v5168 = vmul.f32 %v5152, %v5152
        %v5169 = vmul.f32 %v5153, %v5153
        %v5170 = vmul.f32 %v5154, %v5154
        %v5171 = vmul.f32 %v5155, %v5155
        %v5172 = vmul.f32 %v5156, %v5156
        %v5173 = vmul.f32 %v5157, %v5157
        %v5174 = vmul.f32 %v5158, %v5158
        %v5175 = vmul.f32 %v5159, %v5159
        %v5176 = vmul.f32 %v5160, %v5160
        %v5177 = vmul.f32 %v5161, %v5161
        %v5178 = vmul.f32 %v5162, %v5162
        %v5179 = vmul.f32 %v5163, %v5163
        %v5180 = vmul.f32 %v5164, %v5164
        %v5181 = vmul.f32 %v5165, %v5165
        %v5182 = vmul.f32 %v5166, %v5166
        %v5183 = vmul.f32 %v5167, %v5167
        %5184 = vadd.xlane.f32.xlu0 %v5168
        %v5185 = vpop.xlane.xlu0 %5184
        %5186 = vadd.xlane.f32.xlu0 %v5169
        %v5187 = vpop.xlane.xlu0 %5186
        %5188 = vadd.xlane.f32.xlu0 %v5170
        %v5189 = vpop.xlane.xlu0 %5188
        %5190 = vadd.xlane.f32.xlu0 %v5171
        %v5191 = vpop.xlane.xlu0 %5190
        %5192 = vadd.xlane.f32.xlu0 %v5172
        %v5193 = vpop.xlane.xlu0 %5192
        %5194 = vadd.xlane.f32.xlu0 %v5173
        %v5195 = vpop.xlane.xlu0 %5194
        %5196 = vadd.xlane.f32.xlu0 %v5174
        %v5197 = vpop.xlane.xlu0 %5196
        %5198 = vadd.xlane.f32.xlu0 %v5175
        %v5199 = vpop.xlane.xlu0 %5198
        %5200 = vadd.xlane.f32.xlu0 %v5176
        %v5201 = vpop.xlane.xlu0 %5200
        %5202 = vadd.xlane.f32.xlu0 %v5177
        %v5203 = vpop.xlane.xlu0 %5202
        %5204 = vadd.xlane.f32.xlu0 %v5178
        %v5205 = vpop.xlane.xlu0 %5204
        %5206 = vadd.xlane.f32.xlu0 %v5179
        %v5207 = vpop.xlane.xlu0 %5206
        %5208 = vadd.xlane.f32.xlu0 %v5180
        %v5209 = vpop.xlane.xlu0 %5208
        %5210 = vadd.xlane.f32.xlu0 %v5181
        %v5211 = vpop.xlane.xlu0 %5210
        %5212 = vadd.xlane.f32.xlu0 %v5182
        %v5213 = vpop.xlane.xlu0 %5212
        %5214 = vadd.xlane.f32.xlu0 %v5183
        %v5215 = vpop.xlane.xlu0 %5214
        %v5216 = vmul.f32 %v5185, %v4513
        %v5217 = vmul.f32 %v5187, %v4513
        %v5218 = vmul.f32 %v5189, %v4513
        %v5219 = vmul.f32 %v5191, %v4513
        %v5220 = vmul.f32 %v5193, %v4513
        %v5221 = vmul.f32 %v5195, %v4513
        %v5222 = vmul.f32 %v5197, %v4513
        %v5223 = vmul.f32 %v5199, %v4513
        %v5224 = vmul.f32 %v5201, %v4513
        %v5225 = vmul.f32 %v5203, %v4513
        %v5226 = vmul.f32 %v5205, %v4513
        %v5227 = vmul.f32 %v5207, %v4513
        %v5228 = vmul.f32 %v5209, %v4513
        %v5229 = vmul.f32 %v5211, %v4513
        %v5230 = vmul.f32 %v5213, %v4513
        %v5231 = vmul.f32 %v5215, %v4513
        %v5232 = vadd.f32 %v5216, 1e-05
        %v5233 = vadd.f32 %v5217, 1e-05
        %v5234 = vadd.f32 %v5218, 1e-05
        %v5235 = vadd.f32 %v5219, 1e-05
        %v5236 = vadd.f32 %v5220, 1e-05
        %v5237 = vadd.f32 %v5221, 1e-05
        %v5238 = vadd.f32 %v5222, 1e-05
        %v5239 = vadd.f32 %v5223, 1e-05
        %v5240 = vadd.f32 %v5224, 1e-05
        %v5241 = vadd.f32 %v5225, 1e-05
        %v5242 = vadd.f32 %v5226, 1e-05
        %v5243 = vadd.f32 %v5227, 1e-05
        %v5244 = vadd.f32 %v5228, 1e-05
        %v5245 = vadd.f32 %v5229, 1e-05
        %v5246 = vadd.f32 %v5230, 1e-05
        %v5247 = vadd.f32 %v5231, 1e-05
        %v5248 = vrsqrt.pop %v5232
        %v5249 = vrsqrt.pop %v5233
        %v5250 = vrsqrt.pop %v5234
        %v5251 = vrsqrt.pop %v5235
        %v5252 = vrsqrt.pop %v5236
        %v5253 = vrsqrt.pop %v5237
        %v5254 = vrsqrt.pop %v5238
        %v5255 = vrsqrt.pop %v5239
        %v5256 = vrsqrt.pop %v5240
        %v5257 = vrsqrt.pop %v5241
        %v5258 = vrsqrt.pop %v5242
        %v5259 = vrsqrt.pop %v5243
        %v5260 = vrsqrt.pop %v5244
        %v5261 = vrsqrt.pop %v5245
        %v5262 = vrsqrt.pop %v5246
        %v5263 = vrsqrt.pop %v5247
        %v5264 = vmul.f32 %v5152, %v5248
        %v5265 = vmul.f32 %v5153, %v5249
        %v5266 = vmul.f32 %v5154, %v5250
        %v5267 = vmul.f32 %v5155, %v5251
        %v5268 = vmul.f32 %v5156, %v5252
        %v5269 = vmul.f32 %v5157, %v5253
        %v5270 = vmul.f32 %v5158, %v5254
        %v5271 = vmul.f32 %v5159, %v5255
        %v5272 = vmul.f32 %v5160, %v5256
        %v5273 = vmul.f32 %v5161, %v5257
        %v5274 = vmul.f32 %v5162, %v5258
        %v5275 = vmul.f32 %v5163, %v5259
        %v5276 = vmul.f32 %v5164, %v5260
        %v5277 = vmul.f32 %v5165, %v5261
        %v5278 = vmul.f32 %v5166, %v5262
        %v5279 = vmul.f32 %v5167, %v5263
        %v5281 = vlaneseq
        %v5282 = vshrl.u32 %v5281, 7
        %v5283 = vsub.s32 0, %v5282
        %v5284 = vrot.slane %v5102, %v5283
        %v5286 = vmul.f32 %v5264, %v5284
        %v5287 = vmul.f32 %v5265, %v5284
        %v5288 = vmul.f32 %v5266, %v5284
        %v5289 = vmul.f32 %v5267, %v5284
        %v5290 = vmul.f32 %v5268, %v5284
        %v5291 = vmul.f32 %v5269, %v5284
        %v5292 = vmul.f32 %v5270, %v5284
        %v5293 = vmul.f32 %v5271, %v5284
        %v5294 = vmul.f32 %v5272, %v5284
        %v5295 = vmul.f32 %v5273, %v5284
        %v5296 = vmul.f32 %v5274, %v5284
        %v5297 = vmul.f32 %v5275, %v5284
        %v5298 = vmul.f32 %v5276, %v5284
        %v5299 = vmul.f32 %v5277, %v5284
        %v5300 = vmul.f32 %v5278, %v5284
        %v5301 = vmul.f32 %v5279, %v5284
        %v5303 = vlaneseq
        %v5304 = vshrl.u32 %v5303, 7
        %v5305 = vsub.s32 0, %v5304
        %v5306 = vrot.slane %v5103, %v5305
        %v5308 = vadd.f32 %v5286, %v5306
        %v5309 = vadd.f32 %v5287, %v5306
        %v5310 = vadd.f32 %v5288, %v5306
        %v5311 = vadd.f32 %v5289, %v5306
        %v5312 = vadd.f32 %v5290, %v5306
        %v5313 = vadd.f32 %v5291, %v5306
        %v5314 = vadd.f32 %v5292, %v5306
        %v5315 = vadd.f32 %v5293, %v5306
        %v5316 = vadd.f32 %v5294, %v5306
        %v5317 = vadd.f32 %v5295, %v5306
        %v5318 = vadd.f32 %v5296, %v5306
        %v5319 = vadd.f32 %v5297, %v5306
        %v5320 = vadd.f32 %v5298, %v5306
        %v5321 = vadd.f32 %v5299, %v5306
        %v5322 = vadd.f32 %v5300, %v5306
        %v5323 = vadd.f32 %v5301, %v5306
        %5324 = vst [vmem:[%s583] sm:$0xff] %v5308
        %5325 = vst [vmem:[%s583 + $0x8] sm:$0xff] %v5309
        %5326 = vst [vmem:[%s583 + $0x10] sm:$0xff] %v5310
        %5327 = vst [vmem:[%s583 + $0x18] sm:$0xff] %v5311
        %5328 = vst [vmem:[%s583 + $0x20] sm:$0xff] %v5312
        %5329 = vst [vmem:[%s583 + $0x28] sm:$0xff] %v5313
        %5330 = vst [vmem:[%s583 + $0x30] sm:$0xff] %v5314
        %5331 = vst [vmem:[%s583 + $0x38] sm:$0xff] %v5315
        %5332 = vst [vmem:[%s583 + $0x40] sm:$0xff] %v5316
        %5333 = vst [vmem:[%s583 + $0x48] sm:$0xff] %v5317
        %5334 = vst [vmem:[%s583 + $0x50] sm:$0xff] %v5318
        %5335 = vst [vmem:[%s583 + $0x58] sm:$0xff] %v5319
        %5336 = vst [vmem:[%s583 + $0x60] sm:$0xff] %v5320
        %5337 = vst [vmem:[%s583 + $0x68] sm:$0xff] %v5321
        %5338 = vst [vmem:[%s583 + $0x70] sm:$0xff] %v5322
        %5339 = vst [vmem:[%s583 + $0x78] sm:$0xff] %v5323
        %s5340 = sand.u32 %s348, 1
        %s5341 = scalar_lea.sflag [#allocation4], %s5340
        %s5342 = sand.u32 %s348, 1
        %s5343 = smul.addr %s5342, 128
        %s5344 = scalar_lea.vmem [#allocation13], %s5343
        // Predicated region
        $region101: #{tpu_custom_call.1} parent=75 // pred_check
          %p5345 = pneg %p358
        $region102: #{tpu_custom_call.1} parent=75 // pred_check_branch
          %5347 = sbr.rel (%p5345) target = $region104
        $region103: #{tpu_custom_call.1} parent=75 // pred_region
          %s5348 = smul.u32 16, %s36
          %s5350 = ssub.s32 2048, 2048
          %5351 = vsyncadd %s5341, %s5350
          %s5352 = smul.addr %s5348, 128
          %s5353 = scalar_lea.hbm %s14, %s5352
          %s5354 = sshll.u32 %s5344, 4
          %s5355 = int_to_ptr.vmem [resolvable:$true] %s5354
          %5360 = dma.vmem_to_hbm [thread:$0]  %s5355, 2048, %s5353, %s5341, 128, 128, 8
        $region104: #{tpu_custom_call.1} parent=75 // pred_fallthru
          _
      $region76: #{tpu_custom_call.1} parent=5 // pred_fallthru
        _
      %p5361 = scmp.le.s32.totalorder 2, %s31
      // Predicated region
      $region105: #{tpu_custom_call.1} parent=5 // pred_check
        %p5362 = pneg %p5361
      $region106: #{tpu_custom_call.1} parent=5 // pred_check_branch
        %5364 = sbr.rel (%p5362) target = $region108
      $region107: #{tpu_custom_call.1} parent=5 // pred_region
        %s5365 = ssub.s32 %s31, 2
        // Predicated region
        $region109: #{tpu_custom_call.1} parent=107 // pred_check
          %p5366 = pneg %p364
        $region110: #{tpu_custom_call.1} parent=107 // pred_check_branch
          %5368 = sbr.rel (%p5366) target = $region112
        $region111: #{tpu_custom_call.1} parent=107 // pred_region
          %s5369 = sand.u32 %s349, 1
          %s5370 = scalar_lea.sflag [#allocation4], %s5369
          %s5371 = sand.u32 %s349, 1
          %s5372 = smul.addr %s5371, 128
          %s5373 = scalar_lea.vmem [#allocation13], %s5372
          %5374 = dma.done %s5370, 2048
        $region112: #{tpu_custom_call.1} parent=107 // pred_fallthru
          _
      $region108: #{tpu_custom_call.1} parent=5 // pred_fallthru
        _
    $region6: #{tpu_custom_call.1} parent=1 // loop_footer
      %s35 = sadd.s32 1, %s31
    $region7: #{tpu_custom_call.1} parent=1 // loop_footer_branch
      %30 = sbr.rel target = $region3
    $region8: #{tpu_custom_call.1} parent=1 // loop_exit
      _
    %5375 = vsyncpa [#allocation3], 1
    %s5376 = scalar_lea.sflag [#allocation3], 1
    %5377 = vsyncpa %s5376, 1
    %5378 = vsyncpa [#allocation6], 1
    %s5379 = scalar_lea.sflag [#allocation6], 1
    %5380 = vsyncpa %s5379, 1
    %5381 = vsyncpa [#allocation9], 1
    %5382 = vsyncpa [#allocation12], 1
    %5383 = vsyncpa [#allocation4], 1
    %s5384 = scalar_lea.sflag [#allocation4], 1
    %5385 = vsyncpa %s5384, 1

</llo_original>
